<compile_context>
chip_gen: v7x
topology: tpu7x:2x2x1
jax: 0.10.0
libtpu: 0.0.40
codegen_flags: <defaults>
</compile_context>

<pallas_src>
import functools
import math

import jax
import jax.numpy as jnp
from jax.experimental import pallas as pl
from jax.experimental.pallas import tpu as pltpu

# ----------------------------------------------------------------------------
# Model configuration (scaled-down "bert-base" + projection head)
# ----------------------------------------------------------------------------
VOCAB = 32
MAX_SEQ = 8
HIDDEN = 32
NUM_HEADS = 4
HEAD_DIM = HIDDEN // NUM_HEADS
INTERMEDIATE = 4 * HIDDEN            # 128
NUM_LAYERS = 2
EMBED_DIM = 16                       # TextEncoder embed_dim (scaled down)
LN_EPS = 1e-12                       # BERT LayerNorm eps
NEG_INF = -1e9
OUT_PAD = 128                        # lane-dense kernel output width


# ----------------------------------------------------------------------------
# Fused encoder kernel: one grid step == (one sequence, one transformer layer)
# ----------------------------------------------------------------------------
def _encoder_kernel(
    # scalar-prefetch (SMEM)
    ids_ref,                                            # (B, S) int32
    # fixed inputs (resident across the grid)
    mask_ref,                                           # (1, S) f32 additive key mask
    wemb_hbm,                                           # (VOCAB, H) f32, stays in HBM
    pt_ref, eg_ref, eb_ref,                             # (S,H), (1,H), (1,H)
    # per-layer stacked inputs (leading layer dim squeezed by BlockSpec)
    wqkv_ref, bqkv_ref,                                 # (3,H,H) bf16, (3,1,H) f32
    wo_ref, bo_ref,                                     # (NH,Dh,H) bf16, (1,H)
    ln1g_ref, ln1b_ref,
    w1_ref, b1_ref, w2_ref, b2_ref,                     # (H,I) bf16,(1,I),(I,H) bf16,(1,H)
    ln2g_ref, ln2b_ref,
    # fixed epilogue inputs
    pw_ref, pb_ref, fw_ref, fb_ref,                     # (H,H) bf16,(1,H),(H,128) bf16,(1,128)
    # output
    out_ref,                                            # (1, 128) f32
    # scratch (persists across grid steps)
    h_ref, gather_sem,                                  # (S,H) f32 ; DMA sems (S,)
    *, seq):
    batch_i = pl.program_id(0)
    layer = pl.program_id(1)
    scale = 1.0 / math.sqrt(HEAD_DIM)
    bf16, f32 = jnp.bfloat16, jnp.float32

    def layer_norm(x, g, b):
        mu = jnp.mean(x, axis=-1, keepdims=True)
        d = x - mu
        var = jnp.mean(d * d, axis=-1, keepdims=True)
        return d * jax.lax.rsqrt(var + LN_EPS) * g + b

    def mm(x, w):                       # bf16 MXU matmul, f32 accumulation
        return jnp.dot(x.astype(bf16), w, preferred_element_type=f32)

    # ---- layer-0 prologue: DMA-gather word embeddings + pos/type + LN ----
    @pl.when(layer == 0)
    def _():
        for s in range(seq):            # static unroll: per-token row gather from HBM
            tok = ids_ref[batch_i, s]
            pltpu.make_async_copy(wemb_hbm.at[pl.ds(tok, 1)],
                                  h_ref.at[pl.ds(s, 1)],
                                  gather_sem.at[s]).start()
        for s in range(seq):
            pltpu.make_async_copy(wemb_hbm.at[pl.ds(0, 1)],
                                  h_ref.at[pl.ds(s, 1)],
                                  gather_sem.at[s]).wait()
        emb = h_ref[...] + pt_ref[...]                      # word + pos + type
        h_ref[...] = layer_norm(emb, eg_ref[...], eb_ref[...])

    # ---- transformer layer `layer` (weights streamed via BlockSpec) ----
    h_in = h_ref[...]                                       # (S, H) f32
    hb = h_in.astype(bf16)

    # three separate, lane-aligned Q/K/V projections (no fused-slab slicing)
    q = jnp.dot(hb, wqkv_ref[0], preferred_element_type=f32) + bqkv_ref[0]
    k = jnp.dot(hb, wqkv_ref[1], preferred_element_type=f32) + bqkv_ref[1]
    v = jnp.dot(hb, wqkv_ref[2], preferred_element_type=f32) + bqkv_ref[2]

    def to_heads(t):                                        # (S,H) -> (NH,S,Dh)
        return pltpu.einshape("shd->hsd", t.reshape(seq, NUM_HEADS, HEAD_DIM))

    qh, kh, vh = to_heads(q), to_heads(k), to_heads(v)

    # head-batched scores / softmax / PV (single dot_general each)
    scores = jnp.einsum("hqd,hkd->hqk", qh, kh,
                        preferred_element_type=f32) * scale         # (NH,S,S)
    scores = scores + mask_ref[...]                                  # key mask (1,S)
    scores = scores - jnp.max(scores, axis=-1, keepdims=True)
    p = jnp.exp(scores)
    p = p * pl.reciprocal(jnp.sum(p, axis=-1, keepdims=True), approx=True)
    ctx = jnp.einsum("hqk,hkd->hqd", p, vh,
                     preferred_element_type=f32)                     # (NH,S,Dh)

    # per-head output projection, summed over heads (no concat)
    attn = jnp.einsum("hsd,hde->hse", ctx.astype(bf16), wo_ref[...],
                      preferred_element_type=f32).sum(axis=0) + bo_ref[...]
    h1 = layer_norm(attn + h_in, ln1g_ref[...], ln1b_ref[...])       # post-LN (attn)

    ffn = mm(h1, w1_ref[...]) + b1_ref[...]
    ffn = jax.nn.gelu(ffn, approximate=True)                         # tanh GELU -> EUP
    ffn = mm(ffn, w2_ref[...]) + b2_ref[...]
    h2 = layer_norm(ffn + h1, ln2g_ref[...], ln2b_ref[...])          # post-LN (ffn)

    h_ref[...] = h2

    # ---- last-layer epilogue: CLS pooler tanh + final fc (lane-dense out) ----
    @pl.when(layer == NUM_LAYERS - 1)
    def _():
        cls = h2[0:1, :]                                             # static row slice
        pooled = jnp.tanh(mm(cls, pw_ref[...]) + pb_ref[...])
        out_ref[...] = mm(pooled, fw_ref[...]) + fb_ref[...]         # (1, 128)


# ----------------------------------------------------------------------------
# Wrapper: operand packing + BlockSpecs + pallas_call
# ----------------------------------------------------------------------------
def text_encoder_forward(params, input_ids):
    B, S = input_ids.shape
    H, L, I = HIDDEN, NUM_LAYERS, INTERMEDIATE
    bf16, f32 = jnp.bfloat16, jnp.float32

    ids = input_ids.astype(jnp.int32)                                # -> SMEM prefetch
    # O(B*S) additive key mask (rebuilt per-sequence inside the kernel by broadcast)
    add_mask = jnp.where(ids != 0, 0.0, NEG_INF).astype(f32).reshape(B, 1, S)
    # embedding table stays in HBM; values pre-rounded to bf16 (matches bf16 weights)
    word_emb = params["word_emb"].astype(bf16).astype(f32)           # (VOCAB, H)
    pos_type = (params["pos_emb"][:S] + params["type_emb"][0][None, :]).astype(f32)

    wqkv = jnp.stack([params["wq"], params["wk"], params["wv"]], axis=1).astype(bf16)
    bqkv = jnp.stack([params["bq"], params["bk"], params["bv"]], axis=1).reshape(L, 3, 1, H).astype(f32)
    wo_h = params["wo"].reshape(L, NUM_HEADS, HEAD_DIM, H).astype(bf16)
    fc_w = jnp.pad(params["fc_w"], ((0, 0), (0, OUT_PAD - EMBED_DIM))).astype(bf16)
    fc_b = jnp.pad(params["fc_b"], (0, OUT_PAD - EMBED_DIM)).reshape(1, OUT_PAD).astype(f32)

    fixed_pre = [
        add_mask,                                   # per-batch (1,S) mask
        word_emb,                                   # HBM gather table
        pos_type,
        params["emb_ln_g"].reshape(1, H), params["emb_ln_b"].reshape(1, H),
    ]
    layer_stacked = [
        wqkv, bqkv,
        wo_h, params["bo"].reshape(L, 1, H),
        params["ln1_g"].reshape(L, 1, H), params["ln1_b"].reshape(L, 1, H),
        params["w1"].astype(bf16), params["b1"].reshape(L, 1, I),
        params["w2"].astype(bf16), params["b2"].reshape(L, 1, H),
        params["ln2_g"].reshape(L, 1, H), params["ln2_b"].reshape(L, 1, H),
    ]
    fixed_post = [
        params["pool_w"].astype(bf16), params["pool_b"].reshape(1, H),
        fc_w, fc_b,
    ]
    operands = [ids] + fixed_pre + layer_stacked + fixed_post

    def fixed_spec(a):                  # resident for the whole grid
        nd = a.ndim
        return pl.BlockSpec(a.shape, lambda b, l, ids_r, _n=nd: (0,) * _n)

    def batch_spec(a):                  # leading batch dim, squeezed
        nd = a.ndim
        return pl.BlockSpec((None,) + a.shape[1:],
                            lambda b, l, ids_r, _n=nd: (b,) + (0,) * (_n - 1))

    def layer_spec(a):                  # leading layer dim streamed over grid
        nd = a.ndim
        return pl.BlockSpec((None,) + a.shape[1:],
                            lambda b, l, ids_r, _n=nd: (l,) + (0,) * (_n - 1))

    in_specs = (
        [batch_spec(add_mask),
         pl.BlockSpec(memory_space=pl.ANY),         # word_emb stays in HBM
         fixed_spec(fixed_pre[2]), fixed_spec(fixed_pre[3]), fixed_spec(fixed_pre[4])]
        + [layer_spec(a) for a in layer_stacked]
        + [fixed_spec(a) for a in fixed_post]
    )

    grid_spec = pltpu.PrefetchScalarGridSpec(
        num_scalar_prefetch=1,                       # input_ids -> SMEM, used by gather
        grid=(B, NUM_LAYERS),
        in_specs=in_specs,
        out_specs=pl.BlockSpec((None, 1, OUT_PAD), lambda b, l, ids_r: (b, 0, 0)),
        scratch_shapes=[
            pltpu.VMEM((S, H), jnp.float32),         # resident per-sequence activations
            pltpu.SemaphoreType.DMA((S,)),           # embedding-gather semaphores
        ],
    )

    out = pl.pallas_call(
        functools.partial(_encoder_kernel, seq=S),
        out_shape=jax.ShapeDtypeStruct((B, 1, OUT_PAD), jnp.float32),
        grid_spec=grid_spec,
        compiler_params=pltpu.CompilerParams(
            # batch axis parallel (v7x 2 TCs split sequences); layer axis carries h.
            dimension_semantics=("parallel", "arbitrary"),
            vmem_limit_bytes=32 * 1024 * 1024,
        ),
    )(*operands)
    return out[:, 0, :EMBED_DIM]


# ----------------------------------------------------------------------------
# Parameter construction (deterministic; stands in for pretrained checkpoint)
# ----------------------------------------------------------------------------
def init_params(key):
    def nrm(k, shape, std=0.02):
        return (std * jax.random.normal(k, shape)).astype(jnp.float32)

    ks = iter(jax.random.split(key, 16))
    L, H, I = NUM_LAYERS, HIDDEN, INTERMEDIATE
    return {
        "word_emb": nrm(next(ks), (VOCAB, H)),
        "pos_emb": nrm(next(ks), (MAX_SEQ, H)),
        "type_emb": nrm(next(ks), (2, H)),
        "emb_ln_g": jnp.ones((H,), jnp.float32),
        "emb_ln_b": jnp.zeros((H,), jnp.float32),
        "wq": nrm(next(ks), (L, H, H)), "bq": jnp.zeros((L, H), jnp.float32),
        "wk": nrm(next(ks), (L, H, H)), "bk": jnp.zeros((L, H), jnp.float32),
        "wv": nrm(next(ks), (L, H, H)), "bv": jnp.zeros((L, H), jnp.float32),
        "wo": nrm(next(ks), (L, H, H)), "bo": jnp.zeros((L, H), jnp.float32),
        "ln1_g": jnp.ones((L, H), jnp.float32), "ln1_b": jnp.zeros((L, H), jnp.float32),
        "w1": nrm(next(ks), (L, H, I)), "b1": jnp.zeros((L, I), jnp.float32),
        "w2": nrm(next(ks), (L, I, H)), "b2": jnp.zeros((L, H), jnp.float32),
        "ln2_g": jnp.ones((L, H), jnp.float32), "ln2_b": jnp.zeros((L, H), jnp.float32),
        "pool_w": nrm(next(ks), (H, H)), "pool_b": jnp.zeros((H,), jnp.float32),
        "fc_w": nrm(next(ks), (H, EMBED_DIM)), "fc_b": jnp.zeros((EMBED_DIM,), jnp.float32),
    }


# ----------------------------------------------------------------------------
# Pure-JAX reference mirroring the kernel's precision policy
# (bf16 weights, bf16 activations at matmul inputs, f32 softmax/LN/residuals)
# ----------------------------------------------------------------------------
def reference_forward(params, input_ids):
    B, S = input_ids.shape
    H, nH, Dh = HIDDEN, NUM_HEADS, HEAD_DIM
    bf16, f32 = jnp.bfloat16, jnp.float32

    def mm(x, w):
        return jnp.dot(x.astype(bf16), w.astype(bf16), preferred_element_type=f32)

    def ln(x, g, b):
        mu = jnp.mean(x, -1, keepdims=True)
        d = x - mu
        var = jnp.mean(d * d, -1, keepdims=True)
        return d * jax.lax.rsqrt(var + LN_EPS) * g + b

    mask_add = jnp.where(input_ids == 0, NEG_INF, 0.0)[:, None, None, :]
    wemb = params["word_emb"].astype(bf16).astype(f32)
    h = wemb[input_ids] + params["pos_emb"][:S][None] + params["type_emb"][0][None, None]
    h = ln(h, params["emb_ln_g"], params["emb_ln_b"])

    def heads(t):
        return t.reshape(B, S, nH, Dh).transpose(0, 2, 1, 3)

    for l in range(NUM_LAYERS):
        q = mm(h, params["wq"][l]) + params["bq"][l]
        k = mm(h, params["wk"][l]) + params["bk"][l]
        v = mm(h, params["wv"][l]) + params["bv"][l]
        qh, kh, vh = heads(q), heads(k), heads(v)
        s = jnp.einsum("bhqd,bhkd->bhqk", qh, kh) / math.sqrt(Dh) + mask_add
        p = jax.nn.softmax(s, axis=-1)
        ctx = jnp.einsum("bhqk,bhkd->bhqd", p, vh).transpose(0, 2, 1, 3).reshape(B, S, H)
        attn = mm(ctx, params["wo"][l]) + params["bo"][l]
        h = ln(attn + h, params["ln1_g"][l], params["ln1_b"][l])
        f = jax.nn.gelu(mm(h, params["w1"][l]) + params["b1"][l], approximate=True)
        f = mm(f, params["w2"][l]) + params["b2"][l]
        h = ln(f + h, params["ln2_g"][l], params["ln2_b"][l])

    cls = h[:, 0, :]
    pooled = jnp.tanh(mm(cls, params["pool_w"]) + params["pool_b"])
    return mm(pooled, params["fc_w"]) + params["fc_b"]


# ----------------------------------------------------------------------------
# Main
# ----------------------------------------------------------------------------
if __name__ == "__main__":
    key = jax.random.PRNGKey(0)
    pkey, xkey = jax.random.split(key)
    params = init_params(pkey)

    B, S = 2, MAX_SEQ
    # token ids in [1, VOCAB); last two positions zero => padding (mask = 0)
    input_ids = jax.random.randint(xkey, (B, S), 1, VOCAB, dtype=jnp.int32)
    input_ids = input_ids.at[:, -2:].set(0)

    out = jax.block_until_ready(jax.jit(text_encoder_forward)(params, input_ids))

    assert out.shape == (B, EMBED_DIM), out.shape
    assert bool(jnp.all(jnp.isfinite(out)))

    ref = reference_forward(params, input_ids)
    err = float(jnp.max(jnp.abs(out - ref)))
    assert err < 2e-2, f"kernel/reference mismatch: max abs err {err}"

    print("KERNEL_OK")
</pallas_src>

<mosaic_0001>
module attributes {stable_mosaic.version = 11 : i64} {
  func.func @_encoder_kernel(%arg0: i32, %arg1: i32, %arg2: memref<2x8xi32, #tpu.memory_space<smem>>, %arg3: memref<1x1x8xf32, #tpu.memory_space<vmem>>, %arg4: memref<32x32xf32, #tpu.memory_space<any>>, %arg5: memref<8x32xf32, #tpu.memory_space<vmem>>, %arg6: memref<1x32xf32, #tpu.memory_space<vmem>>, %arg7: memref<1x32xf32, #tpu.memory_space<vmem>>, %arg8: memref<1x3x32x32xbf16, #tpu.memory_space<vmem>>, %arg9: memref<1x3x1x32xf32, #tpu.memory_space<vmem>>, %arg10: memref<1x4x8x32xbf16, #tpu.memory_space<vmem>>, %arg11: memref<1x1x32xf32, #tpu.memory_space<vmem>>, %arg12: memref<1x1x32xf32, #tpu.memory_space<vmem>>, %arg13: memref<1x1x32xf32, #tpu.memory_space<vmem>>, %arg14: memref<1x32x128xbf16, #tpu.memory_space<vmem>>, %arg15: memref<1x1x128xf32, #tpu.memory_space<vmem>>, %arg16: memref<1x128x32xbf16, #tpu.memory_space<vmem>>, %arg17: memref<1x1x32xf32, #tpu.memory_space<vmem>>, %arg18: memref<1x1x32xf32, #tpu.memory_space<vmem>>, %arg19: memref<1x1x32xf32, #tpu.memory_space<vmem>>, %arg20: memref<32x32xbf16, #tpu.memory_space<vmem>>, %arg21: memref<1x32xf32, #tpu.memory_space<vmem>>, %arg22: memref<32x128xbf16, #tpu.memory_space<vmem>>, %arg23: memref<1x128xf32, #tpu.memory_space<vmem>>, %arg24: memref<1x1x128xf32, #tpu.memory_space<vmem>>, %arg25: memref<8x32xf32, #tpu.memory_space<vmem>>, %arg26: memref<8x!tpu.dma_semaphore, #tpu.memory_space<semaphore_mem>>) attributes {dimension_semantics = [#tpu.dimension_semantics<parallel>, #tpu.dimension_semantics<arbitrary>], iteration_bounds = array<i64: 2, 2>, scalar_prefetch = 1 : i64, scratch_operands = 2 : i64, tpu.core_type = #tpu.core_type<tc>, window_params = [{transform_indices = @transform_0, window_bounds = array<i64: 1, 1, 8>}, {}, {pipeline_mode = #tpu.pipeline_mode<synchronous>, transform_indices = @transform_2, window_bounds = array<i64: 8, 32>}, {pipeline_mode = #tpu.pipeline_mode<synchronous>, transform_indices = @transform_3, window_bounds = array<i64: 1, 32>}, {pipeline_mode = #tpu.pipeline_mode<synchronous>, transform_indices = @transform_4, window_bounds = array<i64: 1, 32>}, {transform_indices = @transform_5, window_bounds = array<i64: 1, 3, 32, 32>}, {transform_indices = @transform_6, window_bounds = array<i64: 1, 3, 1, 32>}, {transform_indices = @transform_7, window_bounds = array<i64: 1, 4, 8, 32>}, {transform_indices = @transform_8, window_bounds = array<i64: 1, 1, 32>}, {transform_indices = @transform_9, window_bounds = array<i64: 1, 1, 32>}, {transform_indices = @transform_10, window_bounds = array<i64: 1, 1, 32>}, {transform_indices = @transform_11, window_bounds = array<i64: 1, 32, 128>}, {transform_indices = @transform_12, window_bounds = array<i64: 1, 1, 128>}, {transform_indices = @transform_13, window_bounds = array<i64: 1, 128, 32>}, {transform_indices = @transform_14, window_bounds = array<i64: 1, 1, 32>}, {transform_indices = @transform_15, window_bounds = array<i64: 1, 1, 32>}, {transform_indices = @transform_16, window_bounds = array<i64: 1, 1, 32>}, {pipeline_mode = #tpu.pipeline_mode<synchronous>, transform_indices = @transform_17, window_bounds = array<i64: 32, 32>}, {pipeline_mode = #tpu.pipeline_mode<synchronous>, transform_indices = @transform_18, window_bounds = array<i64: 1, 32>}, {pipeline_mode = #tpu.pipeline_mode<synchronous>, transform_indices = @transform_19, window_bounds = array<i64: 32, 128>}, {pipeline_mode = #tpu.pipeline_mode<synchronous>, transform_indices = @transform_20, window_bounds = array<i64: 1, 128>}, {transform_indices = @transform_21, window_bounds = array<i64: 1, 1, 128>}]} {
    %c0_i32 = arith.constant 0 : i32
    %0 = arith.cmpi eq, %arg1, %c0_i32 : i32
    %1 = arith.extui %0 : i1 to i32
    %c0_i32_0 = arith.constant 0 : i32
    %2 = arith.cmpi ne, %1, %c0_i32_0 : i32
    scf.if %2 {
      %143 = arith.index_cast %arg0 : i32 to index
      %c0_86 = arith.constant 0 : index
      %144 = memref.load %arg2[%143, %c0_86] : memref<2x8xi32, #tpu.memory_space<smem>>
      %c0_i32_87 = arith.constant 0 : i32
      %c0_i32_88 = arith.constant 0 : i32
      %145 = tpu.memref_slice %arg4[%144, %c0_i32_88] : memref<32x32xf32, #tpu.memory_space<any>> -> memref<1x32xf32, #tpu.memory_space<any>>
      %c0_i32_89 = arith.constant 0 : i32
      %c0_i32_90 = arith.constant 0 : i32
      %146 = tpu.memref_slice %arg25[%c0_i32_89, %c0_i32_90] : memref<8x32xf32, #tpu.memory_space<vmem>> -> memref<1x32xf32, #tpu.memory_space<vmem>>
      %147 = tpu.memref_slice %arg26[%c0_i32_87] : memref<8x!tpu.dma_semaphore, #tpu.memory_space<semaphore_mem>> -> memref<1x!tpu.dma_semaphore, #tpu.memory_space<semaphore_mem>>
      %148 = tpu.memref_squeeze %147 : memref<1x!tpu.dma_semaphore, #tpu.memory_space<semaphore_mem>> -> memref<!tpu.dma_semaphore, #tpu.memory_space<semaphore_mem>>
      tpu.enqueue_dma source(%145 : memref<1x32xf32, #tpu.memory_space<any>>) target(%146 : memref<1x32xf32, #tpu.memory_space<vmem>>) target_semaphore(%148 : memref<!tpu.dma_semaphore, #tpu.memory_space<semaphore_mem>>)
      %149 = arith.index_cast %arg0 : i32 to index
      %c1_91 = arith.constant 1 : index
      %150 = memref.load %arg2[%149, %c1_91] : memref<2x8xi32, #tpu.memory_space<smem>>
      %c1_i32_92 = arith.constant 1 : i32
      %c0_i32_93 = arith.constant 0 : i32
      %151 = tpu.memref_slice %arg4[%150, %c0_i32_93] : memref<32x32xf32, #tpu.memory_space<any>> -> memref<1x32xf32, #tpu.memory_space<any>>
      %c1_i32_94 = arith.constant 1 : i32
      %c0_i32_95 = arith.constant 0 : i32
      %152 = tpu.memref_slice %arg25[%c1_i32_94, %c0_i32_95] : memref<8x32xf32, #tpu.memory_space<vmem>> -> memref<1x32xf32, #tpu.memory_space<vmem>>
      %153 = tpu.memref_slice %arg26[%c1_i32_92] : memref<8x!tpu.dma_semaphore, #tpu.memory_space<semaphore_mem>> -> memref<1x!tpu.dma_semaphore, #tpu.memory_space<semaphore_mem>>
      %154 = tpu.memref_squeeze %153 : memref<1x!tpu.dma_semaphore, #tpu.memory_space<semaphore_mem>> -> memref<!tpu.dma_semaphore, #tpu.memory_space<semaphore_mem>>
      tpu.enqueue_dma source(%151 : memref<1x32xf32, #tpu.memory_space<any>>) target(%152 : memref<1x32xf32, #tpu.memory_space<vmem>>) target_semaphore(%154 : memref<!tpu.dma_semaphore, #tpu.memory_space<semaphore_mem>>)
      %155 = arith.index_cast %arg0 : i32 to index
      %c2_96 = arith.constant 2 : index
      %156 = memref.load %arg2[%155, %c2_96] : memref<2x8xi32, #tpu.memory_space<smem>>
      %c2_i32 = arith.constant 2 : i32
      %c0_i32_97 = arith.constant 0 : i32
      %157 = tpu.memref_slice %arg4[%156, %c0_i32_97] : memref<32x32xf32, #tpu.memory_space<any>> -> memref<1x32xf32, #tpu.memory_space<any>>
      %c2_i32_98 = arith.constant 2 : i32
      %c0_i32_99 = arith.constant 0 : i32
      %158 = tpu.memref_slice %arg25[%c2_i32_98, %c0_i32_99] : memref<8x32xf32, #tpu.memory_space<vmem>> -> memref<1x32xf32, #tpu.memory_space<vmem>>
      %159 = tpu.memref_slice %arg26[%c2_i32] : memref<8x!tpu.dma_semaphore, #tpu.memory_space<semaphore_mem>> -> memref<1x!tpu.dma_semaphore, #tpu.memory_space<semaphore_mem>>
      %160 = tpu.memref_squeeze %159 : memref<1x!tpu.dma_semaphore, #tpu.memory_space<semaphore_mem>> -> memref<!tpu.dma_semaphore, #tpu.memory_space<semaphore_mem>>
      tpu.enqueue_dma source(%157 : memref<1x32xf32, #tpu.memory_space<any>>) target(%158 : memref<1x32xf32, #tpu.memory_space<vmem>>) target_semaphore(%160 : memref<!tpu.dma_semaphore, #tpu.memory_space<semaphore_mem>>)
      %161 = arith.index_cast %arg0 : i32 to index
      %c3 = arith.constant 3 : index
      %162 = memref.load %arg2[%161, %c3] : memref<2x8xi32, #tpu.memory_space<smem>>
      %c3_i32 = arith.constant 3 : i32
      %c0_i32_100 = arith.constant 0 : i32
      %163 = tpu.memref_slice %arg4[%162, %c0_i32_100] : memref<32x32xf32, #tpu.memory_space<any>> -> memref<1x32xf32, #tpu.memory_space<any>>
      %c3_i32_101 = arith.constant 3 : i32
      %c0_i32_102 = arith.constant 0 : i32
      %164 = tpu.memref_slice %arg25[%c3_i32_101, %c0_i32_102] : memref<8x32xf32, #tpu.memory_space<vmem>> -> memref<1x32xf32, #tpu.memory_space<vmem>>
      %165 = tpu.memref_slice %arg26[%c3_i32] : memref<8x!tpu.dma_semaphore, #tpu.memory_space<semaphore_mem>> -> memref<1x!tpu.dma_semaphore, #tpu.memory_space<semaphore_mem>>
      %166 = tpu.memref_squeeze %165 : memref<1x!tpu.dma_semaphore, #tpu.memory_space<semaphore_mem>> -> memref<!tpu.dma_semaphore, #tpu.memory_space<semaphore_mem>>
      tpu.enqueue_dma source(%163 : memref<1x32xf32, #tpu.memory_space<any>>) target(%164 : memref<1x32xf32, #tpu.memory_space<vmem>>) target_semaphore(%166 : memref<!tpu.dma_semaphore, #tpu.memory_space<semaphore_mem>>)
      %167 = arith.index_cast %arg0 : i32 to index
      %c4 = arith.constant 4 : index
      %168 = memref.load %arg2[%167, %c4] : memref<2x8xi32, #tpu.memory_space<smem>>
      %c4_i32 = arith.constant 4 : i32
      %c0_i32_103 = arith.constant 0 : i32
      %169 = tpu.memref_slice %arg4[%168, %c0_i32_103] : memref<32x32xf32, #tpu.memory_space<any>> -> memref<1x32xf32, #tpu.memory_space<any>>
      %c4_i32_104 = arith.constant 4 : i32
      %c0_i32_105 = arith.constant 0 : i32
      %170 = tpu.memref_slice %arg25[%c4_i32_104, %c0_i32_105] : memref<8x32xf32, #tpu.memory_space<vmem>> -> memref<1x32xf32, #tpu.memory_space<vmem>>
      %171 = tpu.memref_slice %arg26[%c4_i32] : memref<8x!tpu.dma_semaphore, #tpu.memory_space<semaphore_mem>> -> memref<1x!tpu.dma_semaphore, #tpu.memory_space<semaphore_mem>>
      %172 = tpu.memref_squeeze %171 : memref<1x!tpu.dma_semaphore, #tpu.memory_space<semaphore_mem>> -> memref<!tpu.dma_semaphore, #tpu.memory_space<semaphore_mem>>
      tpu.enqueue_dma source(%169 : memref<1x32xf32, #tpu.memory_space<any>>) target(%170 : memref<1x32xf32, #tpu.memory_space<vmem>>) target_semaphore(%172 : memref<!tpu.dma_semaphore, #tpu.memory_space<semaphore_mem>>)
      %173 = arith.index_cast %arg0 : i32 to index
      %c5 = arith.constant 5 : index
      %174 = memref.load %arg2[%173, %c5] : memref<2x8xi32, #tpu.memory_space<smem>>
      %c5_i32 = arith.constant 5 : i32
      %c0_i32_106 = arith.constant 0 : i32
      %175 = tpu.memref_slice %arg4[%174, %c0_i32_106] : memref<32x32xf32, #tpu.memory_space<any>> -> memref<1x32xf32, #tpu.memory_space<any>>
      %c5_i32_107 = arith.constant 5 : i32
      %c0_i32_108 = arith.constant 0 : i32
      %176 = tpu.memref_slice %arg25[%c5_i32_107, %c0_i32_108] : memref<8x32xf32, #tpu.memory_space<vmem>> -> memref<1x32xf32, #tpu.memory_space<vmem>>
      %177 = tpu.memref_slice %arg26[%c5_i32] : memref<8x!tpu.dma_semaphore, #tpu.memory_space<semaphore_mem>> -> memref<1x!tpu.dma_semaphore, #tpu.memory_space<semaphore_mem>>
      %178 = tpu.memref_squeeze %177 : memref<1x!tpu.dma_semaphore, #tpu.memory_space<semaphore_mem>> -> memref<!tpu.dma_semaphore, #tpu.memory_space<semaphore_mem>>
      tpu.enqueue_dma source(%175 : memref<1x32xf32, #tpu.memory_space<any>>) target(%176 : memref<1x32xf32, #tpu.memory_space<vmem>>) target_semaphore(%178 : memref<!tpu.dma_semaphore, #tpu.memory_space<semaphore_mem>>)
      %179 = arith.index_cast %arg0 : i32 to index
      %c6 = arith.constant 6 : index
      %180 = memref.load %arg2[%179, %c6] : memref<2x8xi32, #tpu.memory_space<smem>>
      %c6_i32 = arith.constant 6 : i32
      %c0_i32_109 = arith.constant 0 : i32
      %181 = tpu.memref_slice %arg4[%180, %c0_i32_109] : memref<32x32xf32, #tpu.memory_space<any>> -> memref<1x32xf32, #tpu.memory_space<any>>
      %c6_i32_110 = arith.constant 6 : i32
      %c0_i32_111 = arith.constant 0 : i32
      %182 = tpu.memref_slice %arg25[%c6_i32_110, %c0_i32_111] : memref<8x32xf32, #tpu.memory_space<vmem>> -> memref<1x32xf32, #tpu.memory_space<vmem>>
      %183 = tpu.memref_slice %arg26[%c6_i32] : memref<8x!tpu.dma_semaphore, #tpu.memory_space<semaphore_mem>> -> memref<1x!tpu.dma_semaphore, #tpu.memory_space<semaphore_mem>>
      %184 = tpu.memref_squeeze %183 : memref<1x!tpu.dma_semaphore, #tpu.memory_space<semaphore_mem>> -> memref<!tpu.dma_semaphore, #tpu.memory_space<semaphore_mem>>
      tpu.enqueue_dma source(%181 : memref<1x32xf32, #tpu.memory_space<any>>) target(%182 : memref<1x32xf32, #tpu.memory_space<vmem>>) target_semaphore(%184 : memref<!tpu.dma_semaphore, #tpu.memory_space<semaphore_mem>>)
      %185 = arith.index_cast %arg0 : i32 to index
      %c7 = arith.constant 7 : index
      %186 = memref.load %arg2[%185, %c7] : memref<2x8xi32, #tpu.memory_space<smem>>
      %c7_i32 = arith.constant 7 : i32
      %c0_i32_112 = arith.constant 0 : i32
      %187 = tpu.memref_slice %arg4[%186, %c0_i32_112] : memref<32x32xf32, #tpu.memory_space<any>> -> memref<1x32xf32, #tpu.memory_space<any>>
      %c7_i32_113 = arith.constant 7 : i32
      %c0_i32_114 = arith.constant 0 : i32
      %188 = tpu.memref_slice %arg25[%c7_i32_113, %c0_i32_114] : memref<8x32xf32, #tpu.memory_space<vmem>> -> memref<1x32xf32, #tpu.memory_space<vmem>>
      %189 = tpu.memref_slice %arg26[%c7_i32] : memref<8x!tpu.dma_semaphore, #tpu.memory_space<semaphore_mem>> -> memref<1x!tpu.dma_semaphore, #tpu.memory_space<semaphore_mem>>
      %190 = tpu.memref_squeeze %189 : memref<1x!tpu.dma_semaphore, #tpu.memory_space<semaphore_mem>> -> memref<!tpu.dma_semaphore, #tpu.memory_space<semaphore_mem>>
      tpu.enqueue_dma source(%187 : memref<1x32xf32, #tpu.memory_space<any>>) target(%188 : memref<1x32xf32, #tpu.memory_space<vmem>>) target_semaphore(%190 : memref<!tpu.dma_semaphore, #tpu.memory_space<semaphore_mem>>)
      %c0_i32_115 = arith.constant 0 : i32
      %c0_i32_116 = arith.constant 0 : i32
      %c0_i32_117 = arith.constant 0 : i32
      %191 = tpu.memref_slice %arg4[%c0_i32_116, %c0_i32_117] : memref<32x32xf32, #tpu.memory_space<any>> -> memref<1x32xf32, #tpu.memory_space<any>>
      %c0_i32_118 = arith.constant 0 : i32
      %c0_i32_119 = arith.constant 0 : i32
      %192 = tpu.memref_slice %arg25[%c0_i32_118, %c0_i32_119] : memref<8x32xf32, #tpu.memory_space<vmem>> -> memref<1x32xf32, #tpu.memory_space<vmem>>
      %193 = tpu.memref_slice %arg26[%c0_i32_115] : memref<8x!tpu.dma_semaphore, #tpu.memory_space<semaphore_mem>> -> memref<1x!tpu.dma_semaphore, #tpu.memory_space<semaphore_mem>>
      %194 = tpu.memref_squeeze %193 : memref<1x!tpu.dma_semaphore, #tpu.memory_space<semaphore_mem>> -> memref<!tpu.dma_semaphore, #tpu.memory_space<semaphore_mem>>
      tpu.wait_dma2 semaphore(%194 : memref<!tpu.dma_semaphore, #tpu.memory_space<semaphore_mem>>) src(%191 : memref<1x32xf32, #tpu.memory_space<any>>) dst(%192 : memref<1x32xf32, #tpu.memory_space<vmem>>)
      %c1_i32_120 = arith.constant 1 : i32
      %c0_i32_121 = arith.constant 0 : i32
      %c0_i32_122 = arith.constant 0 : i32
      %195 = tpu.memref_slice %arg4[%c0_i32_121, %c0_i32_122] : memref<32x32xf32, #tpu.memory_space<any>> -> memref<1x32xf32, #tpu.memory_space<any>>
      %c1_i32_123 = arith.constant 1 : i32
      %c0_i32_124 = arith.constant 0 : i32
      %196 = tpu.memref_slice %arg25[%c1_i32_123, %c0_i32_124] : memref<8x32xf32, #tpu.memory_space<vmem>> -> memref<1x32xf32, #tpu.memory_space<vmem>>
      %197 = tpu.memref_slice %arg26[%c1_i32_120] : memref<8x!tpu.dma_semaphore, #tpu.memory_space<semaphore_mem>> -> memref<1x!tpu.dma_semaphore, #tpu.memory_space<semaphore_mem>>
      %198 = tpu.memref_squeeze %197 : memref<1x!tpu.dma_semaphore, #tpu.memory_space<semaphore_mem>> -> memref<!tpu.dma_semaphore, #tpu.memory_space<semaphore_mem>>
      tpu.wait_dma2 semaphore(%198 : memref<!tpu.dma_semaphore, #tpu.memory_space<semaphore_mem>>) src(%195 : memref<1x32xf32, #tpu.memory_space<any>>) dst(%196 : memref<1x32xf32, #tpu.memory_space<vmem>>)
      %c2_i32_125 = arith.constant 2 : i32
      %c0_i32_126 = arith.constant 0 : i32
      %c0_i32_127 = arith.constant 0 : i32
      %199 = tpu.memref_slice %arg4[%c0_i32_126, %c0_i32_127] : memref<32x32xf32, #tpu.memory_space<any>> -> memref<1x32xf32, #tpu.memory_space<any>>
      %c2_i32_128 = arith.constant 2 : i32
      %c0_i32_129 = arith.constant 0 : i32
      %200 = tpu.memref_slice %arg25[%c2_i32_128, %c0_i32_129] : memref<8x32xf32, #tpu.memory_space<vmem>> -> memref<1x32xf32, #tpu.memory_space<vmem>>
      %201 = tpu.memref_slice %arg26[%c2_i32_125] : memref<8x!tpu.dma_semaphore, #tpu.memory_space<semaphore_mem>> -> memref<1x!tpu.dma_semaphore, #tpu.memory_space<semaphore_mem>>
      %202 = tpu.memref_squeeze %201 : memref<1x!tpu.dma_semaphore, #tpu.memory_space<semaphore_mem>> -> memref<!tpu.dma_semaphore, #tpu.memory_space<semaphore_mem>>
      tpu.wait_dma2 semaphore(%202 : memref<!tpu.dma_semaphore, #tpu.memory_space<semaphore_mem>>) src(%199 : memref<1x32xf32, #tpu.memory_space<any>>) dst(%200 : memref<1x32xf32, #tpu.memory_space<vmem>>)
      %c3_i32_130 = arith.constant 3 : i32
      %c0_i32_131 = arith.constant 0 : i32
      %c0_i32_132 = arith.constant 0 : i32
      %203 = tpu.memref_slice %arg4[%c0_i32_131, %c0_i32_132] : memref<32x32xf32, #tpu.memory_space<any>> -> memref<1x32xf32, #tpu.memory_space<any>>
      %c3_i32_133 = arith.constant 3 : i32
      %c0_i32_134 = arith.constant 0 : i32
      %204 = tpu.memref_slice %arg25[%c3_i32_133, %c0_i32_134] : memref<8x32xf32, #tpu.memory_space<vmem>> -> memref<1x32xf32, #tpu.memory_space<vmem>>
      %205 = tpu.memref_slice %arg26[%c3_i32_130] : memref<8x!tpu.dma_semaphore, #tpu.memory_space<semaphore_mem>> -> memref<1x!tpu.dma_semaphore, #tpu.memory_space<semaphore_mem>>
      %206 = tpu.memref_squeeze %205 : memref<1x!tpu.dma_semaphore, #tpu.memory_space<semaphore_mem>> -> memref<!tpu.dma_semaphore, #tpu.memory_space<semaphore_mem>>
      tpu.wait_dma2 semaphore(%206 : memref<!tpu.dma_semaphore, #tpu.memory_space<semaphore_mem>>) src(%203 : memref<1x32xf32, #tpu.memory_space<any>>) dst(%204 : memref<1x32xf32, #tpu.memory_space<vmem>>)
      %c4_i32_135 = arith.constant 4 : i32
      %c0_i32_136 = arith.constant 0 : i32
      %c0_i32_137 = arith.constant 0 : i32
      %207 = tpu.memref_slice %arg4[%c0_i32_136, %c0_i32_137] : memref<32x32xf32, #tpu.memory_space<any>> -> memref<1x32xf32, #tpu.memory_space<any>>
      %c4_i32_138 = arith.constant 4 : i32
      %c0_i32_139 = arith.constant 0 : i32
      %208 = tpu.memref_slice %arg25[%c4_i32_138, %c0_i32_139] : memref<8x32xf32, #tpu.memory_space<vmem>> -> memref<1x32xf32, #tpu.memory_space<vmem>>
      %209 = tpu.memref_slice %arg26[%c4_i32_135] : memref<8x!tpu.dma_semaphore, #tpu.memory_space<semaphore_mem>> -> memref<1x!tpu.dma_semaphore, #tpu.memory_space<semaphore_mem>>
      %210 = tpu.memref_squeeze %209 : memref<1x!tpu.dma_semaphore, #tpu.memory_space<semaphore_mem>> -> memref<!tpu.dma_semaphore, #tpu.memory_space<semaphore_mem>>
      tpu.wait_dma2 semaphore(%210 : memref<!tpu.dma_semaphore, #tpu.memory_space<semaphore_mem>>) src(%207 : memref<1x32xf32, #tpu.memory_space<any>>) dst(%208 : memref<1x32xf32, #tpu.memory_space<vmem>>)
      %c5_i32_140 = arith.constant 5 : i32
      %c0_i32_141 = arith.constant 0 : i32
      %c0_i32_142 = arith.constant 0 : i32
      %211 = tpu.memref_slice %arg4[%c0_i32_141, %c0_i32_142] : memref<32x32xf32, #tpu.memory_space<any>> -> memref<1x32xf32, #tpu.memory_space<any>>
      %c5_i32_143 = arith.constant 5 : i32
      %c0_i32_144 = arith.constant 0 : i32
      %212 = tpu.memref_slice %arg25[%c5_i32_143, %c0_i32_144] : memref<8x32xf32, #tpu.memory_space<vmem>> -> memref<1x32xf32, #tpu.memory_space<vmem>>
      %213 = tpu.memref_slice %arg26[%c5_i32_140] : memref<8x!tpu.dma_semaphore, #tpu.memory_space<semaphore_mem>> -> memref<1x!tpu.dma_semaphore, #tpu.memory_space<semaphore_mem>>
      %214 = tpu.memref_squeeze %213 : memref<1x!tpu.dma_semaphore, #tpu.memory_space<semaphore_mem>> -> memref<!tpu.dma_semaphore, #tpu.memory_space<semaphore_mem>>
      tpu.wait_dma2 semaphore(%214 : memref<!tpu.dma_semaphore, #tpu.memory_space<semaphore_mem>>) src(%211 : memref<1x32xf32, #tpu.memory_space<any>>) dst(%212 : memref<1x32xf32, #tpu.memory_space<vmem>>)
      %c6_i32_145 = arith.constant 6 : i32
      %c0_i32_146 = arith.constant 0 : i32
      %c0_i32_147 = arith.constant 0 : i32
      %215 = tpu.memref_slice %arg4[%c0_i32_146, %c0_i32_147] : memref<32x32xf32, #tpu.memory_space<any>> -> memref<1x32xf32, #tpu.memory_space<any>>
      %c6_i32_148 = arith.constant 6 : i32
      %c0_i32_149 = arith.constant 0 : i32
      %216 = tpu.memref_slice %arg25[%c6_i32_148, %c0_i32_149] : memref<8x32xf32, #tpu.memory_space<vmem>> -> memref<1x32xf32, #tpu.memory_space<vmem>>
      %217 = tpu.memref_slice %arg26[%c6_i32_145] : memref<8x!tpu.dma_semaphore, #tpu.memory_space<semaphore_mem>> -> memref<1x!tpu.dma_semaphore, #tpu.memory_space<semaphore_mem>>
      %218 = tpu.memref_squeeze %217 : memref<1x!tpu.dma_semaphore, #tpu.memory_space<semaphore_mem>> -> memref<!tpu.dma_semaphore, #tpu.memory_space<semaphore_mem>>
      tpu.wait_dma2 semaphore(%218 : memref<!tpu.dma_semaphore, #tpu.memory_space<semaphore_mem>>) src(%215 : memref<1x32xf32, #tpu.memory_space<any>>) dst(%216 : memref<1x32xf32, #tpu.memory_space<vmem>>)
      %c7_i32_150 = arith.constant 7 : i32
      %c0_i32_151 = arith.constant 0 : i32
      %c0_i32_152 = arith.constant 0 : i32
      %219 = tpu.memref_slice %arg4[%c0_i32_151, %c0_i32_152] : memref<32x32xf32, #tpu.memory_space<any>> -> memref<1x32xf32, #tpu.memory_space<any>>
      %c7_i32_153 = arith.constant 7 : i32
      %c0_i32_154 = arith.constant 0 : i32
      %220 = tpu.memref_slice %arg25[%c7_i32_153, %c0_i32_154] : memref<8x32xf32, #tpu.memory_space<vmem>> -> memref<1x32xf32, #tpu.memory_space<vmem>>
      %221 = tpu.memref_slice %arg26[%c7_i32_150] : memref<8x!tpu.dma_semaphore, #tpu.memory_space<semaphore_mem>> -> memref<1x!tpu.dma_semaphore, #tpu.memory_space<semaphore_mem>>
      %222 = tpu.memref_squeeze %221 : memref<1x!tpu.dma_semaphore, #tpu.memory_space<semaphore_mem>> -> memref<!tpu.dma_semaphore, #tpu.memory_space<semaphore_mem>>
      tpu.wait_dma2 semaphore(%222 : memref<!tpu.dma_semaphore, #tpu.memory_space<semaphore_mem>>) src(%219 : memref<1x32xf32, #tpu.memory_space<any>>) dst(%220 : memref<1x32xf32, #tpu.memory_space<vmem>>)
      %c0_155 = arith.constant 0 : index
      %c0_156 = arith.constant 0 : index
      %223 = vector.load %arg25[%c0_155, %c0_156] : memref<8x32xf32, #tpu.memory_space<vmem>>, vector<8x32xf32>
      %c0_157 = arith.constant 0 : index
      %c0_158 = arith.constant 0 : index
      %224 = vector.load %arg5[%c0_157, %c0_158] : memref<8x32xf32, #tpu.memory_space<vmem>>, vector<8x32xf32>
      %225 = arith.addf %223, %224 : vector<8x32xf32>
      %c0_159 = arith.constant 0 : index
      %c0_160 = arith.constant 0 : index
      %226 = vector.load %arg6[%c0_159, %c0_160] : memref<1x32xf32, #tpu.memory_space<vmem>>, vector<1x32xf32>
      %c0_161 = arith.constant 0 : index
      %c0_162 = arith.constant 0 : index
      %227 = vector.load %arg7[%c0_161, %c0_162] : memref<1x32xf32, #tpu.memory_space<vmem>>, vector<1x32xf32>
      %cst_163 = arith.constant dense<0.000000e+00> : vector<8xf32>
      %228 = vector.multi_reduction <add>, %225, %cst_163 [1] : vector<8x32xf32> to vector<8xf32>
      %229 = vector.shape_cast %228 : vector<8xf32> to vector<8x1xf32>
      %cst_164 = arith.constant 3.200000e+01 : f32
      %230 = vector.broadcast %cst_164 : f32 to vector<8x1xf32>
      %231 = arith.divf %229, %230 : vector<8x1xf32>
      %232 = vector.broadcast %231 : vector<8x1xf32> to vector<8x32xf32>
      %233 = arith.subf %225, %232 : vector<8x32xf32>
      %234 = arith.mulf %233, %233 : vector<8x32xf32>
      %cst_165 = arith.constant dense<0.000000e+00> : vector<8xf32>
      %235 = vector.multi_reduction <add>, %234, %cst_165 [1] : vector<8x32xf32> to vector<8xf32>
      %236 = vector.shape_cast %235 : vector<8xf32> to vector<8x1xf32>
      %cst_166 = arith.constant 3.200000e+01 : f32
      %237 = vector.broadcast %cst_166 : f32 to vector<8x1xf32>
      %238 = arith.divf %236, %237 : vector<8x1xf32>
      %cst_167 = arith.constant 9.99999996E-13 : f32
      %239 = vector.broadcast %cst_167 : f32 to vector<8x1xf32>
      %240 = arith.addf %238, %239 : vector<8x1xf32>
      %241 = math.rsqrt %240 : vector<8x1xf32>
      %242 = vector.broadcast %241 : vector<8x1xf32> to vector<8x32xf32>
      %243 = arith.mulf %233, %242 : vector<8x32xf32>
      %244 = vector.broadcast %226 : vector<1x32xf32> to vector<8x32xf32>
      %245 = arith.mulf %243, %244 : vector<8x32xf32>
      %246 = vector.broadcast %227 : vector<1x32xf32> to vector<8x32xf32>
      %247 = arith.addf %245, %246 : vector<8x32xf32>
      %c0_168 = arith.constant 0 : index
      %c0_169 = arith.constant 0 : index
      %248 = vector.load %arg25[%c0_168, %c0_169] : memref<8x32xf32, #tpu.memory_space<vmem>>, vector<8x32xf32>
      tpu.vector_store %arg25[%c0_168, %c0_169], %247 {strides = array<i32>} : memref<8x32xf32, #tpu.memory_space<vmem>>, vector<8x32xf32>,
    } else {
    }
    %c0 = arith.constant 0 : index
    %c0_1 = arith.constant 0 : index
    %3 = vector.load %arg25[%c0, %c0_1] : memref<8x32xf32, #tpu.memory_space<vmem>>, vector<8x32xf32>
    %4 = arith.truncf %3 : vector<8x32xf32> to vector<8x32xbf16>
    %c0_2 = arith.constant 0 : index
    %c0_3 = arith.constant 0 : index
    %c0_4 = arith.constant 0 : index
    %c0_5 = arith.constant 0 : index
    %5 = vector.load %arg8[%c0_2, %c0_3, %c0_4, %c0_5] : memref<1x3x32x32xbf16, #tpu.memory_space<vmem>>, vector<1x1x32x32xbf16>
    %6 = vector.shape_cast %5 : vector<1x1x32x32xbf16> to vector<32x32xbf16>
    %cst = arith.constant dense<0.000000e+00> : vector<8x32xf32>
    %7 = tpu.matmul %4, %6, %cst {dimension_numbers = #tpu.dot_dimension_numbers<[1], [0], [0], [1], [0, 0, 1, 1], [], []>} : vector<8x32xbf16>, vector<32x32xbf16>, vector<8x32xf32> -> vector<8x32xf32>
    %c0_6 = arith.constant 0 : index
    %c0_7 = arith.constant 0 : index
    %c0_8 = arith.constant 0 : index
    %c0_9 = arith.constant 0 : index
    %8 = vector.load %arg9[%c0_6, %c0_7, %c0_8, %c0_9] : memref<1x3x1x32xf32, #tpu.memory_space<vmem>>, vector<1x1x1x32xf32>
    %9 = vector.shape_cast %8 : vector<1x1x1x32xf32> to vector<1x32xf32>
    %10 = vector.broadcast %9 : vector<1x32xf32> to vector<8x32xf32>
    %11 = arith.addf %7, %10 : vector<8x32xf32>
    %c0_10 = arith.constant 0 : index
    %c1 = arith.constant 1 : index
    %c0_11 = arith.constant 0 : index
    %c0_12 = arith.constant 0 : index
    %12 = vector.load %arg8[%c0_10, %c1, %c0_11, %c0_12] : memref<1x3x32x32xbf16, #tpu.memory_space<vmem>>, vector<1x1x32x32xbf16>
    %13 = vector.shape_cast %12 : vector<1x1x32x32xbf16> to vector<32x32xbf16>
    %cst_13 = arith.constant dense<0.000000e+00> : vector<8x32xf32>
    %14 = tpu.matmul %4, %13, %cst_13 {dimension_numbers = #tpu.dot_dimension_numbers<[1], [0], [0], [1], [0, 0, 1, 1], [], []>} : vector<8x32xbf16>, vector<32x32xbf16>, vector<8x32xf32> -> vector<8x32xf32>
    %c0_14 = arith.constant 0 : index
    %c1_15 = arith.constant 1 : index
    %c0_16 = arith.constant 0 : index
    %c0_17 = arith.constant 0 : index
    %15 = vector.load %arg9[%c0_14, %c1_15, %c0_16, %c0_17] : memref<1x3x1x32xf32, #tpu.memory_space<vmem>>, vector<1x1x1x32xf32>
    %16 = vector.shape_cast %15 : vector<1x1x1x32xf32> to vector<1x32xf32>
    %17 = vector.broadcast %16 : vector<1x32xf32> to vector<8x32xf32>
    %18 = arith.addf %14, %17 : vector<8x32xf32>
    %c0_18 = arith.constant 0 : index
    %c2 = arith.constant 2 : index
    %c0_19 = arith.constant 0 : index
    %c0_20 = arith.constant 0 : index
    %19 = vector.load %arg8[%c0_18, %c2, %c0_19, %c0_20] : memref<1x3x32x32xbf16, #tpu.memory_space<vmem>>, vector<1x1x32x32xbf16>
    %20 = vector.shape_cast %19 : vector<1x1x32x32xbf16> to vector<32x32xbf16>
    %cst_21 = arith.constant dense<0.000000e+00> : vector<8x32xf32>
    %21 = tpu.matmul %4, %20, %cst_21 {dimension_numbers = #tpu.dot_dimension_numbers<[1], [0], [0], [1], [0, 0, 1, 1], [], []>} : vector<8x32xbf16>, vector<32x32xbf16>, vector<8x32xf32> -> vector<8x32xf32>
    %c0_22 = arith.constant 0 : index
    %c2_23 = arith.constant 2 : index
    %c0_24 = arith.constant 0 : index
    %c0_25 = arith.constant 0 : index
    %22 = vector.load %arg9[%c0_22, %c2_23, %c0_24, %c0_25] : memref<1x3x1x32xf32, #tpu.memory_space<vmem>>, vector<1x1x1x32xf32>
    %23 = vector.shape_cast %22 : vector<1x1x1x32xf32> to vector<1x32xf32>
    %24 = vector.broadcast %23 : vector<1x32xf32> to vector<8x32xf32>
    %25 = arith.addf %21, %24 : vector<8x32xf32>
    %26 = vector.shape_cast %11 : vector<8x32xf32> to vector<8x4x8xf32>
    %27 = tpu.transpose %26, [1, 0, 2] : vector<8x4x8xf32> -> vector<4x8x8xf32>
    %28 = vector.shape_cast %18 : vector<8x32xf32> to vector<8x4x8xf32>
    %29 = tpu.transpose %28, [1, 0, 2] : vector<8x4x8xf32> -> vector<4x8x8xf32>
    %30 = vector.shape_cast %25 : vector<8x32xf32> to vector<8x4x8xf32>
    %31 = tpu.transpose %30, [1, 0, 2] : vector<8x4x8xf32> -> vector<4x8x8xf32>
    "tpu.trace_start"() <{level = 10 : i32, message = "hqd,hkd->hqk"}> : () -> ()
    %cst_26 = arith.constant dense<0.000000e+00> : vector<4x8x8xf32>
    %32 = tpu.matmul %27, %29, %cst_26 {dimension_numbers = #tpu.dot_dimension_numbers<[2], [2], [1], [1], [0, 0, 0, 1, 1, 1], [0], [0]>} : vector<4x8x8xf32>, vector<4x8x8xf32>, vector<4x8x8xf32> -> vector<4x8x8xf32>
    "tpu.trace_stop"() : () -> ()
    %cst_27 = arith.constant 0.353553385 : f32
    %33 = vector.broadcast %cst_27 : f32 to vector<4x8x8xf32>
    %34 = arith.mulf %32, %33 : vector<4x8x8xf32>
    %c0_28 = arith.constant 0 : index
    %c0_29 = arith.constant 0 : index
    %c0_30 = arith.constant 0 : index
    %35 = vector.load %arg3[%c0_28, %c0_29, %c0_30] : memref<1x1x8xf32, #tpu.memory_space<vmem>>, vector<1x1x8xf32>
    %36 = vector.shape_cast %35 : vector<1x1x8xf32> to vector<1x8xf32>
    %37 = vector.shape_cast %36 : vector<1x8xf32> to vector<1x1x8xf32>
    %38 = vector.broadcast %37 : vector<1x1x8xf32> to vector<4x8x8xf32>
    %39 = arith.addf %34, %38 : vector<4x8x8xf32>
    %cst_31 = arith.constant dense<0xFF800000> : vector<4x8xf32>
    %40 = vector.multi_reduction <maximumf>, %39, %cst_31 [2] : vector<4x8x8xf32> to vector<4x8xf32>
    %41 = vector.shape_cast %40 : vector<4x8xf32> to vector<4x8x1xf32>
    %42 = vector.broadcast %41 : vector<4x8x1xf32> to vector<4x8x8xf32>
    %43 = arith.subf %39, %42 : vector<4x8x8xf32>
    %44 = math.exp %43 : vector<4x8x8xf32>
    %cst_32 = arith.constant dense<0.000000e+00> : vector<4x8xf32>
    %45 = vector.multi_reduction <add>, %44, %cst_32 [2] : vector<4x8x8xf32> to vector<4x8xf32>
    %46 = vector.shape_cast %45 : vector<4x8xf32> to vector<4x8x1xf32>
    %47 = tpu.reciprocal %46 {approx = true} : vector<4x8x1xf32> -> vector<4x8x1xf32>
    %48 = vector.broadcast %47 : vector<4x8x1xf32> to vector<4x8x8xf32>
    %49 = arith.mulf %44, %48 : vector<4x8x8xf32>
    "tpu.trace_start"() <{level = 10 : i32, message = "hqk,hkd->hqd"}> : () -> ()
    %cst_33 = arith.constant dense<0.000000e+00> : vector<4x8x8xf32>
    %50 = tpu.matmul %49, %31, %cst_33 {dimension_numbers = #tpu.dot_dimension_numbers<[2], [1], [1], [2], [0, 0, 0, 1, 1, 2], [0], [0]>} : vector<4x8x8xf32>, vector<4x8x8xf32>, vector<4x8x8xf32> -> vector<4x8x8xf32>
    "tpu.trace_stop"() : () -> ()
    %51 = arith.truncf %50 : vector<4x8x8xf32> to vector<4x8x8xbf16>
    %c0_34 = arith.constant 0 : index
    %c0_35 = arith.constant 0 : index
    %c0_36 = arith.constant 0 : index
    %c0_37 = arith.constant 0 : index
    %52 = vector.load %arg10[%c0_34, %c0_35, %c0_36, %c0_37] : memref<1x4x8x32xbf16, #tpu.memory_space<vmem>>, vector<1x4x8x32xbf16>
    %53 = vector.shape_cast %52 : vector<1x4x8x32xbf16> to vector<4x8x32xbf16>
    "tpu.trace_start"() <{level = 10 : i32, message = "hsd,hde->hse"}> : () -> ()
    %cst_38 = arith.constant dense<0.000000e+00> : vector<4x8x32xf32>
    %54 = tpu.matmul %51, %53, %cst_38 {dimension_numbers = #tpu.dot_dimension_numbers<[2], [1], [1], [2], [0, 0, 0, 1, 1, 2], [0], [0]>} : vector<4x8x8xbf16>, vector<4x8x32xbf16>, vector<4x8x32xf32> -> vector<4x8x32xf32>
    "tpu.trace_stop"() : () -> ()
    %cst_39 = arith.constant dense<0.000000e+00> : vector<8x32xf32>
    %55 = vector.multi_reduction <add>, %54, %cst_39 [0] : vector<4x8x32xf32> to vector<8x32xf32>
    %c0_40 = arith.constant 0 : index
    %c0_41 = arith.constant 0 : index
    %c0_42 = arith.constant 0 : index
    %56 = vector.load %arg11[%c0_40, %c0_41, %c0_42] : memref<1x1x32xf32, #tpu.memory_space<vmem>>, vector<1x1x32xf32>
    %57 = vector.shape_cast %56 : vector<1x1x32xf32> to vector<1x32xf32>
    %58 = vector.broadcast %57 : vector<1x32xf32> to vector<8x32xf32>
    %59 = arith.addf %55, %58 : vector<8x32xf32>
    %60 = arith.addf %59, %3 : vector<8x32xf32>
    %c0_43 = arith.constant 0 : index
    %c0_44 = arith.constant 0 : index
    %c0_45 = arith.constant 0 : index
    %61 = vector.load %arg12[%c0_43, %c0_44, %c0_45] : memref<1x1x32xf32, #tpu.memory_space<vmem>>, vector<1x1x32xf32>
    %62 = vector.shape_cast %61 : vector<1x1x32xf32> to vector<1x32xf32>
    %c0_46 = arith.constant 0 : index
    %c0_47 = arith.constant 0 : index
    %c0_48 = arith.constant 0 : index
    %63 = vector.load %arg13[%c0_46, %c0_47, %c0_48] : memref<1x1x32xf32, #tpu.memory_space<vmem>>, vector<1x1x32xf32>
    %64 = vector.shape_cast %63 : vector<1x1x32xf32> to vector<1x32xf32>
    %cst_49 = arith.constant dense<0.000000e+00> : vector<8xf32>
    %65 = vector.multi_reduction <add>, %60, %cst_49 [1] : vector<8x32xf32> to vector<8xf32>
    %66 = vector.shape_cast %65 : vector<8xf32> to vector<8x1xf32>
    %cst_50 = arith.constant 3.200000e+01 : f32
    %67 = vector.broadcast %cst_50 : f32 to vector<8x1xf32>
    %68 = arith.divf %66, %67 : vector<8x1xf32>
    %69 = vector.broadcast %68 : vector<8x1xf32> to vector<8x32xf32>
    %70 = arith.subf %60, %69 : vector<8x32xf32>
    %71 = arith.mulf %70, %70 : vector<8x32xf32>
    %cst_51 = arith.constant dense<0.000000e+00> : vector<8xf32>
    %72 = vector.multi_reduction <add>, %71, %cst_51 [1] : vector<8x32xf32> to vector<8xf32>
    %73 = vector.shape_cast %72 : vector<8xf32> to vector<8x1xf32>
    %cst_52 = arith.constant 3.200000e+01 : f32
    %74 = vector.broadcast %cst_52 : f32 to vector<8x1xf32>
    %75 = arith.divf %73, %74 : vector<8x1xf32>
    %cst_53 = arith.constant 9.99999996E-13 : f32
    %76 = vector.broadcast %cst_53 : f32 to vector<8x1xf32>
    %77 = arith.addf %75, %76 : vector<8x1xf32>
    %78 = math.rsqrt %77 : vector<8x1xf32>
    %79 = vector.broadcast %78 : vector<8x1xf32> to vector<8x32xf32>
    %80 = arith.mulf %70, %79 : vector<8x32xf32>
    %81 = vector.broadcast %62 : vector<1x32xf32> to vector<8x32xf32>
    %82 = arith.mulf %80, %81 : vector<8x32xf32>
    %83 = vector.broadcast %64 : vector<1x32xf32> to vector<8x32xf32>
    %84 = arith.addf %82, %83 : vector<8x32xf32>
    %c0_54 = arith.constant 0 : index
    %c0_55 = arith.constant 0 : index
    %c0_56 = arith.constant 0 : index
    %85 = vector.load %arg14[%c0_54, %c0_55, %c0_56] : memref<1x32x128xbf16, #tpu.memory_space<vmem>>, vector<1x32x128xbf16>
    %86 = vector.shape_cast %85 : vector<1x32x128xbf16> to vector<32x128xbf16>
    %87 = arith.truncf %84 : vector<8x32xf32> to vector<8x32xbf16>
    %cst_57 = arith.constant dense<0.000000e+00> : vector<8x128xf32>
    %88 = tpu.matmul %87, %86, %cst_57 {dimension_numbers = #tpu.dot_dimension_numbers<[1], [0], [0], [1], [0, 0, 1, 1], [], []>} : vector<8x32xbf16>, vector<32x128xbf16>, vector<8x128xf32> -> vector<8x128xf32>
    %c0_58 = arith.constant 0 : index
    %c0_59 = arith.constant 0 : index
    %c0_60 = arith.constant 0 : index
    %89 = vector.load %arg15[%c0_58, %c0_59, %c0_60] : memref<1x1x128xf32, #tpu.memory_space<vmem>>, vector<1x1x128xf32>
    %90 = vector.shape_cast %89 : vector<1x1x128xf32> to vector<1x128xf32>
    %91 = vector.broadcast %90 : vector<1x128xf32> to vector<8x128xf32>
    %92 = arith.addf %88, %91 : vector<8x128xf32>
    %93 = arith.mulf %92, %92 : vector<8x128xf32>
    %94 = arith.mulf %92, %93 : vector<8x128xf32>
    %cst_61 = arith.constant 4.471500e-02 : f32
    %95 = vector.broadcast %cst_61 : f32 to vector<8x128xf32>
    %96 = arith.mulf %95, %94 : vector<8x128xf32>
    %97 = arith.addf %92, %96 : vector<8x128xf32>
    %cst_62 = arith.constant 0.797884583 : f32
    %98 = vector.broadcast %cst_62 : f32 to vector<8x128xf32>
    %99 = arith.mulf %98, %97 : vector<8x128xf32>
    %100 = math.tanh %99 : vector<8x128xf32>
    %cst_63 = arith.constant 1.000000e+00 : f32
    %101 = vector.broadcast %cst_63 : f32 to vector<8x128xf32>
    %102 = arith.addf %101, %100 : vector<8x128xf32>
    %cst_64 = arith.constant 5.000000e-01 : f32
    %103 = vector.broadcast %cst_64 : f32 to vector<8x128xf32>
    %104 = arith.mulf %103, %102 : vector<8x128xf32>
    %105 = arith.mulf %92, %104 : vector<8x128xf32>
    %c0_65 = arith.constant 0 : index
    %c0_66 = arith.constant 0 : index
    %c0_67 = arith.constant 0 : index
    %106 = vector.load %arg16[%c0_65, %c0_66, %c0_67] : memref<1x128x32xbf16, #tpu.memory_space<vmem>>, vector<1x128x32xbf16>
    %107 = vector.shape_cast %106 : vector<1x128x32xbf16> to vector<128x32xbf16>
    %108 = arith.truncf %105 : vector<8x128xf32> to vector<8x128xbf16>
    %cst_68 = arith.constant dense<0.000000e+00> : vector<8x32xf32>
    %109 = tpu.matmul %108, %107, %cst_68 {dimension_numbers = #tpu.dot_dimension_numbers<[1], [0], [0], [1], [0, 0, 1, 1], [], []>} : vector<8x128xbf16>, vector<128x32xbf16>, vector<8x32xf32> -> vector<8x32xf32>
    %c0_69 = arith.constant 0 : index
    %c0_70 = arith.constant 0 : index
    %c0_71 = arith.constant 0 : index
    %110 = vector.load %arg17[%c0_69, %c0_70, %c0_71] : memref<1x1x32xf32, #tpu.memory_space<vmem>>, vector<1x1x32xf32>
    %111 = vector.shape_cast %110 : vector<1x1x32xf32> to vector<1x32xf32>
    %112 = vector.broadcast %111 : vector<1x32xf32> to vector<8x32xf32>
    %113 = arith.addf %109, %112 : vector<8x32xf32>
    %114 = arith.addf %113, %84 : vector<8x32xf32>
    %c0_72 = arith.constant 0 : index
    %c0_73 = arith.constant 0 : index
    %c0_74 = arith.constant 0 : index
    %115 = vector.load %arg18[%c0_72, %c0_73, %c0_74] : memref<1x1x32xf32, #tpu.memory_space<vmem>>, vector<1x1x32xf32>
    %116 = vector.shape_cast %115 : vector<1x1x32xf32> to vector<1x32xf32>
    %c0_75 = arith.constant 0 : index
    %c0_76 = arith.constant 0 : index
    %c0_77 = arith.constant 0 : index
    %117 = vector.load %arg19[%c0_75, %c0_76, %c0_77] : memref<1x1x32xf32, #tpu.memory_space<vmem>>, vector<1x1x32xf32>
    %118 = vector.shape_cast %117 : vector<1x1x32xf32> to vector<1x32xf32>
    %cst_78 = arith.constant dense<0.000000e+00> : vector<8xf32>
    %119 = vector.multi_reduction <add>, %114, %cst_78 [1] : vector<8x32xf32> to vector<8xf32>
    %120 = vector.shape_cast %119 : vector<8xf32> to vector<8x1xf32>
    %cst_79 = arith.constant 3.200000e+01 : f32
    %121 = vector.broadcast %cst_79 : f32 to vector<8x1xf32>
    %122 = arith.divf %120, %121 : vector<8x1xf32>
    %123 = vector.broadcast %122 : vector<8x1xf32> to vector<8x32xf32>
    %124 = arith.subf %114, %123 : vector<8x32xf32>
    %125 = arith.mulf %124, %124 : vector<8x32xf32>
    %cst_80 = arith.constant dense<0.000000e+00> : vector<8xf32>
    %126 = vector.multi_reduction <add>, %125, %cst_80 [1] : vector<8x32xf32> to vector<8xf32>
    %127 = vector.shape_cast %126 : vector<8xf32> to vector<8x1xf32>
    %cst_81 = arith.constant 3.200000e+01 : f32
    %128 = vector.broadcast %cst_81 : f32 to vector<8x1xf32>
    %129 = arith.divf %127, %128 : vector<8x1xf32>
    %cst_82 = arith.constant 9.99999996E-13 : f32
    %130 = vector.broadcast %cst_82 : f32 to vector<8x1xf32>
    %131 = arith.addf %129, %130 : vector<8x1xf32>
    %132 = math.rsqrt %131 : vector<8x1xf32>
    %133 = vector.broadcast %132 : vector<8x1xf32> to vector<8x32xf32>
    %134 = arith.mulf %124, %133 : vector<8x32xf32>
    %135 = vector.broadcast %116 : vector<1x32xf32> to vector<8x32xf32>
    %136 = arith.mulf %134, %135 : vector<8x32xf32>
    %137 = vector.broadcast %118 : vector<1x32xf32> to vector<8x32xf32>
    %138 = arith.addf %136, %137 : vector<8x32xf32>
    %c0_83 = arith.constant 0 : index
    %c0_84 = arith.constant 0 : index
    %139 = vector.load %arg25[%c0_83, %c0_84] : memref<8x32xf32, #tpu.memory_space<vmem>>, vector<8x32xf32>
    tpu.vector_store %arg25[%c0_83, %c0_84], %138 {strides = array<i32>} : memref<8x32xf32, #tpu.memory_space<vmem>>, vector<8x32xf32>,
    %c1_i32 = arith.constant 1 : i32
    %140 = arith.cmpi eq, %arg1, %c1_i32 : i32
    %141 = arith.extui %140 : i1 to i32
    %c0_i32_85 = arith.constant 0 : i32
    %142 = arith.cmpi ne, %141, %c0_i32_85 : i32
    scf.if %142 {
      %143 = vector.extract_strided_slice %138 {offsets = [0, 0], sizes = [1, 32], strides = [1, 1]} : vector<8x32xf32> to vector<1x32xf32>
      %c0_86 = arith.constant 0 : index
      %c0_87 = arith.constant 0 : index
      %144 = vector.load %arg20[%c0_86, %c0_87] : memref<32x32xbf16, #tpu.memory_space<vmem>>, vector<32x32xbf16>
      %145 = arith.truncf %143 : vector<1x32xf32> to vector<1x32xbf16>
      %cst_88 = arith.constant dense<0.000000e+00> : vector<1x32xf32>
      %146 = tpu.matmul %145, %144, %cst_88 {dimension_numbers = #tpu.dot_dimension_numbers<[1], [0], [0], [1], [0, 0, 1, 1], [], []>} : vector<1x32xbf16>, vector<32x32xbf16>, vector<1x32xf32> -> vector<1x32xf32>
      %c0_89 = arith.constant 0 : index
      %c0_90 = arith.constant 0 : index
      %147 = vector.load %arg21[%c0_89, %c0_90] : memref<1x32xf32, #tpu.memory_space<vmem>>, vector<1x32xf32>
      %148 = arith.addf %146, %147 : vector<1x32xf32>
      %149 = math.tanh %148 : vector<1x32xf32>
      %c0_91 = arith.constant 0 : index
      %c0_92 = arith.constant 0 : index
      %150 = vector.load %arg22[%c0_91, %c0_92] : memref<32x128xbf16, #tpu.memory_space<vmem>>, vector<32x128xbf16>
      %151 = arith.truncf %149 : vector<1x32xf32> to vector<1x32xbf16>
      %cst_93 = arith.constant dense<0.000000e+00> : vector<1x128xf32>
      %152 = tpu.matmul %151, %150, %cst_93 {dimension_numbers = #tpu.dot_dimension_numbers<[1], [0], [0], [1], [0, 0, 1, 1], [], []>} : vector<1x32xbf16>, vector<32x128xbf16>, vector<1x128xf32> -> vector<1x128xf32>
      %c0_94 = arith.constant 0 : index
      %c0_95 = arith.constant 0 : index
      %153 = vector.load %arg23[%c0_94, %c0_95] : memref<1x128xf32, #tpu.memory_space<vmem>>, vector<1x128xf32>
      %154 = arith.addf %152, %153 : vector<1x128xf32>
      %c0_96 = arith.constant 0 : index
      %c0_97 = arith.constant 0 : index
      %c0_98 = arith.constant 0 : index
      %155 = vector.load %arg24[%c0_96, %c0_97, %c0_98] : memref<1x1x128xf32, #tpu.memory_space<vmem>>, vector<1x1x128xf32>
      %156 = vector.shape_cast %155 : vector<1x1x128xf32> to vector<1x128xf32>
      %157 = vector.shape_cast %154 : vector<1x128xf32> to vector<1x1x128xf32>
      tpu.vector_store %arg24[%c0_96, %c0_97, %c0_98], %157 {strides = array<i32>} : memref<1x1x128xf32, #tpu.memory_space<vmem>>, vector<1x1x128xf32>,
    } else {
    }
    return
  }
  func.func @transform_0(%arg0: i32, %arg1: i32, %arg2: memref<2x8xi32, #tpu.memory_space<smem>>) -> (i32, i32, i32) {
    %c0_i32 = arith.constant 0 : i32
    %c0_i32_0 = arith.constant 0 : i32
    %c0_i32_1 = arith.constant 0 : i32
    return %arg0, %c0_i32, %c0_i32_0 : i32, i32, i32
  }
  func.func @transform_2(%arg0: i32, %arg1: i32, %arg2: memref<2x8xi32, #tpu.memory_space<smem>>) -> (i32, i32) {
    %c0_i32 = arith.constant 0 : i32
    %c0_i32_0 = arith.constant 0 : i32
    %c0_i32_1 = arith.constant 0 : i32
    return %c0_i32, %c0_i32_0 : i32, i32
  }
  func.func @transform_3(%arg0: i32, %arg1: i32, %arg2: memref<2x8xi32, #tpu.memory_space<smem>>) -> (i32, i32) {
    %c0_i32 = arith.constant 0 : i32
    %c0_i32_0 = arith.constant 0 : i32
    %c0_i32_1 = arith.constant 0 : i32
    return %c0_i32, %c0_i32_0 : i32, i32
  }
  func.func @transform_4(%arg0: i32, %arg1: i32, %arg2: memref<2x8xi32, #tpu.memory_space<smem>>) -> (i32, i32) {
    %c0_i32 = arith.constant 0 : i32
    %c0_i32_0 = arith.constant 0 : i32
    %c0_i32_1 = arith.constant 0 : i32
    return %c0_i32, %c0_i32_0 : i32, i32
  }
  func.func @transform_5(%arg0: i32, %arg1: i32, %arg2: memref<2x8xi32, #tpu.memory_space<smem>>) -> (i32, i32, i32, i32) {
    %c0_i32 = arith.constant 0 : i32
    %c0_i32_0 = arith.constant 0 : i32
    %c0_i32_1 = arith.constant 0 : i32
    %c0_i32_2 = arith.constant 0 : i32
    return %arg1, %c0_i32, %c0_i32_0, %c0_i32_1 : i32, i32, i32, i32
  }
  func.func @transform_6(%arg0: i32, %arg1: i32, %arg2: memref<2x8xi32, #tpu.memory_space<smem>>) -> (i32, i32, i32, i32) {
    %c0_i32 = arith.constant 0 : i32
    %c0_i32_0 = arith.constant 0 : i32
    %c0_i32_1 = arith.constant 0 : i32
    %c0_i32_2 = arith.constant 0 : i32
    return %arg1, %c0_i32, %c0_i32_0, %c0_i32_1 : i32, i32, i32, i32
  }
  func.func @transform_7(%arg0: i32, %arg1: i32, %arg2: memref<2x8xi32, #tpu.memory_space<smem>>) -> (i32, i32, i32, i32) {
    %c0_i32 = arith.constant 0 : i32
    %c0_i32_0 = arith.constant 0 : i32
    %c0_i32_1 = arith.constant 0 : i32
    %c0_i32_2 = arith.constant 0 : i32
    return %arg1, %c0_i32, %c0_i32_0, %c0_i32_1 : i32, i32, i32, i32
  }
  func.func @transform_8(%arg0: i32, %arg1: i32, %arg2: memref<2x8xi32, #tpu.memory_space<smem>>) -> (i32, i32, i32) {
    %c0_i32 = arith.constant 0 : i32
    %c0_i32_0 = arith.constant 0 : i32
    %c0_i32_1 = arith.constant 0 : i32
    return %arg1, %c0_i32, %c0_i32_0 : i32, i32, i32
  }
  func.func @transform_9(%arg0: i32, %arg1: i32, %arg2: memref<2x8xi32, #tpu.memory_space<smem>>) -> (i32, i32, i32) {
    %c0_i32 = arith.constant 0 : i32
    %c0_i32_0 = arith.constant 0 : i32
    %c0_i32_1 = arith.constant 0 : i32
    return %arg1, %c0_i32, %c0_i32_0 : i32, i32, i32
  }
  func.func @transform_10(%arg0: i32, %arg1: i32, %arg2: memref<2x8xi32, #tpu.memory_space<smem>>) -> (i32, i32, i32) {
    %c0_i32 = arith.constant 0 : i32
    %c0_i32_0 = arith.constant 0 : i32
    %c0_i32_1 = arith.constant 0 : i32
    return %arg1, %c0_i32, %c0_i32_0 : i32, i32, i32
  }
  func.func @transform_11(%arg0: i32, %arg1: i32, %arg2: memref<2x8xi32, #tpu.memory_space<smem>>) -> (i32, i32, i32) {
    %c0_i32 = arith.constant 0 : i32
    %c0_i32_0 = arith.constant 0 : i32
    %c0_i32_1 = arith.constant 0 : i32
    return %arg1, %c0_i32, %c0_i32_0 : i32, i32, i32
  }
  func.func @transform_12(%arg0: i32, %arg1: i32, %arg2: memref<2x8xi32, #tpu.memory_space<smem>>) -> (i32, i32, i32) {
    %c0_i32 = arith.constant 0 : i32
    %c0_i32_0 = arith.constant 0 : i32
    %c0_i32_1 = arith.constant 0 : i32
    return %arg1, %c0_i32, %c0_i32_0 : i32, i32, i32
  }
  func.func @transform_13(%arg0: i32, %arg1: i32, %arg2: memref<2x8xi32, #tpu.memory_space<smem>>) -> (i32, i32, i32) {
    %c0_i32 = arith.constant 0 : i32
    %c0_i32_0 = arith.constant 0 : i32
    %c0_i32_1 = arith.constant 0 : i32
    return %arg1, %c0_i32, %c0_i32_0 : i32, i32, i32
  }
  func.func @transform_14(%arg0: i32, %arg1: i32, %arg2: memref<2x8xi32, #tpu.memory_space<smem>>) -> (i32, i32, i32) {
    %c0_i32 = arith.constant 0 : i32
    %c0_i32_0 = arith.constant 0 : i32
    %c0_i32_1 = arith.constant 0 : i32
    return %arg1, %c0_i32, %c0_i32_0 : i32, i32, i32
  }
  func.func @transform_15(%arg0: i32, %arg1: i32, %arg2: memref<2x8xi32, #tpu.memory_space<smem>>) -> (i32, i32, i32) {
    %c0_i32 = arith.constant 0 : i32
    %c0_i32_0 = arith.constant 0 : i32
    %c0_i32_1 = arith.constant 0 : i32
    return %arg1, %c0_i32, %c0_i32_0 : i32, i32, i32
  }
  func.func @transform_16(%arg0: i32, %arg1: i32, %arg2: memref<2x8xi32, #tpu.memory_space<smem>>) -> (i32, i32, i32) {
    %c0_i32 = arith.constant 0 : i32
    %c0_i32_0 = arith.constant 0 : i32
    %c0_i32_1 = arith.constant 0 : i32
    return %arg1, %c0_i32, %c0_i32_0 : i32, i32, i32
  }
  func.func @transform_17(%arg0: i32, %arg1: i32, %arg2: memref<2x8xi32, #tpu.memory_space<smem>>) -> (i32, i32) {
    %c0_i32 = arith.constant 0 : i32
    %c0_i32_0 = arith.constant 0 : i32
    %c0_i32_1 = arith.constant 0 : i32
    return %c0_i32, %c0_i32_0 : i32, i32
  }
  func.func @transform_18(%arg0: i32, %arg1: i32, %arg2: memref<2x8xi32, #tpu.memory_space<smem>>) -> (i32, i32) {
    %c0_i32 = arith.constant 0 : i32
    %c0_i32_0 = arith.constant 0 : i32
    %c0_i32_1 = arith.constant 0 : i32
    return %c0_i32, %c0_i32_0 : i32, i32
  }
  func.func @transform_19(%arg0: i32, %arg1: i32, %arg2: memref<2x8xi32, #tpu.memory_space<smem>>) -> (i32, i32) {
    %c0_i32 = arith.constant 0 : i32
    %c0_i32_0 = arith.constant 0 : i32
    %c0_i32_1 = arith.constant 0 : i32
    return %c0_i32, %c0_i32_0 : i32, i32
  }
  func.func @transform_20(%arg0: i32, %arg1: i32, %arg2: memref<2x8xi32, #tpu.memory_space<smem>>) -> (i32, i32) {
    %c0_i32 = arith.constant 0 : i32
    %c0_i32_0 = arith.constant 0 : i32
    %c0_i32_1 = arith.constant 0 : i32
    return %c0_i32, %c0_i32_0 : i32, i32
  }
  func.func @transform_21(%arg0: i32, %arg1: i32, %arg2: memref<2x8xi32, #tpu.memory_space<smem>>) -> (i32, i32, i32) {
    %c0_i32 = arith.constant 0 : i32
    %c0_i32_0 = arith.constant 0 : i32
    %c0_i32_1 = arith.constant 0 : i32
    return %arg0, %c0_i32, %c0_i32_0 : i32, i32, i32
  }
}

</mosaic_0001>

<llo_original>
// kernel: text_encoder_forward.1
$region0: #{text_encoder_forward.1}
  #allocation0 [shape = 'u32[]', space=smem, size = 0x4, offset = 0x4, fixed_abs, tag = 'smem constant byte address 0x4 - core index']
  #allocation1 [shape = 'u32[144,128]{1,0:T(1,128)}', space=vmem, size = 0x12000, scoped, tag = 'internal scratch']
  #allocation2 [shape = 'f32[8,32]{1,0:T(8,128)}', space=vmem, size = 0x1000, scoped, tag = 'scratch operand']
  #allocation3 [shape = 's32[8]{0}', space=sflag, size = 0x20, scoped, tag = 'scratch operand']
  #allocation4 [shape = 's32[1]{0}', space=sflag, size = 0x4, scoped, tag = 'scoped memory for text_encoder_forward.1']
  #allocation5 [shape = 'u8[1024]{0}', space=smem, size = 0x400, scoped, tag = 'prefetched SMEM operand 0']
  #allocation8 [shape = 's32[]', space=sflag, size = 0x4, offset = 0, fixed_abs, tag = 'sflag constant byte address 0x0 - dummy sync flag']
  #allocation9 [shape = 's32[]', space=sflag, size = 0x4, offset = 0, fixed_abs, tag = 'sflag constant byte address 0x0 - dummy sync flag']
  #allocation10 [shape = 's32[]', space=sflag, size = 0x4, offset = 0, fixed_abs, tag = 'sflag constant byte address 0x0 - dummy sync flag']
  #allocation11 [shape = 's32[]', space=sflag, size = 0x4, offset = 0, fixed_abs, tag = 'sflag constant byte address 0x0 - dummy sync flag']
  #allocation12 [shape = 's32[]', space=sflag, size = 0x4, offset = 0, fixed_abs, tag = 'sflag constant byte address 0x0 - dummy sync flag']
  #allocation13 [shape = 's32[]', space=sflag, size = 0x4, offset = 0, fixed_abs, tag = 'sflag constant byte address 0x0 - dummy sync flag']
  #allocation14 [shape = 's32[]', space=sflag, size = 0x4, offset = 0, fixed_abs, tag = 'sflag constant byte address 0x0 - dummy sync flag']
  #allocation15 [shape = 's32[]', space=sflag, size = 0x4, offset = 0, fixed_abs, tag = 'sflag constant byte address 0x0 - dummy sync flag']
  %s0 = inlined_call_operand.vmem [shape: s32[2,8], index: 0, kind: input, shape index: {}]
  %s1 = inlined_call_operand.vmem [shape: f32[2,1,8], index: 1, kind: input, shape index: {}]
  %s2 = inlined_call_operand.vmem [shape: f32[32,32], index: 2, kind: input, shape index: {}]
  %s3 = inlined_call_operand.vmem [shape: f32[8,32], index: 3, kind: input, shape index: {}]
  %s4 = inlined_call_operand.vmem [shape: f32[1,32], index: 4, kind: input, shape index: {}]
  %s5 = inlined_call_operand.vmem [shape: f32[1,32], index: 5, kind: input, shape index: {}]
  %s6 = inlined_call_operand.vmem [shape: bf16[2,3,32,32], index: 6, kind: input, shape index: {}]
  %s7 = inlined_call_operand.vmem [shape: f32[2,3,1,32], index: 7, kind: input, shape index: {}]
  %s8 = inlined_call_operand.vmem [shape: bf16[2,4,8,32], index: 8, kind: input, shape index: {}]
  %s9 = inlined_call_operand.vmem [shape: f32[2,1,32], index: 9, kind: input, shape index: {}]
  %s10 = inlined_call_operand.vmem [shape: f32[2,1,32], index: 10, kind: input, shape index: {}]
  %s11 = inlined_call_operand.vmem [shape: f32[2,1,32], index: 11, kind: input, shape index: {}]
  %s12 = inlined_call_operand.vmem [shape: bf16[2,32,128], index: 12, kind: input, shape index: {}]
  %s13 = inlined_call_operand.vmem [shape: f32[2,1,128], index: 13, kind: input, shape index: {}]
  %s14 = inlined_call_operand.vmem [shape: bf16[2,128,32], index: 14, kind: input, shape index: {}]
  %s15 = inlined_call_operand.vmem [shape: f32[2,1,32], index: 15, kind: input, shape index: {}]
  %s16 = inlined_call_operand.vmem [shape: f32[2,1,32], index: 16, kind: input, shape index: {}]
  %s17 = inlined_call_operand.vmem [shape: f32[2,1,32], index: 17, kind: input, shape index: {}]
  %s18 = inlined_call_operand.vmem [shape: bf16[32,32], index: 18, kind: input, shape index: {}]
  %s19 = inlined_call_operand.vmem [shape: f32[1,32], index: 19, kind: input, shape index: {}]
  %s20 = inlined_call_operand.vmem [shape: bf16[32,128], index: 20, kind: input, shape index: {}]
  %s21 = inlined_call_operand.vmem [shape: f32[1,128], index: 21, kind: input, shape index: {}]
  %s22 = inlined_call_operand.hbm [shape: f32[2,1,128], index: 22, kind: output, shape index: {}]
  %s23 = sld [smem:[#allocation0]]
  $region361: #{text_encoder_forward.1} parent=0
    _
  %s25 = ssub.s32 1, %s23
  %s26 = scalar_select 0, %s25, %s23
  %s27 = sshll.u32 %s0, 4
  %s28 = int_to_ptr.vmem [resolvable:$true] %s27
  %30 = dma.vmem_to_smem %s28, 32, [#allocation5], [#allocation4]
  %31 = dma.done [#allocation4], 32
  %32 = sfence
  $region1: #{text_encoder_forward.1} parent=0
    #allocation6 [shape = 'u8[1024]{0}', space=vmem, size = 0x400, scoped, tag = 'output window, operand 0']
    #allocation7 [shape = 's32[2]{0}', space=sflag, size = 0x8, scoped, tag = 'scoped memory for text_encoder_forward.1']
    %33 = vsyncpa [#allocation7], 0
    %s34 = scalar_lea.sflag [#allocation7], 1
    %35 = vsyncpa %s34, 0
    loop: start=0, step=1, limit=6
    $region2: #{text_encoder_forward.1} parent=1 // loop_pre_header
      _
    $region3: #{text_encoder_forward.1} parent=1 // loop_header
      %s37 = sphi 0, %s41
      %p38 = scmp.ge.s32.totalorder %s37, 6
      %s44 = sphi 0, %s56
      %s45 = sphi 0, %s52
      %s46 = sphi 0, %s44
      %s47 = sphi 0, %s45
      %s48 = sphi 0, %s46
      %s49 = sphi 0, %s47
      %s59 = sphi 0, %s61
      %s62 = sphi 0, %s59
      %s63 = sphi 0, %s62
      %s79 = sphi 0, %s63
      %s83 = sphi 0, %s83
      %s85 = sphi 0, %s83
      %s86 = sphi 0, %s85
      %s100 = sphi 0, %s86
      %s104 = sphi 0, %s104
      %s106 = sphi 0, %s104
      %s107 = sphi 0, %s106
      %s121 = sphi 0, %s107
      %s125 = sphi 0, %s125
      %s127 = sphi 0, %s125
      %s128 = sphi 0, %s127
      %s142 = sphi 0, %s128
      %s148 = sphi 0, %s150
      %s151 = sphi 0, %s148
      %s152 = sphi 0, %s151
      %s168 = sphi 0, %s152
      %s174 = sphi 0, %s176
      %s177 = sphi 0, %s174
      %s178 = sphi 0, %s177
      %s194 = sphi 0, %s178
      %s200 = sphi 0, %s202
      %s203 = sphi 0, %s200
      %s204 = sphi 0, %s203
      %s220 = sphi 0, %s204
      %s226 = sphi 0, %s228
      %s229 = sphi 0, %s226
      %s230 = sphi 0, %s229
      %s246 = sphi 0, %s230
      %s252 = sphi 0, %s254
      %s255 = sphi 0, %s252
      %s256 = sphi 0, %s255
      %s272 = sphi 0, %s256
      %s278 = sphi 0, %s280
      %s281 = sphi 0, %s278
      %s282 = sphi 0, %s281
      %s298 = sphi 0, %s282
      %s304 = sphi 0, %s306
      %s307 = sphi 0, %s304
      %s308 = sphi 0, %s307
      %s324 = sphi 0, %s308
      %s330 = sphi 0, %s332
      %s333 = sphi 0, %s330
      %s334 = sphi 0, %s333
      %s350 = sphi 0, %s334
      %s356 = sphi 0, %s358
      %s359 = sphi 0, %s356
      %s360 = sphi 0, %s359
      %s376 = sphi 0, %s360
      %s382 = sphi 0, %s384
      %s385 = sphi 0, %s382
      %s386 = sphi 0, %s385
      %s402 = sphi 0, %s386
      %s408 = sphi 0, %s410
      %s411 = sphi 0, %s408
      %s412 = sphi 0, %s411
      %s428 = sphi 0, %s412
      %s434 = sphi 0, %s436
      %s437 = sphi 0, %s434
      %s438 = sphi 0, %s437
      %s454 = sphi 0, %s438
      %s458 = sphi 0, %s458
      %s460 = sphi 0, %s458
      %s461 = sphi 0, %s460
      %s475 = sphi 0, %s461
      %s479 = sphi 0, %s479
      %s481 = sphi 0, %s479
      %s482 = sphi 0, %s481
      %s496 = sphi 0, %s482
      %s500 = sphi 0, %s500
      %s502 = sphi 0, %s500
      %s503 = sphi 0, %s502
      %s517 = sphi 0, %s503
      %s521 = sphi 0, %s521
      %s523 = sphi 0, %s521
      %s524 = sphi 0, %s523
      %s538 = sphi 0, %s524
      %s544 = sphi 0, %s546
      %s547 = sphi 0, %s544
      %s548 = sphi 0, %s547
      %s564 = sphi 0, %s548
    $region4: #{text_encoder_forward.1} parent=1 // loop_header_branch
      %40 = sbr.rel (%p38) target = $region8
    $region5: #{text_encoder_forward.1} parent=1 // loop_body
      %s42 = ssub.s32 %s37, 1
      %s43 = ssub.s32 %s37, 2
      %s50 = sadd.s32 1, %s45
      %p51 = scmp.ge.s32.totalorder %s50, 2
      %s52 = scalar_select %p51, 0, %s50
      %s53 = sadd.s32 1, %s44
      %s54 = scalar_select %p51, %s53, %s44
      %p55 = scmp.ge.s32.totalorder %s54, 2
      %s56 = scalar_select %p55, 0, %s54
      %s57 = ssub.s32 %s44, %s56
      %p58 = scmp.eq.s32.totalorder %s57, 0
      %s60 = sadd.s32 %s59, 1
      %s61 = scalar_select %p58, %s59, %s60
      %p64 = pneg %p58
      %p65 = scmp.eq.s32.totalorder %s37, 3
      %p66 = por %p64, %p65
      %p67 = scmp.ne.s32.totalorder %s59, %s62
      %p68 = scmp.eq.s32.totalorder %s37, 0
      %p69 = por %p67, %p68
      %p70 = scmp.ne.s32.totalorder %s59, %s62
      %p71 = scmp.eq.s32.totalorder %s42, 3
      %p72 = por %p70, %p71
      %p73 = scmp.ne.s32.totalorder %s62, %s63
      %p74 = scmp.eq.s32.totalorder %s42, 0
      %p75 = por %p73, %p74
      %p76 = scmp.ne.s32.totalorder %s62, %s63
      %p77 = scmp.eq.s32.totalorder %s43, 3
      %p78 = por %p76, %p77
      %p80 = scmp.ne.s32.totalorder %s63, %s79
      %p81 = scmp.eq.s32.totalorder %s43, 0
      %p82 = por %p80, %p81
      %s84 = sadd.s32 %s83, 1
      %p87 = scmp.eq.s32.totalorder %s37, 3
      %p88 = scmp.ne.s32.totalorder %s83, %s85
      %p89 = scmp.eq.s32.totalorder %s37, 0
      %p90 = por %p88, %p89
      %p91 = scmp.ne.s32.totalorder %s83, %s85
      %p92 = scmp.eq.s32.totalorder %s42, 3
      %p93 = por %p91, %p92
      %p94 = scmp.ne.s32.totalorder %s85, %s86
      %p95 = scmp.eq.s32.totalorder %s42, 0
      %p96 = por %p94, %p95
      %p97 = scmp.ne.s32.totalorder %s85, %s86
      %p98 = scmp.eq.s32.totalorder %s43, 3
      %p99 = por %p97, %p98
      %p101 = scmp.ne.s32.totalorder %s86, %s100
      %p102 = scmp.eq.s32.totalorder %s43, 0
      %p103 = por %p101, %p102
      %s105 = sadd.s32 %s104, 1
      %p108 = scmp.eq.s32.totalorder %s37, 3
      %p109 = scmp.ne.s32.totalorder %s104, %s106
      %p110 = scmp.eq.s32.totalorder %s37, 0
      %p111 = por %p109, %p110
      %p112 = scmp.ne.s32.totalorder %s104, %s106
      %p113 = scmp.eq.s32.totalorder %s42, 3
      %p114 = por %p112, %p113
      %p115 = scmp.ne.s32.totalorder %s106, %s107
      %p116 = scmp.eq.s32.totalorder %s42, 0
      %p117 = por %p115, %p116
      %p118 = scmp.ne.s32.totalorder %s106, %s107
      %p119 = scmp.eq.s32.totalorder %s43, 3
      %p120 = por %p118, %p119
      %p122 = scmp.ne.s32.totalorder %s107, %s121
      %p123 = scmp.eq.s32.totalorder %s43, 0
      %p124 = por %p122, %p123
      %s126 = sadd.s32 %s125, 1
      %p129 = scmp.eq.s32.totalorder %s37, 3
      %p130 = scmp.ne.s32.totalorder %s125, %s127
      %p131 = scmp.eq.s32.totalorder %s37, 0
      %p132 = por %p130, %p131
      %p133 = scmp.ne.s32.totalorder %s125, %s127
      %p134 = scmp.eq.s32.totalorder %s42, 3
      %p135 = por %p133, %p134
      %p136 = scmp.ne.s32.totalorder %s127, %s128
      %p137 = scmp.eq.s32.totalorder %s42, 0
      %p138 = por %p136, %p137
      %p139 = scmp.ne.s32.totalorder %s127, %s128
      %p140 = scmp.eq.s32.totalorder %s43, 3
      %p141 = por %p139, %p140
      %p143 = scmp.ne.s32.totalorder %s128, %s142
      %p144 = scmp.eq.s32.totalorder %s43, 0
      %p145 = por %p143, %p144
      %s146 = ssub.s32 %s45, %s52
      %p147 = scmp.eq.s32.totalorder %s146, 0
      %s149 = sadd.s32 %s148, 1
      %s150 = scalar_select %p147, %s148, %s149
      %p153 = pneg %p147
      %p154 = scmp.eq.s32.totalorder %s37, 3
      %p155 = por %p153, %p154
      %p156 = scmp.ne.s32.totalorder %s148, %s151
      %p157 = scmp.eq.s32.totalorder %s37, 0
      %p158 = por %p156, %p157
      %p159 = scmp.ne.s32.totalorder %s148, %s151
      %p160 = scmp.eq.s32.totalorder %s42, 3
      %p161 = por %p159, %p160
      %p162 = scmp.ne.s32.totalorder %s151, %s152
      %p163 = scmp.eq.s32.totalorder %s42, 0
      %p164 = por %p162, %p163
      %p165 = scmp.ne.s32.totalorder %s151, %s152
      %p166 = scmp.eq.s32.totalorder %s43, 3
      %p167 = por %p165, %p166
      %p169 = scmp.ne.s32.totalorder %s152, %s168
      %p170 = scmp.eq.s32.totalorder %s43, 0
      %p171 = por %p169, %p170
      %s172 = ssub.s32 %s45, %s52
      %p173 = scmp.eq.s32.totalorder %s172, 0
      %s175 = sadd.s32 %s174, 1
      %s176 = scalar_select %p173, %s174, %s175
      %p179 = pneg %p173
      %p180 = scmp.eq.s32.totalorder %s37, 3
      %p181 = por %p179, %p180
      %p182 = scmp.ne.s32.totalorder %s174, %s177
      %p183 = scmp.eq.s32.totalorder %s37, 0
      %p184 = por %p182, %p183
      %p185 = scmp.ne.s32.totalorder %s174, %s177
      %p186 = scmp.eq.s32.totalorder %s42, 3
      %p187 = por %p185, %p186
      %p188 = scmp.ne.s32.totalorder %s177, %s178
      %p189 = scmp.eq.s32.totalorder %s42, 0
      %p190 = por %p188, %p189
      %p191 = scmp.ne.s32.totalorder %s177, %s178
      %p192 = scmp.eq.s32.totalorder %s43, 3
      %p193 = por %p191, %p192
      %p195 = scmp.ne.s32.totalorder %s178, %s194
      %p196 = scmp.eq.s32.totalorder %s43, 0
      %p197 = por %p195, %p196
      %s198 = ssub.s32 %s45, %s52
      %p199 = scmp.eq.s32.totalorder %s198, 0
      %s201 = sadd.s32 %s200, 1
      %s202 = scalar_select %p199, %s200, %s201
      %p205 = pneg %p199
      %p206 = scmp.eq.s32.totalorder %s37, 3
      %p207 = por %p205, %p206
      %p208 = scmp.ne.s32.totalorder %s200, %s203
      %p209 = scmp.eq.s32.totalorder %s37, 0
      %p210 = por %p208, %p209
      %p211 = scmp.ne.s32.totalorder %s200, %s203
      %p212 = scmp.eq.s32.totalorder %s42, 3
      %p213 = por %p211, %p212
      %p214 = scmp.ne.s32.totalorder %s203, %s204
      %p215 = scmp.eq.s32.totalorder %s42, 0
      %p216 = por %p214, %p215
      %p217 = scmp.ne.s32.totalorder %s203, %s204
      %p218 = scmp.eq.s32.totalorder %s43, 3
      %p219 = por %p217, %p218
      %p221 = scmp.ne.s32.totalorder %s204, %s220
      %p222 = scmp.eq.s32.totalorder %s43, 0
      %p223 = por %p221, %p222
      %s224 = ssub.s32 %s45, %s52
      %p225 = scmp.eq.s32.totalorder %s224, 0
      %s227 = sadd.s32 %s226, 1
      %s228 = scalar_select %p225, %s226, %s227
      %p231 = pneg %p225
      %p232 = scmp.eq.s32.totalorder %s37, 3
      %p233 = por %p231, %p232
      %p234 = scmp.ne.s32.totalorder %s226, %s229
      %p235 = scmp.eq.s32.totalorder %s37, 0
      %p236 = por %p234, %p235
      %p237 = scmp.ne.s32.totalorder %s226, %s229
      %p238 = scmp.eq.s32.totalorder %s42, 3
      %p239 = por %p237, %p238
      %p240 = scmp.ne.s32.totalorder %s229, %s230
      %p241 = scmp.eq.s32.totalorder %s42, 0
      %p242 = por %p240, %p241
      %p243 = scmp.ne.s32.totalorder %s229, %s230
      %p244 = scmp.eq.s32.totalorder %s43, 3
      %p245 = por %p243, %p244
      %p247 = scmp.ne.s32.totalorder %s230, %s246
      %p248 = scmp.eq.s32.totalorder %s43, 0
      %p249 = por %p247, %p248
      %s250 = ssub.s32 %s45, %s52
      %p251 = scmp.eq.s32.totalorder %s250, 0
      %s253 = sadd.s32 %s252, 1
      %s254 = scalar_select %p251, %s252, %s253
      %p257 = pneg %p251
      %p258 = scmp.eq.s32.totalorder %s37, 3
      %p259 = por %p257, %p258
      %p260 = scmp.ne.s32.totalorder %s252, %s255
      %p261 = scmp.eq.s32.totalorder %s37, 0
      %p262 = por %p260, %p261
      %p263 = scmp.ne.s32.totalorder %s252, %s255
      %p264 = scmp.eq.s32.totalorder %s42, 3
      %p265 = por %p263, %p264
      %p266 = scmp.ne.s32.totalorder %s255, %s256
      %p267 = scmp.eq.s32.totalorder %s42, 0
      %p268 = por %p266, %p267
      %p269 = scmp.ne.s32.totalorder %s255, %s256
      %p270 = scmp.eq.s32.totalorder %s43, 3
      %p271 = por %p269, %p270
      %p273 = scmp.ne.s32.totalorder %s256, %s272
      %p274 = scmp.eq.s32.totalorder %s43, 0
      %p275 = por %p273, %p274
      %s276 = ssub.s32 %s45, %s52
      %p277 = scmp.eq.s32.totalorder %s276, 0
      %s279 = sadd.s32 %s278, 1
      %s280 = scalar_select %p277, %s278, %s279
      %p283 = pneg %p277
      %p284 = scmp.eq.s32.totalorder %s37, 3
      %p285 = por %p283, %p284
      %p286 = scmp.ne.s32.totalorder %s278, %s281
      %p287 = scmp.eq.s32.totalorder %s37, 0
      %p288 = por %p286, %p287
      %p289 = scmp.ne.s32.totalorder %s278, %s281
      %p290 = scmp.eq.s32.totalorder %s42, 3
      %p291 = por %p289, %p290
      %p292 = scmp.ne.s32.totalorder %s281, %s282
      %p293 = scmp.eq.s32.totalorder %s42, 0
      %p294 = por %p292, %p293
      %p295 = scmp.ne.s32.totalorder %s281, %s282
      %p296 = scmp.eq.s32.totalorder %s43, 3
      %p297 = por %p295, %p296
      %p299 = scmp.ne.s32.totalorder %s282, %s298
      %p300 = scmp.eq.s32.totalorder %s43, 0
      %p301 = por %p299, %p300
      %s302 = ssub.s32 %s45, %s52
      %p303 = scmp.eq.s32.totalorder %s302, 0
      %s305 = sadd.s32 %s304, 1
      %s306 = scalar_select %p303, %s304, %s305
      %p309 = pneg %p303
      %p310 = scmp.eq.s32.totalorder %s37, 3
      %p311 = por %p309, %p310
      %p312 = scmp.ne.s32.totalorder %s304, %s307
      %p313 = scmp.eq.s32.totalorder %s37, 0
      %p314 = por %p312, %p313
      %p315 = scmp.ne.s32.totalorder %s304, %s307
      %p316 = scmp.eq.s32.totalorder %s42, 3
      %p317 = por %p315, %p316
      %p318 = scmp.ne.s32.totalorder %s307, %s308
      %p319 = scmp.eq.s32.totalorder %s42, 0
      %p320 = por %p318, %p319
      %p321 = scmp.ne.s32.totalorder %s307, %s308
      %p322 = scmp.eq.s32.totalorder %s43, 3
      %p323 = por %p321, %p322
      %p325 = scmp.ne.s32.totalorder %s308, %s324
      %p326 = scmp.eq.s32.totalorder %s43, 0
      %p327 = por %p325, %p326
      %s328 = ssub.s32 %s45, %s52
      %p329 = scmp.eq.s32.totalorder %s328, 0
      %s331 = sadd.s32 %s330, 1
      %s332 = scalar_select %p329, %s330, %s331
      %p335 = pneg %p329
      %p336 = scmp.eq.s32.totalorder %s37, 3
      %p337 = por %p335, %p336
      %p338 = scmp.ne.s32.totalorder %s330, %s333
      %p339 = scmp.eq.s32.totalorder %s37, 0
      %p340 = por %p338, %p339
      %p341 = scmp.ne.s32.totalorder %s330, %s333
      %p342 = scmp.eq.s32.totalorder %s42, 3
      %p343 = por %p341, %p342
      %p344 = scmp.ne.s32.totalorder %s333, %s334
      %p345 = scmp.eq.s32.totalorder %s42, 0
      %p346 = por %p344, %p345
      %p347 = scmp.ne.s32.totalorder %s333, %s334
      %p348 = scmp.eq.s32.totalorder %s43, 3
      %p349 = por %p347, %p348
      %p351 = scmp.ne.s32.totalorder %s334, %s350
      %p352 = scmp.eq.s32.totalorder %s43, 0
      %p353 = por %p351, %p352
      %s354 = ssub.s32 %s45, %s52
      %p355 = scmp.eq.s32.totalorder %s354, 0
      %s357 = sadd.s32 %s356, 1
      %s358 = scalar_select %p355, %s356, %s357
      %p361 = pneg %p355
      %p362 = scmp.eq.s32.totalorder %s37, 3
      %p363 = por %p361, %p362
      %p364 = scmp.ne.s32.totalorder %s356, %s359
      %p365 = scmp.eq.s32.totalorder %s37, 0
      %p366 = por %p364, %p365
      %p367 = scmp.ne.s32.totalorder %s356, %s359
      %p368 = scmp.eq.s32.totalorder %s42, 3
      %p369 = por %p367, %p368
      %p370 = scmp.ne.s32.totalorder %s359, %s360
      %p371 = scmp.eq.s32.totalorder %s42, 0
      %p372 = por %p370, %p371
      %p373 = scmp.ne.s32.totalorder %s359, %s360
      %p374 = scmp.eq.s32.totalorder %s43, 3
      %p375 = por %p373, %p374
      %p377 = scmp.ne.s32.totalorder %s360, %s376
      %p378 = scmp.eq.s32.totalorder %s43, 0
      %p379 = por %p377, %p378
      %s380 = ssub.s32 %s45, %s52
      %p381 = scmp.eq.s32.totalorder %s380, 0
      %s383 = sadd.s32 %s382, 1
      %s384 = scalar_select %p381, %s382, %s383
      %p387 = pneg %p381
      %p388 = scmp.eq.s32.totalorder %s37, 3
      %p389 = por %p387, %p388
      %p390 = scmp.ne.s32.totalorder %s382, %s385
      %p391 = scmp.eq.s32.totalorder %s37, 0
      %p392 = por %p390, %p391
      %p393 = scmp.ne.s32.totalorder %s382, %s385
      %p394 = scmp.eq.s32.totalorder %s42, 3
      %p395 = por %p393, %p394
      %p396 = scmp.ne.s32.totalorder %s385, %s386
      %p397 = scmp.eq.s32.totalorder %s42, 0
      %p398 = por %p396, %p397
      %p399 = scmp.ne.s32.totalorder %s385, %s386
      %p400 = scmp.eq.s32.totalorder %s43, 3
      %p401 = por %p399, %p400
      %p403 = scmp.ne.s32.totalorder %s386, %s402
      %p404 = scmp.eq.s32.totalorder %s43, 0
      %p405 = por %p403, %p404
      %s406 = ssub.s32 %s45, %s52
      %p407 = scmp.eq.s32.totalorder %s406, 0
      %s409 = sadd.s32 %s408, 1
      %s410 = scalar_select %p407, %s408, %s409
      %p413 = pneg %p407
      %p414 = scmp.eq.s32.totalorder %s37, 3
      %p415 = por %p413, %p414
      %p416 = scmp.ne.s32.totalorder %s408, %s411
      %p417 = scmp.eq.s32.totalorder %s37, 0
      %p418 = por %p416, %p417
      %p419 = scmp.ne.s32.totalorder %s408, %s411
      %p420 = scmp.eq.s32.totalorder %s42, 3
      %p421 = por %p419, %p420
      %p422 = scmp.ne.s32.totalorder %s411, %s412
      %p423 = scmp.eq.s32.totalorder %s42, 0
      %p424 = por %p422, %p423
      %p425 = scmp.ne.s32.totalorder %s411, %s412
      %p426 = scmp.eq.s32.totalorder %s43, 3
      %p427 = por %p425, %p426
      %p429 = scmp.ne.s32.totalorder %s412, %s428
      %p430 = scmp.eq.s32.totalorder %s43, 0
      %p431 = por %p429, %p430
      %s432 = ssub.s32 %s45, %s52
      %p433 = scmp.eq.s32.totalorder %s432, 0
      %s435 = sadd.s32 %s434, 1
      %s436 = scalar_select %p433, %s434, %s435
      %p439 = pneg %p433
      %p440 = scmp.eq.s32.totalorder %s37, 3
      %p441 = por %p439, %p440
      %p442 = scmp.ne.s32.totalorder %s434, %s437
      %p443 = scmp.eq.s32.totalorder %s37, 0
      %p444 = por %p442, %p443
      %p445 = scmp.ne.s32.totalorder %s434, %s437
      %p446 = scmp.eq.s32.totalorder %s42, 3
      %p447 = por %p445, %p446
      %p448 = scmp.ne.s32.totalorder %s437, %s438
      %p449 = scmp.eq.s32.totalorder %s42, 0
      %p450 = por %p448, %p449
      %p451 = scmp.ne.s32.totalorder %s437, %s438
      %p452 = scmp.eq.s32.totalorder %s43, 3
      %p453 = por %p451, %p452
      %p455 = scmp.ne.s32.totalorder %s438, %s454
      %p456 = scmp.eq.s32.totalorder %s43, 0
      %p457 = por %p455, %p456
      %s459 = sadd.s32 %s458, 1
      %p462 = scmp.eq.s32.totalorder %s37, 3
      %p463 = scmp.ne.s32.totalorder %s458, %s460
      %p464 = scmp.eq.s32.totalorder %s37, 0
      %p465 = por %p463, %p464
      %p466 = scmp.ne.s32.totalorder %s458, %s460
      %p467 = scmp.eq.s32.totalorder %s42, 3
      %p468 = por %p466, %p467
      %p469 = scmp.ne.s32.totalorder %s460, %s461
      %p470 = scmp.eq.s32.totalorder %s42, 0
      %p471 = por %p469, %p470
      %p472 = scmp.ne.s32.totalorder %s460, %s461
      %p473 = scmp.eq.s32.totalorder %s43, 3
      %p474 = por %p472, %p473
      %p476 = scmp.ne.s32.totalorder %s461, %s475
      %p477 = scmp.eq.s32.totalorder %s43, 0
      %p478 = por %p476, %p477
      %s480 = sadd.s32 %s479, 1
      %p483 = scmp.eq.s32.totalorder %s37, 3
      %p484 = scmp.ne.s32.totalorder %s479, %s481
      %p485 = scmp.eq.s32.totalorder %s37, 0
      %p486 = por %p484, %p485
      %p487 = scmp.ne.s32.totalorder %s479, %s481
      %p488 = scmp.eq.s32.totalorder %s42, 3
      %p489 = por %p487, %p488
      %p490 = scmp.ne.s32.totalorder %s481, %s482
      %p491 = scmp.eq.s32.totalorder %s42, 0
      %p492 = por %p490, %p491
      %p493 = scmp.ne.s32.totalorder %s481, %s482
      %p494 = scmp.eq.s32.totalorder %s43, 3
      %p495 = por %p493, %p494
      %p497 = scmp.ne.s32.totalorder %s482, %s496
      %p498 = scmp.eq.s32.totalorder %s43, 0
      %p499 = por %p497, %p498
      %s501 = sadd.s32 %s500, 1
      %p504 = scmp.eq.s32.totalorder %s37, 3
      %p505 = scmp.ne.s32.totalorder %s500, %s502
      %p506 = scmp.eq.s32.totalorder %s37, 0
      %p507 = por %p505, %p506
      %p508 = scmp.ne.s32.totalorder %s500, %s502
      %p509 = scmp.eq.s32.totalorder %s42, 3
      %p510 = por %p508, %p509
      %p511 = scmp.ne.s32.totalorder %s502, %s503
      %p512 = scmp.eq.s32.totalorder %s42, 0
      %p513 = por %p511, %p512
      %p514 = scmp.ne.s32.totalorder %s502, %s503
      %p515 = scmp.eq.s32.totalorder %s43, 3
      %p516 = por %p514, %p515
      %p518 = scmp.ne.s32.totalorder %s503, %s517
      %p519 = scmp.eq.s32.totalorder %s43, 0
      %p520 = por %p518, %p519
      %s522 = sadd.s32 %s521, 1
      %p525 = scmp.eq.s32.totalorder %s37, 3
      %p526 = scmp.ne.s32.totalorder %s521, %s523
      %p527 = scmp.eq.s32.totalorder %s37, 0
      %p528 = por %p526, %p527
      %p529 = scmp.ne.s32.totalorder %s521, %s523
      %p530 = scmp.eq.s32.totalorder %s42, 3
      %p531 = por %p529, %p530
      %p532 = scmp.ne.s32.totalorder %s523, %s524
      %p533 = scmp.eq.s32.totalorder %s42, 0
      %p534 = por %p532, %p533
      %p535 = scmp.ne.s32.totalorder %s523, %s524
      %p536 = scmp.eq.s32.totalorder %s43, 3
      %p537 = por %p535, %p536
      %p539 = scmp.ne.s32.totalorder %s524, %s538
      %p540 = scmp.eq.s32.totalorder %s43, 0
      %p541 = por %p539, %p540
      %s542 = ssub.s32 %s44, %s56
      %p543 = scmp.eq.s32.totalorder %s542, 0
      %s545 = sadd.s32 %s544, 1
      %s546 = scalar_select %p543, %s544, %s545
      %p549 = pneg %p543
      %p550 = scmp.eq.s32.totalorder %s37, 3
      %p551 = por %p549, %p550
      %p552 = scmp.ne.s32.totalorder %s544, %s547
      %p553 = scmp.eq.s32.totalorder %s37, 0
      %p554 = por %p552, %p553
      %p555 = scmp.ne.s32.totalorder %s544, %s547
      %p556 = scmp.eq.s32.totalorder %s42, 3
      %p557 = por %p555, %p556
      %p558 = scmp.ne.s32.totalorder %s547, %s548
      %p559 = scmp.eq.s32.totalorder %s42, 0
      %p560 = por %p558, %p559
      %p561 = scmp.ne.s32.totalorder %s547, %s548
      %p562 = scmp.eq.s32.totalorder %s43, 3
      %p563 = por %p561, %p562
      %p565 = scmp.ne.s32.totalorder %s548, %s564
      %p566 = scmp.eq.s32.totalorder %s43, 0
      %p567 = por %p565, %p566
      %p568 = scmp.le.s32.totalorder 1, %s37
      %p569 = scmp.lt.s32.totalorder %s37, 5
      %p570 = pnand %p568, %p569
      %p571 = pneg %p570
      // Predicated region
      $region9: #{text_encoder_forward.1} parent=5 // pred_check
        _
      $region10: #{text_encoder_forward.1} parent=5 // pred_check_branch
        %573 = sbr.rel (%p570) target = $region12
      $region11: #{text_encoder_forward.1} parent=5 // pred_region
        %s574 = ssub.s32 %s37, 1
        // Predicated region
        $region13: #{text_encoder_forward.1} parent=11 // pred_check
          %p575 = pneg %p96
        $region14: #{text_encoder_forward.1} parent=11 // pred_check_branch
          %577 = sbr.rel (%p575) target = $region16
        $region15: #{text_encoder_forward.1} parent=11 // pred_region
          _
        $region16: #{text_encoder_forward.1} parent=11 // pred_fallthru
          _
        // Predicated region
        $region17: #{text_encoder_forward.1} parent=11 // pred_check
          %p578 = pneg %p117
        $region18: #{text_encoder_forward.1} parent=11 // pred_check_branch
          %580 = sbr.rel (%p578) target = $region20
        $region19: #{text_encoder_forward.1} parent=11 // pred_region
          _
        $region20: #{text_encoder_forward.1} parent=11 // pred_fallthru
          _
        // Predicated region
        $region21: #{text_encoder_forward.1} parent=11 // pred_check
          %p581 = pneg %p138
        $region22: #{text_encoder_forward.1} parent=11 // pred_check_branch
          %583 = sbr.rel (%p581) target = $region24
        $region23: #{text_encoder_forward.1} parent=11 // pred_region
          _
        $region24: #{text_encoder_forward.1} parent=11 // pred_fallthru
          _
        // Predicated region
        $region25: #{text_encoder_forward.1} parent=11 // pred_check
          %p584 = pneg %p471
        $region26: #{text_encoder_forward.1} parent=11 // pred_check_branch
          %586 = sbr.rel (%p584) target = $region28
        $region27: #{text_encoder_forward.1} parent=11 // pred_region
          _
        $region28: #{text_encoder_forward.1} parent=11 // pred_fallthru
          _
        // Predicated region
        $region29: #{text_encoder_forward.1} parent=11 // pred_check
          %p587 = pneg %p492
        $region30: #{text_encoder_forward.1} parent=11 // pred_check_branch
          %589 = sbr.rel (%p587) target = $region32
        $region31: #{text_encoder_forward.1} parent=11 // pred_region
          _
        $region32: #{text_encoder_forward.1} parent=11 // pred_fallthru
          _
        // Predicated region
        $region33: #{text_encoder_forward.1} parent=11 // pred_check
          %p590 = pneg %p513
        $region34: #{text_encoder_forward.1} parent=11 // pred_check_branch
          %592 = sbr.rel (%p590) target = $region36
        $region35: #{text_encoder_forward.1} parent=11 // pred_region
          _
        $region36: #{text_encoder_forward.1} parent=11 // pred_fallthru
          _
        // Predicated region
        $region37: #{text_encoder_forward.1} parent=11 // pred_check
          %p593 = pneg %p534
        $region38: #{text_encoder_forward.1} parent=11 // pred_check_branch
          %595 = sbr.rel (%p593) target = $region40
        $region39: #{text_encoder_forward.1} parent=11 // pred_region
          _
        $region40: #{text_encoder_forward.1} parent=11 // pred_fallthru
          _
      $region12: #{text_encoder_forward.1} parent=5 // pred_fallthru
        _
      %p596 = scmp.lt.s32.totalorder %s37, 4
      // Predicated region
      $region41: #{text_encoder_forward.1} parent=5 // pred_check
        %p597 = pneg %p596
      $region42: #{text_encoder_forward.1} parent=5 // pred_check_branch
        %599 = sbr.rel (%p597) target = $region44
      $region43: #{text_encoder_forward.1} parent=5 // pred_region
        // Predicated region
        $region45: #{text_encoder_forward.1} parent=43 // pred_check
          %p600 = pneg %p69
        $region46: #{text_encoder_forward.1} parent=43 // pred_check_branch
          %602 = sbr.rel (%p600) target = $region48
        $region47: #{text_encoder_forward.1} parent=43 // pred_region
          %p603 = scmp.lt.s32.totalorder %s44, 1
          %s604 = scalar_select %p603, %s44, 1
          %s605 = scalar_lea.vmem %s1, %s604
        $region48: #{text_encoder_forward.1} parent=43 // pred_fallthru
          _
        // Predicated region
        $region49: #{text_encoder_forward.1} parent=43 // pred_check
          %p606 = pneg %p158
        $region50: #{text_encoder_forward.1} parent=43 // pred_check_branch
          %608 = sbr.rel (%p606) target = $region52
        $region51: #{text_encoder_forward.1} parent=43 // pred_region
          %p609 = scmp.lt.s32.totalorder %s45, 1
          %s610 = scalar_select %p609, %s45, 1
          %s611 = smul.addr %s610, 12
          %s612 = smul.addr %s611, 4
          %s613 = scalar_lea.vmem %s6, %s612
        $region52: #{text_encoder_forward.1} parent=43 // pred_fallthru
          _
        // Predicated region
        $region53: #{text_encoder_forward.1} parent=43 // pred_check
          %p614 = pneg %p184
        $region54: #{text_encoder_forward.1} parent=43 // pred_check_branch
          %616 = sbr.rel (%p614) target = $region56
        $region55: #{text_encoder_forward.1} parent=43 // pred_region
          %p617 = scmp.lt.s32.totalorder %s45, 1
          %s618 = scalar_select %p617, %s45, 1
          %s619 = smul.addr %s618, 3
          %s620 = scalar_lea.vmem %s7, %s619
        $region56: #{text_encoder_forward.1} parent=43 // pred_fallthru
          _
        // Predicated region
        $region57: #{text_encoder_forward.1} parent=43 // pred_check
          %p621 = pneg %p210
        $region58: #{text_encoder_forward.1} parent=43 // pred_check_branch
          %623 = sbr.rel (%p621) target = $region60
        $region59: #{text_encoder_forward.1} parent=43 // pred_region
          %p624 = scmp.lt.s32.totalorder %s45, 1
          %s625 = scalar_select %p624, %s45, 1
          %s626 = smul.addr %s625, 4
          %s627 = smul.addr %s626, 4
          %s628 = scalar_lea.vmem %s8, %s627
        $region60: #{text_encoder_forward.1} parent=43 // pred_fallthru
          _
        // Predicated region
        $region61: #{text_encoder_forward.1} parent=43 // pred_check
          %p629 = pneg %p236
        $region62: #{text_encoder_forward.1} parent=43 // pred_check_branch
          %631 = sbr.rel (%p629) target = $region64
        $region63: #{text_encoder_forward.1} parent=43 // pred_region
          %p632 = scmp.lt.s32.totalorder %s45, 1
          %s633 = scalar_select %p632, %s45, 1
          %s634 = scalar_lea.vmem %s9, %s633
        $region64: #{text_encoder_forward.1} parent=43 // pred_fallthru
          _
        // Predicated region
        $region65: #{text_encoder_forward.1} parent=43 // pred_check
          %p635 = pneg %p262
        $region66: #{text_encoder_forward.1} parent=43 // pred_check_branch
          %637 = sbr.rel (%p635) target = $region68
        $region67: #{text_encoder_forward.1} parent=43 // pred_region
          %p638 = scmp.lt.s32.totalorder %s45, 1
          %s639 = scalar_select %p638, %s45, 1
          %s640 = scalar_lea.vmem %s10, %s639
        $region68: #{text_encoder_forward.1} parent=43 // pred_fallthru
          _
        // Predicated region
        $region69: #{text_encoder_forward.1} parent=43 // pred_check
          %p641 = pneg %p288
        $region70: #{text_encoder_forward.1} parent=43 // pred_check_branch
          %643 = sbr.rel (%p641) target = $region72
        $region71: #{text_encoder_forward.1} parent=43 // pred_region
          %p644 = scmp.lt.s32.totalorder %s45, 1
          %s645 = scalar_select %p644, %s45, 1
          %s646 = scalar_lea.vmem %s11, %s645
        $region72: #{text_encoder_forward.1} parent=43 // pred_fallthru
          _
        // Predicated region
        $region73: #{text_encoder_forward.1} parent=43 // pred_check
          %p647 = pneg %p314
        $region74: #{text_encoder_forward.1} parent=43 // pred_check_branch
          %649 = sbr.rel (%p647) target = $region76
        $region75: #{text_encoder_forward.1} parent=43 // pred_region
          %p650 = scmp.lt.s32.totalorder %s45, 1
          %s651 = scalar_select %p650, %s45, 1
          %s652 = smul.addr %s651, 4
          %s653 = smul.addr %s652, 4
          %s654 = scalar_lea.vmem %s12, %s653
        $region76: #{text_encoder_forward.1} parent=43 // pred_fallthru
          _
        // Predicated region
        $region77: #{text_encoder_forward.1} parent=43 // pred_check
          %p655 = pneg %p340
        $region78: #{text_encoder_forward.1} parent=43 // pred_check_branch
          %657 = sbr.rel (%p655) target = $region80
        $region79: #{text_encoder_forward.1} parent=43 // pred_region
          %p658 = scmp.lt.s32.totalorder %s45, 1
          %s659 = scalar_select %p658, %s45, 1
          %s660 = scalar_lea.vmem %s13, %s659
        $region80: #{text_encoder_forward.1} parent=43 // pred_fallthru
          _
        // Predicated region
        $region81: #{text_encoder_forward.1} parent=43 // pred_check
          %p661 = pneg %p366
        $region82: #{text_encoder_forward.1} parent=43 // pred_check_branch
          %663 = sbr.rel (%p661) target = $region84
        $region83: #{text_encoder_forward.1} parent=43 // pred_region
          %p664 = scmp.lt.s32.totalorder %s45, 1
          %s665 = scalar_select %p664, %s45, 1
          %s666 = smul.addr %s665, 16
          %s667 = smul.addr %s666, 4
          %s668 = scalar_lea.vmem %s14, %s667
        $region84: #{text_encoder_forward.1} parent=43 // pred_fallthru
          _
        // Predicated region
        $region85: #{text_encoder_forward.1} parent=43 // pred_check
          %p669 = pneg %p392
        $region86: #{text_encoder_forward.1} parent=43 // pred_check_branch
          %671 = sbr.rel (%p669) target = $region88
        $region87: #{text_encoder_forward.1} parent=43 // pred_region
          %p672 = scmp.lt.s32.totalorder %s45, 1
          %s673 = scalar_select %p672, %s45, 1
          %s674 = scalar_lea.vmem %s15, %s673
        $region88: #{text_encoder_forward.1} parent=43 // pred_fallthru
          _
        // Predicated region
        $region89: #{text_encoder_forward.1} parent=43 // pred_check
          %p675 = pneg %p418
        $region90: #{text_encoder_forward.1} parent=43 // pred_check_branch
          %677 = sbr.rel (%p675) target = $region92
        $region91: #{text_encoder_forward.1} parent=43 // pred_region
          %p678 = scmp.lt.s32.totalorder %s45, 1
          %s679 = scalar_select %p678, %s45, 1
          %s680 = scalar_lea.vmem %s16, %s679
        $region92: #{text_encoder_forward.1} parent=43 // pred_fallthru
          _
        // Predicated region
        $region93: #{text_encoder_forward.1} parent=43 // pred_check
          %p681 = pneg %p444
        $region94: #{text_encoder_forward.1} parent=43 // pred_check_branch
          %683 = sbr.rel (%p681) target = $region96
        $region95: #{text_encoder_forward.1} parent=43 // pred_region
          %p684 = scmp.lt.s32.totalorder %s45, 1
          %s685 = scalar_select %p684, %s45, 1
          %s686 = scalar_lea.vmem %s17, %s685
        $region96: #{text_encoder_forward.1} parent=43 // pred_fallthru
          _
      $region44: #{text_encoder_forward.1} parent=5 // pred_fallthru
        _
      %p687 = scmp.le.s32.totalorder 1, %s37
      %p688 = scmp.lt.s32.totalorder %s37, 5
      %p689 = pnand %p687, %p688
      %p690 = pneg %p689
      // Predicated region
      $region97: #{text_encoder_forward.1} parent=5 // pred_check
        _
      $region98: #{text_encoder_forward.1} parent=5 // pred_check_branch
        %692 = sbr.rel (%p689) target = $region100
      $region99: #{text_encoder_forward.1} parent=5 // pred_region
        %s693 = ssub.s32 %s37, 1
        %p694 = scmp.lt.s32.totalorder %s46, 1
        %s695 = scalar_select %p694, %s46, 1
        %s696 = scalar_lea.vmem %s1, %s695
        %p697 = pneg %p75
        %p698 = pneg %p72
        %p699 = pneg %p96
        %p700 = pneg %p93
        %p701 = pneg %p117
        %p702 = pneg %p114
        %p703 = pneg %p138
        %p704 = pneg %p135
        %p705 = scmp.lt.s32.totalorder %s47, 1
        %s706 = scalar_select %p705, %s47, 1
        %s707 = smul.addr %s706, 12
        %s708 = smul.addr %s707, 4
        %s709 = scalar_lea.vmem %s6, %s708
        %p710 = pneg %p164
        %p711 = pneg %p161
        %p712 = scmp.lt.s32.totalorder %s47, 1
        %s713 = scalar_select %p712, %s47, 1
        %s714 = smul.addr %s713, 3
        %s715 = scalar_lea.vmem %s7, %s714
        %p716 = pneg %p190
        %p717 = pneg %p187
        %p718 = scmp.lt.s32.totalorder %s47, 1
        %s719 = scalar_select %p718, %s47, 1
        %s720 = smul.addr %s719, 4
        %s721 = smul.addr %s720, 4
        %s722 = scalar_lea.vmem %s8, %s721
        %p723 = pneg %p216
        %p724 = pneg %p213
        %p725 = scmp.lt.s32.totalorder %s47, 1
        %s726 = scalar_select %p725, %s47, 1
        %s727 = scalar_lea.vmem %s9, %s726
        %p728 = pneg %p242
        %p729 = pneg %p239
        %p730 = scmp.lt.s32.totalorder %s47, 1
        %s731 = scalar_select %p730, %s47, 1
        %s732 = scalar_lea.vmem %s10, %s731
        %p733 = pneg %p268
        %p734 = pneg %p265
        %p735 = scmp.lt.s32.totalorder %s47, 1
        %s736 = scalar_select %p735, %s47, 1
        %s737 = scalar_lea.vmem %s11, %s736
        %p738 = pneg %p294
        %p739 = pneg %p291
        %p740 = scmp.lt.s32.totalorder %s47, 1
        %s741 = scalar_select %p740, %s47, 1
        %s742 = smul.addr %s741, 4
        %s743 = smul.addr %s742, 4
        %s744 = scalar_lea.vmem %s12, %s743
        %p745 = pneg %p320
        %p746 = pneg %p317
        %p747 = scmp.lt.s32.totalorder %s47, 1
        %s748 = scalar_select %p747, %s47, 1
        %s749 = scalar_lea.vmem %s13, %s748
        %p750 = pneg %p346
        %p751 = pneg %p343
        %p752 = scmp.lt.s32.totalorder %s47, 1
        %s753 = scalar_select %p752, %s47, 1
        %s754 = smul.addr %s753, 16
        %s755 = smul.addr %s754, 4
        %s756 = scalar_lea.vmem %s14, %s755
        %p757 = pneg %p372
        %p758 = pneg %p369
        %p759 = scmp.lt.s32.totalorder %s47, 1
        %s760 = scalar_select %p759, %s47, 1
        %s761 = scalar_lea.vmem %s15, %s760
        %p762 = pneg %p398
        %p763 = pneg %p395
        %p764 = scmp.lt.s32.totalorder %s47, 1
        %s765 = scalar_select %p764, %s47, 1
        %s766 = scalar_lea.vmem %s16, %s765
        %p767 = pneg %p424
        %p768 = pneg %p421
        %p769 = scmp.lt.s32.totalorder %s47, 1
        %s770 = scalar_select %p769, %s47, 1
        %s771 = scalar_lea.vmem %s17, %s770
        %p772 = pneg %p450
        %p773 = pneg %p447
        %p774 = pneg %p471
        %p775 = pneg %p468
        %p776 = pneg %p492
        %p777 = pneg %p489
        %p778 = pneg %p513
        %p779 = pneg %p510
        %p780 = pneg %p534
        %p781 = pneg %p531
        %p782 = pneg %p560
        %p783 = pneg %p557
        %s784 = sand.u32 %s547, 1
        %s785 = scalar_lea.sflag [#allocation7], %s784
        %s786 = sand.u32 %s547, 1
        %s787 = scalar_lea.vmem [#allocation6], %s786
        %p788 = scmp.lt.s32.totalorder %s46, 1
        %s789 = scalar_select %p788, %s46, 1
        %s790 = scalar_lea.vmem %s1, %s789
        %p791 = scmp.lt.s32.totalorder %s47, 1
        %s792 = scalar_select %p791, %s47, 1
        %s793 = smul.addr %s792, 12
        %s794 = smul.addr %s793, 4
        %s795 = scalar_lea.vmem %s6, %s794
        %p796 = scmp.lt.s32.totalorder %s47, 1
        %s797 = scalar_select %p796, %s47, 1
        %s798 = smul.addr %s797, 3
        %s799 = scalar_lea.vmem %s7, %s798
        %p800 = scmp.lt.s32.totalorder %s47, 1
        %s801 = scalar_select %p800, %s47, 1
        %s802 = smul.addr %s801, 4
        %s803 = smul.addr %s802, 4
        %s804 = scalar_lea.vmem %s8, %s803
        %p805 = scmp.lt.s32.totalorder %s47, 1
        %s806 = scalar_select %p805, %s47, 1
        %s807 = scalar_lea.vmem %s9, %s806
        %p808 = scmp.lt.s32.totalorder %s47, 1
        %s809 = scalar_select %p808, %s47, 1
        %s810 = scalar_lea.vmem %s10, %s809
        %p811 = scmp.lt.s32.totalorder %s47, 1
        %s812 = scalar_select %p811, %s47, 1
        %s813 = scalar_lea.vmem %s11, %s812
        %p814 = scmp.lt.s32.totalorder %s47, 1
        %s815 = scalar_select %p814, %s47, 1
        %s816 = smul.addr %s815, 4
        %s817 = smul.addr %s816, 4
        %s818 = scalar_lea.vmem %s12, %s817
        %p819 = scmp.lt.s32.totalorder %s47, 1
        %s820 = scalar_select %p819, %s47, 1
        %s821 = scalar_lea.vmem %s13, %s820
        %p822 = scmp.lt.s32.totalorder %s47, 1
        %s823 = scalar_select %p822, %s47, 1
        %s824 = smul.addr %s823, 16
        %s825 = smul.addr %s824, 4
        %s826 = scalar_lea.vmem %s14, %s825
        %p827 = scmp.lt.s32.totalorder %s47, 1
        %s828 = scalar_select %p827, %s47, 1
        %s829 = scalar_lea.vmem %s15, %s828
        %p830 = scmp.lt.s32.totalorder %s47, 1
        %s831 = scalar_select %p830, %s47, 1
        %s832 = scalar_lea.vmem %s16, %s831
        %p833 = scmp.lt.s32.totalorder %s47, 1
        %s834 = scalar_select %p833, %s47, 1
        %s835 = scalar_lea.vmem %s17, %s834
        %p837 = scmp.eq.s32.totalorder %s47, 0
        // Predicated region
        $region101: #{text_encoder_forward.1} parent=99 // pred_check
          %p838 = pneg %p837
        $region102: #{text_encoder_forward.1} parent=99 // pred_check_branch
          %840 = sbr.rel (%p838) target = $region104
        $region103: #{text_encoder_forward.1} parent=99 // pred_region
          %s841 = smul.u32 %s46, 128
          %s842 = sld [smem:[#allocation5 + %s841]]
          %s843 = scalar_lea.vmem %s2, %s842
          %p845 = scmp.lt.u32.totalorder 1, 8
          %p846 = pneg %p845
          // Predicated region
          $region105: #{text_encoder_forward.1} parent=103 // pred_check
            _
          $region106: #{text_encoder_forward.1} parent=103 // pred_check_branch
            %848 = sbr.rel (%p845) target = $region108
          $region107: #{text_encoder_forward.1} parent=103 // pred_region
            %s863 = sand.u32 1, 7
            %p864 = scmp.eq.s32.totalorder %s863, 0
            %p865 = pneg %p864
            // Predicated region
            $region120: #{text_encoder_forward.1} parent=107 // pred_check
              _
            $region121: #{text_encoder_forward.1} parent=107 // pred_check_branch
              %867 = sbr.rel (%p864) target = $region123
            $region122: #{text_encoder_forward.1} parent=107 // pred_region
              %s868 = sand.u32 1, 7
              %s869 = ssub.s32 1, %s868
              %s870 = scalar_lea.vmem %s843, %s869
              %s871 = ssub.s32 1, %s868
              %s872 = scalar_lea.vmem [#allocation2], %s871
              %s873 = sshllo.u32 0, %s868
              loop: start=0, step=1, limit=1
              $region124: #{text_encoder_forward.1} parent=122 // loop_pre_header
                _
              $region125: #{text_encoder_forward.1} parent=122 // loop_header
                %s875 = sphi 0, %s879
                %p876 = scmp.ge.s32.totalorder %s875, 1
                %s880 = sphi %s870, %s870
                %s881 = sphi %s872, %s872
              $region126: #{text_encoder_forward.1} parent=122 // loop_header_branch
                %878 = sbr.rel (%p876) target = $region130
              $region127: #{text_encoder_forward.1} parent=122 // loop_body
                %v882 = vld [vmem:[%s880] sm:%s873]
                %883 = vst [vmem:[%s881] sm:%s873] %v882
              $region128: #{text_encoder_forward.1} parent=122 // loop_footer
                %s879 = sadd.s32 1, %s875
              $region129: #{text_encoder_forward.1} parent=122 // loop_footer_branch
                %874 = sbr.rel target = $region125
              $region130: #{text_encoder_forward.1} parent=122 // loop_exit
                _
            $region123: #{text_encoder_forward.1} parent=107 // pred_fallthru
              _
          $region108: #{text_encoder_forward.1} parent=103 // pred_fallthru
            _
          // Predicated region
          $region109: #{text_encoder_forward.1} parent=103 // pred_check
            %p849 = pneg %p845
          $region110: #{text_encoder_forward.1} parent=103 // pred_check_branch
            %851 = sbr.rel (%p849) target = $region112
          $region111: #{text_encoder_forward.1} parent=103 // pred_region
            %s852 = sshllo.u32 0, 1
            loop: start=0, step=1, limit=1
            $region113: #{text_encoder_forward.1} parent=111 // loop_pre_header
              _
            $region114: #{text_encoder_forward.1} parent=111 // loop_header
              %s854 = sphi 0, %s858
              %p855 = scmp.ge.s32.totalorder %s854, 1
              %s859 = sphi %s843, %s843
              %s860 = sphi [#allocation2], [#allocation2]
            $region115: #{text_encoder_forward.1} parent=111 // loop_header_branch
              %857 = sbr.rel (%p855) target = $region119
            $region116: #{text_encoder_forward.1} parent=111 // loop_body
              %v861 = vld [vmem:[%s859] sm:%s852]
              %862 = vst [vmem:[%s860] sm:%s852] %v861
            $region117: #{text_encoder_forward.1} parent=111 // loop_footer
              %s858 = sadd.s32 1, %s854
            $region118: #{text_encoder_forward.1} parent=111 // loop_footer_branch
              %853 = sbr.rel target = $region114
            $region119: #{text_encoder_forward.1} parent=111 // loop_exit
              _
          $region112: #{text_encoder_forward.1} parent=103 // pred_fallthru
            _
          // Predicated region
          $region131: #{text_encoder_forward.1} parent=103 // pred_check
            _
          $region132: #{text_encoder_forward.1} parent=103 // pred_check_branch
            %886 = sbr.rel (0) target = $region134
          $region133: #{text_encoder_forward.1} parent=103 // pred_region
            %887 = vsyncadd [#allocation3], 16
          $region134: #{text_encoder_forward.1} parent=103 // pred_fallthru
            _
          %s888 = sadd.s32 %s841, 1
          %s889 = sld [smem:[#allocation5 + %s888]]
          %s890 = scalar_lea.vmem %s2, %s889
          %s891 = scalar_lea.vmem [#allocation2], 1
          %s892 = scalar_lea.sflag [#allocation3], 1
          %p894 = scmp.lt.u32.totalorder 1, 8
          %p895 = pneg %p894
          // Predicated region
          $region135: #{text_encoder_forward.1} parent=103 // pred_check
            _
          $region136: #{text_encoder_forward.1} parent=103 // pred_check_branch
            %897 = sbr.rel (%p894) target = $region138
          $region137: #{text_encoder_forward.1} parent=103 // pred_region
            %s912 = sand.u32 1, 7
            %p913 = scmp.eq.s32.totalorder %s912, 0
            %p914 = pneg %p913
            // Predicated region
            $region150: #{text_encoder_forward.1} parent=137 // pred_check
              _
            $region151: #{text_encoder_forward.1} parent=137 // pred_check_branch
              %916 = sbr.rel (%p913) target = $region153
            $region152: #{text_encoder_forward.1} parent=137 // pred_region
              %s917 = sand.u32 1, 7
              %s918 = ssub.s32 1, %s917
              %s919 = scalar_lea.vmem %s890, %s918
              %s920 = ssub.s32 1, %s917
              %s921 = scalar_lea.vmem %s891, %s920 [#allocation2]
              %s922 = sshllo.u32 0, %s917
              loop: start=0, step=1, limit=1
              $region154: #{text_encoder_forward.1} parent=152 // loop_pre_header
                _
              $region155: #{text_encoder_forward.1} parent=152 // loop_header
                %s924 = sphi 0, %s928
                %p925 = scmp.ge.s32.totalorder %s924, 1
                %s929 = sphi %s919, %s919
                %s930 = sphi %s921, %s921
              $region156: #{text_encoder_forward.1} parent=152 // loop_header_branch
                %927 = sbr.rel (%p925) target = $region160
              $region157: #{text_encoder_forward.1} parent=152 // loop_body
                %v931 = vld [vmem:[%s929] sm:%s922]
                %932 = vst [vmem:[%s930] sm:%s922] %v931
              $region158: #{text_encoder_forward.1} parent=152 // loop_footer
                %s928 = sadd.s32 1, %s924
              $region159: #{text_encoder_forward.1} parent=152 // loop_footer_branch
                %923 = sbr.rel target = $region155
              $region160: #{text_encoder_forward.1} parent=152 // loop_exit
                _
            $region153: #{text_encoder_forward.1} parent=137 // pred_fallthru
              _
          $region138: #{text_encoder_forward.1} parent=103 // pred_fallthru
            _
          // Predicated region
          $region139: #{text_encoder_forward.1} parent=103 // pred_check
            %p898 = pneg %p894
          $region140: #{text_encoder_forward.1} parent=103 // pred_check_branch
            %900 = sbr.rel (%p898) target = $region142
          $region141: #{text_encoder_forward.1} parent=103 // pred_region
            %s901 = sshllo.u32 0, 1
            loop: start=0, step=1, limit=1
            $region143: #{text_encoder_forward.1} parent=141 // loop_pre_header
              _
            $region144: #{text_encoder_forward.1} parent=141 // loop_header
              %s903 = sphi 0, %s907
              %p904 = scmp.ge.s32.totalorder %s903, 1
              %s908 = sphi %s890, %s890
              %s909 = sphi %s891, %s891
            $region145: #{text_encoder_forward.1} parent=141 // loop_header_branch
              %906 = sbr.rel (%p904) target = $region149
            $region146: #{text_encoder_forward.1} parent=141 // loop_body
              %v910 = vld [vmem:[%s908] sm:%s901]
              %911 = vst [vmem:[%s909] sm:%s901] %v910
            $region147: #{text_encoder_forward.1} parent=141 // loop_footer
              %s907 = sadd.s32 1, %s903
            $region148: #{text_encoder_forward.1} parent=141 // loop_footer_branch
              %902 = sbr.rel target = $region144
            $region149: #{text_encoder_forward.1} parent=141 // loop_exit
              _
          $region142: #{text_encoder_forward.1} parent=103 // pred_fallthru
            _
          // Predicated region
          $region161: #{text_encoder_forward.1} parent=103 // pred_check
            _
          $region162: #{text_encoder_forward.1} parent=103 // pred_check_branch
            %935 = sbr.rel (0) target = $region164
          $region163: #{text_encoder_forward.1} parent=103 // pred_region
            %936 = vsyncadd %s892, 16
          $region164: #{text_encoder_forward.1} parent=103 // pred_fallthru
            _
          %s937 = sadd.s32 %s841, 2
          %s938 = sld [smem:[#allocation5 + %s937]]
          %s939 = scalar_lea.vmem %s2, %s938
          %s940 = scalar_lea.vmem [#allocation2], 2
          %s941 = scalar_lea.sflag [#allocation3], 2
          %p943 = scmp.lt.u32.totalorder 1, 8
          %p944 = pneg %p943
          // Predicated region
          $region165: #{text_encoder_forward.1} parent=103 // pred_check
            _
          $region166: #{text_encoder_forward.1} parent=103 // pred_check_branch
            %946 = sbr.rel (%p943) target = $region168
          $region167: #{text_encoder_forward.1} parent=103 // pred_region
            %s961 = sand.u32 1, 7
            %p962 = scmp.eq.s32.totalorder %s961, 0
            %p963 = pneg %p962
            // Predicated region
            $region180: #{text_encoder_forward.1} parent=167 // pred_check
              _
            $region181: #{text_encoder_forward.1} parent=167 // pred_check_branch
              %965 = sbr.rel (%p962) target = $region183
            $region182: #{text_encoder_forward.1} parent=167 // pred_region
              %s966 = sand.u32 1, 7
              %s967 = ssub.s32 1, %s966
              %s968 = scalar_lea.vmem %s939, %s967
              %s969 = ssub.s32 1, %s966
              %s970 = scalar_lea.vmem %s940, %s969 [#allocation2]
              %s971 = sshllo.u32 0, %s966
              loop: start=0, step=1, limit=1
              $region184: #{text_encoder_forward.1} parent=182 // loop_pre_header
                _
              $region185: #{text_encoder_forward.1} parent=182 // loop_header
                %s973 = sphi 0, %s977
                %p974 = scmp.ge.s32.totalorder %s973, 1
                %s978 = sphi %s968, %s968
                %s979 = sphi %s970, %s970
              $region186: #{text_encoder_forward.1} parent=182 // loop_header_branch
                %976 = sbr.rel (%p974) target = $region190
              $region187: #{text_encoder_forward.1} parent=182 // loop_body
                %v980 = vld [vmem:[%s978] sm:%s971]
                %981 = vst [vmem:[%s979] sm:%s971] %v980
              $region188: #{text_encoder_forward.1} parent=182 // loop_footer
                %s977 = sadd.s32 1, %s973
              $region189: #{text_encoder_forward.1} parent=182 // loop_footer_branch
                %972 = sbr.rel target = $region185
              $region190: #{text_encoder_forward.1} parent=182 // loop_exit
                _
            $region183: #{text_encoder_forward.1} parent=167 // pred_fallthru
              _
          $region168: #{text_encoder_forward.1} parent=103 // pred_fallthru
            _
          // Predicated region
          $region169: #{text_encoder_forward.1} parent=103 // pred_check
            %p947 = pneg %p943
          $region170: #{text_encoder_forward.1} parent=103 // pred_check_branch
            %949 = sbr.rel (%p947) target = $region172
          $region171: #{text_encoder_forward.1} parent=103 // pred_region
            %s950 = sshllo.u32 0, 1
            loop: start=0, step=1, limit=1
            $region173: #{text_encoder_forward.1} parent=171 // loop_pre_header
              _
            $region174: #{text_encoder_forward.1} parent=171 // loop_header
              %s952 = sphi 0, %s956
              %p953 = scmp.ge.s32.totalorder %s952, 1
              %s957 = sphi %s939, %s939
              %s958 = sphi %s940, %s940
            $region175: #{text_encoder_forward.1} parent=171 // loop_header_branch
              %955 = sbr.rel (%p953) target = $region179
            $region176: #{text_encoder_forward.1} parent=171 // loop_body
              %v959 = vld [vmem:[%s957] sm:%s950]
              %960 = vst [vmem:[%s958] sm:%s950] %v959
            $region177: #{text_encoder_forward.1} parent=171 // loop_footer
              %s956 = sadd.s32 1, %s952
            $region178: #{text_encoder_forward.1} parent=171 // loop_footer_branch
              %951 = sbr.rel target = $region174
            $region179: #{text_encoder_forward.1} parent=171 // loop_exit
              _
          $region172: #{text_encoder_forward.1} parent=103 // pred_fallthru
            _
          // Predicated region
          $region191: #{text_encoder_forward.1} parent=103 // pred_check
            _
          $region192: #{text_encoder_forward.1} parent=103 // pred_check_branch
            %984 = sbr.rel (0) target = $region194
          $region193: #{text_encoder_forward.1} parent=103 // pred_region
            %985 = vsyncadd %s941, 16
          $region194: #{text_encoder_forward.1} parent=103 // pred_fallthru
            _
          %s986 = sadd.s32 %s841, 3
          %s987 = sld [smem:[#allocation5 + %s986]]
          %s988 = scalar_lea.vmem %s2, %s987
          %s989 = scalar_lea.vmem [#allocation2], 3
          %s990 = scalar_lea.sflag [#allocation3], 3
          %p992 = scmp.lt.u32.totalorder 1, 8
          %p993 = pneg %p992
          // Predicated region
          $region195: #{text_encoder_forward.1} parent=103 // pred_check
            _
          $region196: #{text_encoder_forward.1} parent=103 // pred_check_branch
            %995 = sbr.rel (%p992) target = $region198
          $region197: #{text_encoder_forward.1} parent=103 // pred_region
            %s1010 = sand.u32 1, 7
            %p1011 = scmp.eq.s32.totalorder %s1010, 0
            %p1012 = pneg %p1011
            // Predicated region
            $region210: #{text_encoder_forward.1} parent=197 // pred_check
              _
            $region211: #{text_encoder_forward.1} parent=197 // pred_check_branch
              %1014 = sbr.rel (%p1011) target = $region213
            $region212: #{text_encoder_forward.1} parent=197 // pred_region
              %s1015 = sand.u32 1, 7
              %s1016 = ssub.s32 1, %s1015
              %s1017 = scalar_lea.vmem %s988, %s1016
              %s1018 = ssub.s32 1, %s1015
              %s1019 = scalar_lea.vmem %s989, %s1018 [#allocation2]
              %s1020 = sshllo.u32 0, %s1015
              loop: start=0, step=1, limit=1
              $region214: #{text_encoder_forward.1} parent=212 // loop_pre_header
                _
              $region215: #{text_encoder_forward.1} parent=212 // loop_header
                %s1022 = sphi 0, %s1026
                %p1023 = scmp.ge.s32.totalorder %s1022, 1
                %s1027 = sphi %s1017, %s1017
                %s1028 = sphi %s1019, %s1019
              $region216: #{text_encoder_forward.1} parent=212 // loop_header_branch
                %1025 = sbr.rel (%p1023) target = $region220
              $region217: #{text_encoder_forward.1} parent=212 // loop_body
                %v1029 = vld [vmem:[%s1027] sm:%s1020]
                %1030 = vst [vmem:[%s1028] sm:%s1020] %v1029
              $region218: #{text_encoder_forward.1} parent=212 // loop_footer
                %s1026 = sadd.s32 1, %s1022
              $region219: #{text_encoder_forward.1} parent=212 // loop_footer_branch
                %1021 = sbr.rel target = $region215
              $region220: #{text_encoder_forward.1} parent=212 // loop_exit
                _
            $region213: #{text_encoder_forward.1} parent=197 // pred_fallthru
              _
          $region198: #{text_encoder_forward.1} parent=103 // pred_fallthru
            _
          // Predicated region
          $region199: #{text_encoder_forward.1} parent=103 // pred_check
            %p996 = pneg %p992
          $region200: #{text_encoder_forward.1} parent=103 // pred_check_branch
            %998 = sbr.rel (%p996) target = $region202
          $region201: #{text_encoder_forward.1} parent=103 // pred_region
            %s999 = sshllo.u32 0, 1
            loop: start=0, step=1, limit=1
            $region203: #{text_encoder_forward.1} parent=201 // loop_pre_header
              _
            $region204: #{text_encoder_forward.1} parent=201 // loop_header
              %s1001 = sphi 0, %s1005
              %p1002 = scmp.ge.s32.totalorder %s1001, 1
              %s1006 = sphi %s988, %s988
              %s1007 = sphi %s989, %s989
            $region205: #{text_encoder_forward.1} parent=201 // loop_header_branch
              %1004 = sbr.rel (%p1002) target = $region209
            $region206: #{text_encoder_forward.1} parent=201 // loop_body
              %v1008 = vld [vmem:[%s1006] sm:%s999]
              %1009 = vst [vmem:[%s1007] sm:%s999] %v1008
            $region207: #{text_encoder_forward.1} parent=201 // loop_footer
              %s1005 = sadd.s32 1, %s1001
            $region208: #{text_encoder_forward.1} parent=201 // loop_footer_branch
              %1000 = sbr.rel target = $region204
            $region209: #{text_encoder_forward.1} parent=201 // loop_exit
              _
          $region202: #{text_encoder_forward.1} parent=103 // pred_fallthru
            _
          // Predicated region
          $region221: #{text_encoder_forward.1} parent=103 // pred_check
            _
          $region222: #{text_encoder_forward.1} parent=103 // pred_check_branch
            %1033 = sbr.rel (0) target = $region224
          $region223: #{text_encoder_forward.1} parent=103 // pred_region
            %1034 = vsyncadd %s990, 16
          $region224: #{text_encoder_forward.1} parent=103 // pred_fallthru
            _
          %s1035 = sadd.s32 %s841, 4
          %s1036 = sld [smem:[#allocation5 + %s1035]]
          %s1037 = scalar_lea.vmem %s2, %s1036
          %s1038 = scalar_lea.vmem [#allocation2], 4
          %s1039 = scalar_lea.sflag [#allocation3], 4
          %p1041 = scmp.lt.u32.totalorder 1, 8
          %p1042 = pneg %p1041
          // Predicated region
          $region225: #{text_encoder_forward.1} parent=103 // pred_check
            _
          $region226: #{text_encoder_forward.1} parent=103 // pred_check_branch
            %1044 = sbr.rel (%p1041) target = $region228
          $region227: #{text_encoder_forward.1} parent=103 // pred_region
            %s1059 = sand.u32 1, 7
            %p1060 = scmp.eq.s32.totalorder %s1059, 0
            %p1061 = pneg %p1060
            // Predicated region
            $region240: #{text_encoder_forward.1} parent=227 // pred_check
              _
            $region241: #{text_encoder_forward.1} parent=227 // pred_check_branch
              %1063 = sbr.rel (%p1060) target = $region243
            $region242: #{text_encoder_forward.1} parent=227 // pred_region
              %s1064 = sand.u32 1, 7
              %s1065 = ssub.s32 1, %s1064
              %s1066 = scalar_lea.vmem %s1037, %s1065
              %s1067 = ssub.s32 1, %s1064
              %s1068 = scalar_lea.vmem %s1038, %s1067 [#allocation2]
              %s1069 = sshllo.u32 0, %s1064
              loop: start=0, step=1, limit=1
              $region244: #{text_encoder_forward.1} parent=242 // loop_pre_header
                _
              $region245: #{text_encoder_forward.1} parent=242 // loop_header
                %s1071 = sphi 0, %s1075
                %p1072 = scmp.ge.s32.totalorder %s1071, 1
                %s1076 = sphi %s1066, %s1066
                %s1077 = sphi %s1068, %s1068
              $region246: #{text_encoder_forward.1} parent=242 // loop_header_branch
                %1074 = sbr.rel (%p1072) target = $region250
              $region247: #{text_encoder_forward.1} parent=242 // loop_body
                %v1078 = vld [vmem:[%s1076] sm:%s1069]
                %1079 = vst [vmem:[%s1077] sm:%s1069] %v1078
              $region248: #{text_encoder_forward.1} parent=242 // loop_footer
                %s1075 = sadd.s32 1, %s1071
              $region249: #{text_encoder_forward.1} parent=242 // loop_footer_branch
                %1070 = sbr.rel target = $region245
              $region250: #{text_encoder_forward.1} parent=242 // loop_exit
                _
            $region243: #{text_encoder_forward.1} parent=227 // pred_fallthru
              _
          $region228: #{text_encoder_forward.1} parent=103 // pred_fallthru
            _
          // Predicated region
          $region229: #{text_encoder_forward.1} parent=103 // pred_check
            %p1045 = pneg %p1041
          $region230: #{text_encoder_forward.1} parent=103 // pred_check_branch
            %1047 = sbr.rel (%p1045) target = $region232
          $region231: #{text_encoder_forward.1} parent=103 // pred_region
            %s1048 = sshllo.u32 0, 1
            loop: start=0, step=1, limit=1
            $region233: #{text_encoder_forward.1} parent=231 // loop_pre_header
              _
            $region234: #{text_encoder_forward.1} parent=231 // loop_header
              %s1050 = sphi 0, %s1054
              %p1051 = scmp.ge.s32.totalorder %s1050, 1
              %s1055 = sphi %s1037, %s1037
              %s1056 = sphi %s1038, %s1038
            $region235: #{text_encoder_forward.1} parent=231 // loop_header_branch
              %1053 = sbr.rel (%p1051) target = $region239
            $region236: #{text_encoder_forward.1} parent=231 // loop_body
              %v1057 = vld [vmem:[%s1055] sm:%s1048]
              %1058 = vst [vmem:[%s1056] sm:%s1048] %v1057
            $region237: #{text_encoder_forward.1} parent=231 // loop_footer
              %s1054 = sadd.s32 1, %s1050
            $region238: #{text_encoder_forward.1} parent=231 // loop_footer_branch
              %1049 = sbr.rel target = $region234
            $region239: #{text_encoder_forward.1} parent=231 // loop_exit
              _
          $region232: #{text_encoder_forward.1} parent=103 // pred_fallthru
            _
          // Predicated region
          $region251: #{text_encoder_forward.1} parent=103 // pred_check
            _
          $region252: #{text_encoder_forward.1} parent=103 // pred_check_branch
            %1082 = sbr.rel (0) target = $region254
          $region253: #{text_encoder_forward.1} parent=103 // pred_region
            %1083 = vsyncadd %s1039, 16
          $region254: #{text_encoder_forward.1} parent=103 // pred_fallthru
            _
          %s1084 = sadd.s32 %s841, 5
          %s1085 = sld [smem:[#allocation5 + %s1084]]
          %s1086 = scalar_lea.vmem %s2, %s1085
          %s1087 = scalar_lea.vmem [#allocation2], 5
          %s1088 = scalar_lea.sflag [#allocation3], 5
          %p1090 = scmp.lt.u32.totalorder 1, 8
          %p1091 = pneg %p1090
          // Predicated region
          $region255: #{text_encoder_forward.1} parent=103 // pred_check
            _
          $region256: #{text_encoder_forward.1} parent=103 // pred_check_branch
            %1093 = sbr.rel (%p1090) target = $region258
          $region257: #{text_encoder_forward.1} parent=103 // pred_region
            %s1108 = sand.u32 1, 7
            %p1109 = scmp.eq.s32.totalorder %s1108, 0
            %p1110 = pneg %p1109
            // Predicated region
            $region270: #{text_encoder_forward.1} parent=257 // pred_check
              _
            $region271: #{text_encoder_forward.1} parent=257 // pred_check_branch
              %1112 = sbr.rel (%p1109) target = $region273
            $region272: #{text_encoder_forward.1} parent=257 // pred_region
              %s1113 = sand.u32 1, 7
              %s1114 = ssub.s32 1, %s1113
              %s1115 = scalar_lea.vmem %s1086, %s1114
              %s1116 = ssub.s32 1, %s1113
              %s1117 = scalar_lea.vmem %s1087, %s1116 [#allocation2]
              %s1118 = sshllo.u32 0, %s1113
              loop: start=0, step=1, limit=1
              $region274: #{text_encoder_forward.1} parent=272 // loop_pre_header
                _
              $region275: #{text_encoder_forward.1} parent=272 // loop_header
                %s1120 = sphi 0, %s1124
                %p1121 = scmp.ge.s32.totalorder %s1120, 1
                %s1125 = sphi %s1115, %s1115
                %s1126 = sphi %s1117, %s1117
              $region276: #{text_encoder_forward.1} parent=272 // loop_header_branch
                %1123 = sbr.rel (%p1121) target = $region280
              $region277: #{text_encoder_forward.1} parent=272 // loop_body
                %v1127 = vld [vmem:[%s1125] sm:%s1118]
                %1128 = vst [vmem:[%s1126] sm:%s1118] %v1127
              $region278: #{text_encoder_forward.1} parent=272 // loop_footer
                %s1124 = sadd.s32 1, %s1120
              $region279: #{text_encoder_forward.1} parent=272 // loop_footer_branch
                %1119 = sbr.rel target = $region275
              $region280: #{text_encoder_forward.1} parent=272 // loop_exit
                _
            $region273: #{text_encoder_forward.1} parent=257 // pred_fallthru
              _
          $region258: #{text_encoder_forward.1} parent=103 // pred_fallthru
            _
          // Predicated region
          $region259: #{text_encoder_forward.1} parent=103 // pred_check
            %p1094 = pneg %p1090
          $region260: #{text_encoder_forward.1} parent=103 // pred_check_branch
            %1096 = sbr.rel (%p1094) target = $region262
          $region261: #{text_encoder_forward.1} parent=103 // pred_region
            %s1097 = sshllo.u32 0, 1
            loop: start=0, step=1, limit=1
            $region263: #{text_encoder_forward.1} parent=261 // loop_pre_header
              _
            $region264: #{text_encoder_forward.1} parent=261 // loop_header
              %s1099 = sphi 0, %s1103
              %p1100 = scmp.ge.s32.totalorder %s1099, 1
              %s1104 = sphi %s1086, %s1086
              %s1105 = sphi %s1087, %s1087
            $region265: #{text_encoder_forward.1} parent=261 // loop_header_branch
              %1102 = sbr.rel (%p1100) target = $region269
            $region266: #{text_encoder_forward.1} parent=261 // loop_body
              %v1106 = vld [vmem:[%s1104] sm:%s1097]
              %1107 = vst [vmem:[%s1105] sm:%s1097] %v1106
            $region267: #{text_encoder_forward.1} parent=261 // loop_footer
              %s1103 = sadd.s32 1, %s1099
            $region268: #{text_encoder_forward.1} parent=261 // loop_footer_branch
              %1098 = sbr.rel target = $region264
            $region269: #{text_encoder_forward.1} parent=261 // loop_exit
              _
          $region262: #{text_encoder_forward.1} parent=103 // pred_fallthru
            _
          // Predicated region
          $region281: #{text_encoder_forward.1} parent=103 // pred_check
            _
          $region282: #{text_encoder_forward.1} parent=103 // pred_check_branch
            %1131 = sbr.rel (0) target = $region284
          $region283: #{text_encoder_forward.1} parent=103 // pred_region
            %1132 = vsyncadd %s1088, 16
          $region284: #{text_encoder_forward.1} parent=103 // pred_fallthru
            _
          %s1133 = sadd.s32 %s841, 6
          %s1134 = sld [smem:[#allocation5 + %s1133]]
          %s1135 = scalar_lea.vmem %s2, %s1134
          %s1136 = scalar_lea.vmem [#allocation2], 6
          %s1137 = scalar_lea.sflag [#allocation3], 6
          %p1139 = scmp.lt.u32.totalorder 1, 8
          %p1140 = pneg %p1139
          // Predicated region
          $region285: #{text_encoder_forward.1} parent=103 // pred_check
            _
          $region286: #{text_encoder_forward.1} parent=103 // pred_check_branch
            %1142 = sbr.rel (%p1139) target = $region288
          $region287: #{text_encoder_forward.1} parent=103 // pred_region
            %s1157 = sand.u32 1, 7
            %p1158 = scmp.eq.s32.totalorder %s1157, 0
            %p1159 = pneg %p1158
            // Predicated region
            $region300: #{text_encoder_forward.1} parent=287 // pred_check
              _
            $region301: #{text_encoder_forward.1} parent=287 // pred_check_branch
              %1161 = sbr.rel (%p1158) target = $region303
            $region302: #{text_encoder_forward.1} parent=287 // pred_region
              %s1162 = sand.u32 1, 7
              %s1163 = ssub.s32 1, %s1162
              %s1164 = scalar_lea.vmem %s1135, %s1163
              %s1165 = ssub.s32 1, %s1162
              %s1166 = scalar_lea.vmem %s1136, %s1165 [#allocation2]
              %s1167 = sshllo.u32 0, %s1162
              loop: start=0, step=1, limit=1
              $region304: #{text_encoder_forward.1} parent=302 // loop_pre_header
                _
              $region305: #{text_encoder_forward.1} parent=302 // loop_header
                %s1169 = sphi 0, %s1173
                %p1170 = scmp.ge.s32.totalorder %s1169, 1
                %s1174 = sphi %s1164, %s1164
                %s1175 = sphi %s1166, %s1166
              $region306: #{text_encoder_forward.1} parent=302 // loop_header_branch
                %1172 = sbr.rel (%p1170) target = $region310
              $region307: #{text_encoder_forward.1} parent=302 // loop_body
                %v1176 = vld [vmem:[%s1174] sm:%s1167]
                %1177 = vst [vmem:[%s1175] sm:%s1167] %v1176
              $region308: #{text_encoder_forward.1} parent=302 // loop_footer
                %s1173 = sadd.s32 1, %s1169
              $region309: #{text_encoder_forward.1} parent=302 // loop_footer_branch
                %1168 = sbr.rel target = $region305
              $region310: #{text_encoder_forward.1} parent=302 // loop_exit
                _
            $region303: #{text_encoder_forward.1} parent=287 // pred_fallthru
              _
          $region288: #{text_encoder_forward.1} parent=103 // pred_fallthru
            _
          // Predicated region
          $region289: #{text_encoder_forward.1} parent=103 // pred_check
            %p1143 = pneg %p1139
          $region290: #{text_encoder_forward.1} parent=103 // pred_check_branch
            %1145 = sbr.rel (%p1143) target = $region292
          $region291: #{text_encoder_forward.1} parent=103 // pred_region
            %s1146 = sshllo.u32 0, 1
            loop: start=0, step=1, limit=1
            $region293: #{text_encoder_forward.1} parent=291 // loop_pre_header
              _
            $region294: #{text_encoder_forward.1} parent=291 // loop_header
              %s1148 = sphi 0, %s1152
              %p1149 = scmp.ge.s32.totalorder %s1148, 1
              %s1153 = sphi %s1135, %s1135
              %s1154 = sphi %s1136, %s1136
            $region295: #{text_encoder_forward.1} parent=291 // loop_header_branch
              %1151 = sbr.rel (%p1149) target = $region299
            $region296: #{text_encoder_forward.1} parent=291 // loop_body
              %v1155 = vld [vmem:[%s1153] sm:%s1146]
              %1156 = vst [vmem:[%s1154] sm:%s1146] %v1155
            $region297: #{text_encoder_forward.1} parent=291 // loop_footer
              %s1152 = sadd.s32 1, %s1148
            $region298: #{text_encoder_forward.1} parent=291 // loop_footer_branch
              %1147 = sbr.rel target = $region294
            $region299: #{text_encoder_forward.1} parent=291 // loop_exit
              _
          $region292: #{text_encoder_forward.1} parent=103 // pred_fallthru
            _
          // Predicated region
          $region311: #{text_encoder_forward.1} parent=103 // pred_check
            _
          $region312: #{text_encoder_forward.1} parent=103 // pred_check_branch
            %1180 = sbr.rel (0) target = $region314
          $region313: #{text_encoder_forward.1} parent=103 // pred_region
            %1181 = vsyncadd %s1137, 16
          $region314: #{text_encoder_forward.1} parent=103 // pred_fallthru
            _
          %s1182 = sadd.s32 %s841, 7
          %s1183 = sld [smem:[#allocation5 + %s1182]]
          %s1184 = scalar_lea.vmem %s2, %s1183
          %s1185 = scalar_lea.vmem [#allocation2], 7
          %s1186 = scalar_lea.sflag [#allocation3], 7
          %p1188 = scmp.lt.u32.totalorder 1, 8
          %p1189 = pneg %p1188
          // Predicated region
          $region315: #{text_encoder_forward.1} parent=103 // pred_check
            _
          $region316: #{text_encoder_forward.1} parent=103 // pred_check_branch
            %1191 = sbr.rel (%p1188) target = $region318
          $region317: #{text_encoder_forward.1} parent=103 // pred_region
            %s1206 = sand.u32 1, 7
            %p1207 = scmp.eq.s32.totalorder %s1206, 0
            %p1208 = pneg %p1207
            // Predicated region
            $region330: #{text_encoder_forward.1} parent=317 // pred_check
              _
            $region331: #{text_encoder_forward.1} parent=317 // pred_check_branch
              %1210 = sbr.rel (%p1207) target = $region333
            $region332: #{text_encoder_forward.1} parent=317 // pred_region
              %s1211 = sand.u32 1, 7
              %s1212 = ssub.s32 1, %s1211
              %s1213 = scalar_lea.vmem %s1184, %s1212
              %s1214 = ssub.s32 1, %s1211
              %s1215 = scalar_lea.vmem %s1185, %s1214 [#allocation2]
              %s1216 = sshllo.u32 0, %s1211
              loop: start=0, step=1, limit=1
              $region334: #{text_encoder_forward.1} parent=332 // loop_pre_header
                _
              $region335: #{text_encoder_forward.1} parent=332 // loop_header
                %s1218 = sphi 0, %s1222
                %p1219 = scmp.ge.s32.totalorder %s1218, 1
                %s1223 = sphi %s1213, %s1213
                %s1224 = sphi %s1215, %s1215
              $region336: #{text_encoder_forward.1} parent=332 // loop_header_branch
                %1221 = sbr.rel (%p1219) target = $region340
              $region337: #{text_encoder_forward.1} parent=332 // loop_body
                %v1225 = vld [vmem:[%s1223] sm:%s1216]
                %1226 = vst [vmem:[%s1224] sm:%s1216] %v1225
              $region338: #{text_encoder_forward.1} parent=332 // loop_footer
                %s1222 = sadd.s32 1, %s1218
              $region339: #{text_encoder_forward.1} parent=332 // loop_footer_branch
                %1217 = sbr.rel target = $region335
              $region340: #{text_encoder_forward.1} parent=332 // loop_exit
                _
            $region333: #{text_encoder_forward.1} parent=317 // pred_fallthru
              _
          $region318: #{text_encoder_forward.1} parent=103 // pred_fallthru
            _
          // Predicated region
          $region319: #{text_encoder_forward.1} parent=103 // pred_check
            %p1192 = pneg %p1188
          $region320: #{text_encoder_forward.1} parent=103 // pred_check_branch
            %1194 = sbr.rel (%p1192) target = $region322
          $region321: #{text_encoder_forward.1} parent=103 // pred_region
            %s1195 = sshllo.u32 0, 1
            loop: start=0, step=1, limit=1
            $region323: #{text_encoder_forward.1} parent=321 // loop_pre_header
              _
            $region324: #{text_encoder_forward.1} parent=321 // loop_header
              %s1197 = sphi 0, %s1201
              %p1198 = scmp.ge.s32.totalorder %s1197, 1
              %s1202 = sphi %s1184, %s1184
              %s1203 = sphi %s1185, %s1185
            $region325: #{text_encoder_forward.1} parent=321 // loop_header_branch
              %1200 = sbr.rel (%p1198) target = $region329
            $region326: #{text_encoder_forward.1} parent=321 // loop_body
              %v1204 = vld [vmem:[%s1202] sm:%s1195]
              %1205 = vst [vmem:[%s1203] sm:%s1195] %v1204
            $region327: #{text_encoder_forward.1} parent=321 // loop_footer
              %s1201 = sadd.s32 1, %s1197
            $region328: #{text_encoder_forward.1} parent=321 // loop_footer_branch
              %1196 = sbr.rel target = $region324
            $region329: #{text_encoder_forward.1} parent=321 // loop_exit
              _
          $region322: #{text_encoder_forward.1} parent=103 // pred_fallthru
            _
          // Predicated region
          $region341: #{text_encoder_forward.1} parent=103 // pred_check
            _
          $region342: #{text_encoder_forward.1} parent=103 // pred_check_branch
            %1229 = sbr.rel (0) target = $region344
          $region343: #{text_encoder_forward.1} parent=103 // pred_region
            %1230 = vsyncadd %s1186, 16
          $region344: #{text_encoder_forward.1} parent=103 // pred_fallthru
            _
          %s1231 = smul.u32 1, 1
          %s1232 = sshll.u32 %s1231, 4
          %1233 = dma.done [#allocation3], %s1232
          %s1234 = sshll.u32 %s1231, 4
          %1235 = dma.done %s892, %s1234
          %s1236 = sshll.u32 %s1231, 4
          %1237 = dma.done %s941, %s1236
          %s1238 = sshll.u32 %s1231, 4
          %1239 = dma.done %s990, %s1238
          %s1240 = sshll.u32 %s1231, 4
          %1241 = dma.done %s1039, %s1240
          %s1242 = sshll.u32 %s1231, 4
          %1243 = dma.done %s1088, %s1242
          %s1244 = sshll.u32 %s1231, 4
          %1245 = dma.done %s1137, %s1244
          %s1246 = sshll.u32 %s1231, 4
          %1247 = dma.done %s1186, %s1246
          %v1248 = vld [vmem:[#allocation2] sm:$0xff]
          %v1249 = vld [vmem:[%s3] sm:$0xff]
          %v1250 = vadd.f32 %v1248, %v1249
          %v1251 = vld [vmem:[%s4] sm:$0x1]
          %v1252 = vld [vmem:[%s5] sm:$0x1]
          %vm1253 = vcmask 261120
          %v1254 = vsel %vm1253, %v1250, 0.0
          %1255 = vadd.xlane.f32.xlu0 %v1254
          %v1256 = vpop.xlane.xlu0 %1255
          %v1257 = vrcp.pop 32.0
          %v1258 = vmul.f32 %v1256, %v1257
          %v1259 = vsub.f32 %v1250, %v1258
          %v1260 = vmul.f32 %v1259, %v1259
          %v1261 = vsel %vm1253, %v1260, 0.0
          %1262 = vadd.xlane.f32.xlu0 %v1261
          %v1263 = vpop.xlane.xlu0 %1262
          %v1264 = vmul.f32 %v1263, %v1257
          %v1265 = vadd.f32 %v1264, 1e-12
          %v1266 = vrsqrt.pop %v1265
          %v1267 = vmul.f32 %v1259, %v1266
          %v1269 = vlaneseq
          %v1270 = vshrl.u32 %v1269, 7
          %v1271 = vsub.s32 0, %v1270
          %v1272 = vrot.slane %v1251, %v1271
          %v1274 = vmul.f32 %v1267, %v1272
          %v1276 = vlaneseq
          %v1277 = vshrl.u32 %v1276, 7
          %v1278 = vsub.s32 0, %v1277
          %v1279 = vrot.slane %v1252, %v1278
          %v1281 = vadd.f32 %v1274, %v1279
          %1282 = vst.msk [vmem:[#allocation2] sm:$0xff] %vm1253, %v1281
        $region104: #{text_encoder_forward.1} parent=99 // pred_fallthru
          _
        %v1283 = vld [vmem:[#allocation2] sm:$0xff]
        %v1284 = vpack.c.bf16 %v1283, %v1283
        %v1285 = vld [vmem:[%s795] sm:$0xf]
        %v1286 = vld [vmem:[%s795 + $0x4] sm:$0xf]
        %v1287 = vld [vmem:[%s795 + $0x8] sm:$0xf]
        %v1288 = vld [vmem:[%s795 + $0xc] sm:$0xf]
        %v1289 = vld [vmem:[%s799] sm:$0x1]
        %v1291 = vlaneseq
        %v1292 = vshrl.u32 %v1291, 7
        %v1293 = vsub.s32 0, %v1292
        %v1294 = vrot.slane %v1289, %v1293
        %v1300 = vunpack.c.l.b16 %v1285
        %v1301 = vunpack.c.l.b16 %v1286
        %v1302 = vunpack.c.l.b16 %v1287
        %v1303 = vunpack.c.l.b16 %v1288
        %v1304 = vpack.c.b16 %v1301, %v1300
        %v1305 = vpack.c.b16 %v1303, %v1302
        %vm1308 = vcmask 261120
        %v1310 = vsel %vm1308, %v1284, 0
        %1312 = vmatprep.subr.bf16.mxu0 0
        %1313 = vmatpush1.bf16.msra.mxu0 %v1304
        %1314 = vmatprep.subr.bf16.mxu0 0
        %1315 = vmatpush1.bf16.msra.mxu0 %v1305
        %1316 = vmatprep.subr.bf16.mxu0 0
        %1317 = vmatpush1.bf16.msra.mxu0 0
        %1318 = vmatprep.subr.bf16.mxu0 0
        %1319 = vmatpush1.bf16.msra.mxu0 0
        %1320 = vmatprep.subr.bf16.mxu0 0
        %1321 = vmatpush1.bf16.msra.mxu0 0
        %1322 = vmatprep.subr.bf16.mxu0 0
        %1323 = vmatpush1.bf16.msra.mxu0 0
        %1324 = vmatprep.subr.bf16.mxu0 0
        %1325 = vmatpush1.bf16.msra.mxu0 0
        %1326 = vmatprep.subr.bf16.mxu0 0
        %1327 = vmatpush1.bf16.msra.mxu0 0
        %1328 = vmatprep.subr.bf16.mxu0 0
        %1329 = vmatpush1.bf16.msra.mxu0 0
        %1330 = vmatprep.subr.bf16.mxu0 0
        %1331 = vmatpush1.bf16.msra.mxu0 0
        %1332 = vmatprep.subr.bf16.mxu0 0
        %1333 = vmatpush1.bf16.msra.mxu0 0
        %1334 = vmatprep.subr.bf16.mxu0 0
        %1335 = vmatpush1.bf16.msra.mxu0 0
        %1336 = vmatprep.subr.bf16.mxu0 0
        %1337 = vmatpush1.bf16.msra.mxu0 0
        %1338 = vmatprep.subr.bf16.mxu0 0
        %1339 = vmatpush1.bf16.msra.mxu0 0
        %1340 = vmatprep.subr.bf16.mxu0 0
        %1341 = vmatpush1.bf16.msra.mxu0 0
        %1342 = vmatprep.subr.bf16.mxu0 0
        %1343 = vmatpush1.bf16.msra.mxu0 0
        %1344 = vmatprep.mubr.bf16.mxu0 0
        %1345 = vmatmul.mubr.bf16.gmra.mrb[0].mxu0 %v1310
        %v1346 = vpop.f32.mrb[0].mxu0
        %v1347 = vadd.f32 %v1294, %v1346
        %v1348 = vpop.f32.mrb[0].mxu0
        %v1349 = vpop.f32.mrb[0].mxu0
        %v1350 = vpop.f32.mrb[0].mxu0
        %1351 = vdwg.mxu0
        %s1352 = scalar_lea.vmem %s795, 16
        %v1353 = vld [vmem:[%s1352] sm:$0xf]
        %v1354 = vld [vmem:[%s1352 + $0x4] sm:$0xf]
        %v1355 = vld [vmem:[%s1352 + $0x8] sm:$0xf]
        %v1356 = vld [vmem:[%s1352 + $0xc] sm:$0xf]
        %s1357 = scalar_lea.vmem %s799, 1
        %v1358 = vld [vmem:[%s1357] sm:$0x1]
        %v1360 = vlaneseq
        %v1361 = vshrl.u32 %v1360, 7
        %v1362 = vsub.s32 0, %v1361
        %v1363 = vrot.slane %v1358, %v1362
        %v1369 = vunpack.c.l.b16 %v1353
        %v1370 = vunpack.c.l.b16 %v1354
        %v1371 = vunpack.c.l.b16 %v1355
        %v1372 = vunpack.c.l.b16 %v1356
        %v1373 = vpack.c.b16 %v1370, %v1369
        %v1374 = vpack.c.b16 %v1372, %v1371
        %1377 = vmatprep.subr.bf16.mxu0 0
        %1378 = vmatpush1.bf16.msra.mxu0 %v1373
        %1379 = vmatprep.subr.bf16.mxu0 0
        %1380 = vmatpush1.bf16.msra.mxu0 %v1374
        %1381 = vmatprep.subr.bf16.mxu0 0
        %1382 = vmatpush1.bf16.msra.mxu0 0
        %1383 = vmatprep.subr.bf16.mxu0 0
        %1384 = vmatpush1.bf16.msra.mxu0 0
        %1385 = vmatprep.subr.bf16.mxu0 0
        %1386 = vmatpush1.bf16.msra.mxu0 0
        %1387 = vmatprep.subr.bf16.mxu0 0
        %1388 = vmatpush1.bf16.msra.mxu0 0
        %1389 = vmatprep.subr.bf16.mxu0 0
        %1390 = vmatpush1.bf16.msra.mxu0 0
        %1391 = vmatprep.subr.bf16.mxu0 0
        %1392 = vmatpush1.bf16.msra.mxu0 0
        %1393 = vmatprep.subr.bf16.mxu0 0
        %1394 = vmatpush1.bf16.msra.mxu0 0
        %1395 = vmatprep.subr.bf16.mxu0 0
        %1396 = vmatpush1.bf16.msra.mxu0 0
        %1397 = vmatprep.subr.bf16.mxu0 0
        %1398 = vmatpush1.bf16.msra.mxu0 0
        %1399 = vmatprep.subr.bf16.mxu0 0
        %1400 = vmatpush1.bf16.msra.mxu0 0
        %1401 = vmatprep.subr.bf16.mxu0 0
        %1402 = vmatpush1.bf16.msra.mxu0 0
        %1403 = vmatprep.subr.bf16.mxu0 0
        %1404 = vmatpush1.bf16.msra.mxu0 0
        %1405 = vmatprep.subr.bf16.mxu0 0
        %1406 = vmatpush1.bf16.msra.mxu0 0
        %1407 = vmatprep.subr.bf16.mxu0 0
        %1408 = vmatpush1.bf16.msra.mxu0 0
        %1409 = vmatprep.mubr.bf16.mxu0 0
        %1410 = vmatmul.mubr.bf16.gmra.mrb[0].mxu0 %v1310
        %v1411 = vpop.f32.mrb[0].mxu0
        %v1412 = vadd.f32 %v1363, %v1411
        %v1413 = vpop.f32.mrb[0].mxu0
        %v1414 = vpop.f32.mrb[0].mxu0
        %v1415 = vpop.f32.mrb[0].mxu0
        %1416 = vdwg.mxu0
        %s1417 = scalar_lea.vmem %s795, 32
        %v1418 = vld [vmem:[%s1417] sm:$0xf]
        %v1419 = vld [vmem:[%s1417 + $0x4] sm:$0xf]
        %v1420 = vld [vmem:[%s1417 + $0x8] sm:$0xf]
        %v1421 = vld [vmem:[%s1417 + $0xc] sm:$0xf]
        %s1422 = scalar_lea.vmem %s799, 2
        %v1423 = vld [vmem:[%s1422] sm:$0x1]
        %v1425 = vlaneseq
        %v1426 = vshrl.u32 %v1425, 7
        %v1427 = vsub.s32 0, %v1426
        %v1428 = vrot.slane %v1423, %v1427
        %v1434 = vunpack.c.l.b16 %v1418
        %v1435 = vunpack.c.l.b16 %v1419
        %v1436 = vunpack.c.l.b16 %v1420
        %v1437 = vunpack.c.l.b16 %v1421
        %v1438 = vpack.c.b16 %v1435, %v1434
        %v1439 = vpack.c.b16 %v1437, %v1436
        %1442 = vmatprep.subr.bf16.mxu0 0
        %1443 = vmatpush1.bf16.msra.mxu0 %v1438
        %1444 = vmatprep.subr.bf16.mxu0 0
        %1445 = vmatpush1.bf16.msra.mxu0 %v1439
        %1446 = vmatprep.subr.bf16.mxu0 0
        %1447 = vmatpush1.bf16.msra.mxu0 0
        %1448 = vmatprep.subr.bf16.mxu0 0
        %1449 = vmatpush1.bf16.msra.mxu0 0
        %1450 = vmatprep.subr.bf16.mxu0 0
        %1451 = vmatpush1.bf16.msra.mxu0 0
        %1452 = vmatprep.subr.bf16.mxu0 0
        %1453 = vmatpush1.bf16.msra.mxu0 0
        %1454 = vmatprep.subr.bf16.mxu0 0
        %1455 = vmatpush1.bf16.msra.mxu0 0
        %1456 = vmatprep.subr.bf16.mxu0 0
        %1457 = vmatpush1.bf16.msra.mxu0 0
        %1458 = vmatprep.subr.bf16.mxu0 0
        %1459 = vmatpush1.bf16.msra.mxu0 0
        %1460 = vmatprep.subr.bf16.mxu0 0
        %1461 = vmatpush1.bf16.msra.mxu0 0
        %1462 = vmatprep.subr.bf16.mxu0 0
        %1463 = vmatpush1.bf16.msra.mxu0 0
        %1464 = vmatprep.subr.bf16.mxu0 0
        %1465 = vmatpush1.bf16.msra.mxu0 0
        %1466 = vmatprep.subr.bf16.mxu0 0
        %1467 = vmatpush1.bf16.msra.mxu0 0
        %1468 = vmatprep.subr.bf16.mxu0 0
        %1469 = vmatpush1.bf16.msra.mxu0 0
        %1470 = vmatprep.subr.bf16.mxu0 0
        %1471 = vmatpush1.bf16.msra.mxu0 0
        %1472 = vmatprep.subr.bf16.mxu0 0
        %1473 = vmatpush1.bf16.msra.mxu0 0
        %1474 = vmatprep.mubr.bf16.mxu0 0
        %1475 = vmatmul.mubr.bf16.gmra.mrb[0].mxu0 %v1310
        %v1476 = vpop.f32.mrb[0].mxu0
        %v1477 = vadd.f32 %v1428, %v1476
        %v1478 = vpop.f32.mrb[0].mxu0
        %v1479 = vpop.f32.mrb[0].mxu0
        %v1480 = vpop.f32.mrb[0].mxu0
        %1481 = vdwg.mxu0
        %1483 = vrot.lane.b32.xlu0 %v1347, 120
        %v1484 = vpop.permute.xlu0 %1483
        %1486 = vrot.lane.b32.xlu0 %v1347, 112
        %v1487 = vpop.permute.xlu0 %1486
        %1489 = vrot.lane.b32.xlu0 %v1347, 104
        %v1490 = vpop.permute.xlu0 %1489
        %v1492 = vcombine.low %v1347, %v1487
        %v1493 = vcombine.high %v1347, %v1487
        %v1495 = vunpack.c.l.s4 1983009808
        %v1496 = vunpack.c.0.s8 %v1495
        %v1497 = vlaneseq
        %v1498 = vshrl.u32 %v1497, 7
        %v1499 = vsub.s32 %v1496, %v1498
        %v1500 = vrot.slane %v1492, %v1499
        %v1502 = vunpack.c.l.s4 1983009808
        %v1503 = vunpack.c.0.s8 %v1502
        %v1504 = vlaneseq
        %v1505 = vshrl.u32 %v1504, 7
        %v1506 = vsub.s32 %v1503, %v1505
        %v1507 = vrot.slane %v1493, %v1506
        %v1508 = vcombine.low %v1484, %v1490
        %v1509 = vcombine.high %v1484, %v1490
        %v1511 = vunpack.c.l.s4 1983009808
        %v1512 = vunpack.c.0.s8 %v1511
        %v1513 = vlaneseq
        %v1514 = vshrl.u32 %v1513, 7
        %v1515 = vsub.s32 %v1512, %v1514
        %v1516 = vrot.slane %v1508, %v1515
        %v1518 = vunpack.c.l.s4 1983009808
        %v1519 = vunpack.c.0.s8 %v1518
        %v1520 = vlaneseq
        %v1521 = vshrl.u32 %v1520, 7
        %v1522 = vsub.s32 %v1519, %v1521
        %v1523 = vrot.slane %v1509, %v1522
        %v1524 = vcombine.low %v1500, %v1516
        %v1525 = vcombine.high %v1500, %v1516
        %v1527 = vunpack.c.l.s4 1934713408
        %v1528 = vunpack.c.0.s8 %v1527
        %v1529 = vlaneseq
        %v1530 = vshrl.u32 %v1529, 7
        %v1531 = vsub.s32 %v1528, %v1530
        %v1532 = vrot.slane %v1524, %v1531
        %v1534 = vunpack.c.l.s4 1934713408
        %v1535 = vunpack.c.0.s8 %v1534
        %v1536 = vlaneseq
        %v1537 = vshrl.u32 %v1536, 7
        %v1538 = vsub.s32 %v1535, %v1537
        %v1539 = vrot.slane %v1525, %v1538
        %v1540 = vcombine.low %v1507, %v1523
        %v1541 = vcombine.high %v1507, %v1523
        %v1543 = vunpack.c.l.s4 1934713408
        %v1544 = vunpack.c.0.s8 %v1543
        %v1545 = vlaneseq
        %v1546 = vshrl.u32 %v1545, 7
        %v1547 = vsub.s32 %v1544, %v1546
        %v1548 = vrot.slane %v1540, %v1547
        %v1550 = vunpack.c.l.s4 1934713408
        %v1551 = vunpack.c.0.s8 %v1550
        %v1552 = vlaneseq
        %v1553 = vshrl.u32 %v1552, 7
        %v1554 = vsub.s32 %v1551, %v1553
        %v1555 = vrot.slane %v1541, %v1554
        %v1556 = vcombine.high %v1532, 0.0
        %v1557 = vcombine.high %v1539, 0.0
        %v1558 = vcombine.high %v1548, 0.0
        %v1559 = vcombine.high %v1555, 0.0
        %v1560 = vcombine.low %v1532, %v1539
        %v1562 = vunpack.c.l.s4 1983009808
        %v1563 = vunpack.c.0.s8 %v1562
        %v1564 = vlaneseq
        %v1565 = vshrl.u32 %v1564, 7
        %v1566 = vsub.s32 %v1563, %v1565
        %v1567 = vrot.slane %v1560, %v1566
        %v1568 = vcombine.low %v1556, %v1557
        %v1570 = vunpack.c.l.s4 1983009808
        %v1571 = vunpack.c.0.s8 %v1570
        %v1572 = vlaneseq
        %v1573 = vshrl.u32 %v1572, 7
        %v1574 = vsub.s32 %v1571, %v1573
        %v1575 = vrot.slane %v1568, %v1574
        %v1576 = vcombine.low %v1548, %v1555
        %v1578 = vunpack.c.l.s4 1983009808
        %v1579 = vunpack.c.0.s8 %v1578
        %v1580 = vlaneseq
        %v1581 = vshrl.u32 %v1580, 7
        %v1582 = vsub.s32 %v1579, %v1581
        %v1583 = vrot.slane %v1576, %v1582
        %v1584 = vcombine.low %v1558, %v1559
        %v1586 = vunpack.c.l.s4 1983009808
        %v1587 = vunpack.c.0.s8 %v1586
        %v1588 = vlaneseq
        %v1589 = vshrl.u32 %v1588, 7
        %v1590 = vsub.s32 %v1587, %v1589
        %v1591 = vrot.slane %v1584, %v1590
        %v1592 = vcombine.low %v1567, %v1575
        %v1593 = vcombine.high %v1567, %v1575
        %v1595 = vunpack.c.l.s4 1934713408
        %v1596 = vunpack.c.0.s8 %v1595
        %v1597 = vlaneseq
        %v1598 = vshrl.u32 %v1597, 7
        %v1599 = vsub.s32 %v1596, %v1598
        %v1600 = vrot.slane %v1592, %v1599
        %v1602 = vunpack.c.l.s4 1934713408
        %v1603 = vunpack.c.0.s8 %v1602
        %v1604 = vlaneseq
        %v1605 = vshrl.u32 %v1604, 7
        %v1606 = vsub.s32 %v1603, %v1605
        %v1607 = vrot.slane %v1593, %v1606
        %v1608 = vcombine.low %v1583, %v1591
        %v1609 = vcombine.high %v1583, %v1591
        %v1611 = vunpack.c.l.s4 1934713408
        %v1612 = vunpack.c.0.s8 %v1611
        %v1613 = vlaneseq
        %v1614 = vshrl.u32 %v1613, 7
        %v1615 = vsub.s32 %v1612, %v1614
        %v1616 = vrot.slane %v1608, %v1615
        %v1618 = vunpack.c.l.s4 1934713408
        %v1619 = vunpack.c.0.s8 %v1618
        %v1620 = vlaneseq
        %v1621 = vshrl.u32 %v1620, 7
        %v1622 = vsub.s32 %v1619, %v1621
        %v1623 = vrot.slane %v1609, %v1622
        %v1624 = vcombine.low %v1600, %v1616
        %v1625 = vcombine.high %v1600, %v1616
        %v1626 = vcombine.low %v1607, %v1623
        %v1627 = vcombine.high %v1607, %v1623
        %1629 = vrot.lane.b32.xlu0 %v1412, 120
        %v1630 = vpop.permute.xlu0 %1629
        %1632 = vrot.lane.b32.xlu0 %v1412, 112
        %v1633 = vpop.permute.xlu0 %1632
        %1635 = vrot.lane.b32.xlu0 %v1412, 104
        %v1636 = vpop.permute.xlu0 %1635
        %v1638 = vcombine.low %v1412, %v1633
        %v1639 = vcombine.high %v1412, %v1633
        %v1641 = vunpack.c.l.s4 1983009808
        %v1642 = vunpack.c.0.s8 %v1641
        %v1643 = vlaneseq
        %v1644 = vshrl.u32 %v1643, 7
        %v1645 = vsub.s32 %v1642, %v1644
        %v1646 = vrot.slane %v1638, %v1645
        %v1648 = vunpack.c.l.s4 1983009808
        %v1649 = vunpack.c.0.s8 %v1648
        %v1650 = vlaneseq
        %v1651 = vshrl.u32 %v1650, 7
        %v1652 = vsub.s32 %v1649, %v1651
        %v1653 = vrot.slane %v1639, %v1652
        %v1654 = vcombine.low %v1630, %v1636
        %v1655 = vcombine.high %v1630, %v1636
        %v1657 = vunpack.c.l.s4 1983009808
        %v1658 = vunpack.c.0.s8 %v1657
        %v1659 = vlaneseq
        %v1660 = vshrl.u32 %v1659, 7
        %v1661 = vsub.s32 %v1658, %v1660
        %v1662 = vrot.slane %v1654, %v1661
        %v1664 = vunpack.c.l.s4 1983009808
        %v1665 = vunpack.c.0.s8 %v1664
        %v1666 = vlaneseq
        %v1667 = vshrl.u32 %v1666, 7
        %v1668 = vsub.s32 %v1665, %v1667
        %v1669 = vrot.slane %v1655, %v1668
        %v1670 = vcombine.low %v1646, %v1662
        %v1671 = vcombine.high %v1646, %v1662
        %v1673 = vunpack.c.l.s4 1934713408
        %v1674 = vunpack.c.0.s8 %v1673
        %v1675 = vlaneseq
        %v1676 = vshrl.u32 %v1675, 7
        %v1677 = vsub.s32 %v1674, %v1676
        %v1678 = vrot.slane %v1670, %v1677
        %v1680 = vunpack.c.l.s4 1934713408
        %v1681 = vunpack.c.0.s8 %v1680
        %v1682 = vlaneseq
        %v1683 = vshrl.u32 %v1682, 7
        %v1684 = vsub.s32 %v1681, %v1683
        %v1685 = vrot.slane %v1671, %v1684
        %v1686 = vcombine.low %v1653, %v1669
        %v1687 = vcombine.high %v1653, %v1669
        %v1689 = vunpack.c.l.s4 1934713408
        %v1690 = vunpack.c.0.s8 %v1689
        %v1691 = vlaneseq
        %v1692 = vshrl.u32 %v1691, 7
        %v1693 = vsub.s32 %v1690, %v1692
        %v1694 = vrot.slane %v1686, %v1693
        %v1696 = vunpack.c.l.s4 1934713408
        %v1697 = vunpack.c.0.s8 %v1696
        %v1698 = vlaneseq
        %v1699 = vshrl.u32 %v1698, 7
        %v1700 = vsub.s32 %v1697, %v1699
        %v1701 = vrot.slane %v1687, %v1700
        %v1702 = vcombine.high %v1678, 0.0
        %v1703 = vcombine.high %v1685, 0.0
        %v1704 = vcombine.high %v1694, 0.0
        %v1705 = vcombine.high %v1701, 0.0
        %v1706 = vcombine.low %v1678, %v1685
        %v1708 = vunpack.c.l.s4 1983009808
        %v1709 = vunpack.c.0.s8 %v1708
        %v1710 = vlaneseq
        %v1711 = vshrl.u32 %v1710, 7
        %v1712 = vsub.s32 %v1709, %v1711
        %v1713 = vrot.slane %v1706, %v1712
        %v1714 = vcombine.low %v1702, %v1703
        %v1716 = vunpack.c.l.s4 1983009808
        %v1717 = vunpack.c.0.s8 %v1716
        %v1718 = vlaneseq
        %v1719 = vshrl.u32 %v1718, 7
        %v1720 = vsub.s32 %v1717, %v1719
        %v1721 = vrot.slane %v1714, %v1720
        %v1722 = vcombine.low %v1694, %v1701
        %v1724 = vunpack.c.l.s4 1983009808
        %v1725 = vunpack.c.0.s8 %v1724
        %v1726 = vlaneseq
        %v1727 = vshrl.u32 %v1726, 7
        %v1728 = vsub.s32 %v1725, %v1727
        %v1729 = vrot.slane %v1722, %v1728
        %v1730 = vcombine.low %v1704, %v1705
        %v1732 = vunpack.c.l.s4 1983009808
        %v1733 = vunpack.c.0.s8 %v1732
        %v1734 = vlaneseq
        %v1735 = vshrl.u32 %v1734, 7
        %v1736 = vsub.s32 %v1733, %v1735
        %v1737 = vrot.slane %v1730, %v1736
        %v1738 = vcombine.low %v1713, %v1721
        %v1739 = vcombine.high %v1713, %v1721
        %v1741 = vunpack.c.l.s4 1934713408
        %v1742 = vunpack.c.0.s8 %v1741
        %v1743 = vlaneseq
        %v1744 = vshrl.u32 %v1743, 7
        %v1745 = vsub.s32 %v1742, %v1744
        %v1746 = vrot.slane %v1738, %v1745
        %v1748 = vunpack.c.l.s4 1934713408
        %v1749 = vunpack.c.0.s8 %v1748
        %v1750 = vlaneseq
        %v1751 = vshrl.u32 %v1750, 7
        %v1752 = vsub.s32 %v1749, %v1751
        %v1753 = vrot.slane %v1739, %v1752
        %v1754 = vcombine.low %v1729, %v1737
        %v1755 = vcombine.high %v1729, %v1737
        %v1757 = vunpack.c.l.s4 1934713408
        %v1758 = vunpack.c.0.s8 %v1757
        %v1759 = vlaneseq
        %v1760 = vshrl.u32 %v1759, 7
        %v1761 = vsub.s32 %v1758, %v1760
        %v1762 = vrot.slane %v1754, %v1761
        %v1764 = vunpack.c.l.s4 1934713408
        %v1765 = vunpack.c.0.s8 %v1764
        %v1766 = vlaneseq
        %v1767 = vshrl.u32 %v1766, 7
        %v1768 = vsub.s32 %v1765, %v1767
        %v1769 = vrot.slane %v1755, %v1768
        %v1770 = vcombine.low %v1746, %v1762
        %v1771 = vcombine.high %v1746, %v1762
        %v1772 = vcombine.low %v1753, %v1769
        %v1773 = vcombine.high %v1753, %v1769
        %1775 = vrot.lane.b32.xlu0 %v1477, 120
        %v1776 = vpop.permute.xlu0 %1775
        %1778 = vrot.lane.b32.xlu0 %v1477, 112
        %v1779 = vpop.permute.xlu0 %1778
        %1781 = vrot.lane.b32.xlu0 %v1477, 104
        %v1782 = vpop.permute.xlu0 %1781
        %v1784 = vcombine.low %v1477, %v1779
        %v1785 = vcombine.high %v1477, %v1779
        %v1787 = vunpack.c.l.s4 1983009808
        %v1788 = vunpack.c.0.s8 %v1787
        %v1789 = vlaneseq
        %v1790 = vshrl.u32 %v1789, 7
        %v1791 = vsub.s32 %v1788, %v1790
        %v1792 = vrot.slane %v1784, %v1791
        %v1794 = vunpack.c.l.s4 1983009808
        %v1795 = vunpack.c.0.s8 %v1794
        %v1796 = vlaneseq
        %v1797 = vshrl.u32 %v1796, 7
        %v1798 = vsub.s32 %v1795, %v1797
        %v1799 = vrot.slane %v1785, %v1798
        %v1800 = vcombine.low %v1776, %v1782
        %v1801 = vcombine.high %v1776, %v1782
        %v1803 = vunpack.c.l.s4 1983009808
        %v1804 = vunpack.c.0.s8 %v1803
        %v1805 = vlaneseq
        %v1806 = vshrl.u32 %v1805, 7
        %v1807 = vsub.s32 %v1804, %v1806
        %v1808 = vrot.slane %v1800, %v1807
        %v1810 = vunpack.c.l.s4 1983009808
        %v1811 = vunpack.c.0.s8 %v1810
        %v1812 = vlaneseq
        %v1813 = vshrl.u32 %v1812, 7
        %v1814 = vsub.s32 %v1811, %v1813
        %v1815 = vrot.slane %v1801, %v1814
        %v1816 = vcombine.low %v1792, %v1808
        %v1817 = vcombine.high %v1792, %v1808
        %v1819 = vunpack.c.l.s4 1934713408
        %v1820 = vunpack.c.0.s8 %v1819
        %v1821 = vlaneseq
        %v1822 = vshrl.u32 %v1821, 7
        %v1823 = vsub.s32 %v1820, %v1822
        %v1824 = vrot.slane %v1816, %v1823
        %v1826 = vunpack.c.l.s4 1934713408
        %v1827 = vunpack.c.0.s8 %v1826
        %v1828 = vlaneseq
        %v1829 = vshrl.u32 %v1828, 7
        %v1830 = vsub.s32 %v1827, %v1829
        %v1831 = vrot.slane %v1817, %v1830
        %v1832 = vcombine.low %v1799, %v1815
        %v1833 = vcombine.high %v1799, %v1815
        %v1835 = vunpack.c.l.s4 1934713408
        %v1836 = vunpack.c.0.s8 %v1835
        %v1837 = vlaneseq
        %v1838 = vshrl.u32 %v1837, 7
        %v1839 = vsub.s32 %v1836, %v1838
        %v1840 = vrot.slane %v1832, %v1839
        %v1842 = vunpack.c.l.s4 1934713408
        %v1843 = vunpack.c.0.s8 %v1842
        %v1844 = vlaneseq
        %v1845 = vshrl.u32 %v1844, 7
        %v1846 = vsub.s32 %v1843, %v1845
        %v1847 = vrot.slane %v1833, %v1846
        %v1848 = vcombine.high %v1824, 0.0
        %v1849 = vcombine.high %v1831, 0.0
        %v1850 = vcombine.high %v1840, 0.0
        %v1851 = vcombine.high %v1847, 0.0
        %v1852 = vcombine.low %v1824, %v1831
        %v1854 = vunpack.c.l.s4 1983009808
        %v1855 = vunpack.c.0.s8 %v1854
        %v1856 = vlaneseq
        %v1857 = vshrl.u32 %v1856, 7
        %v1858 = vsub.s32 %v1855, %v1857
        %v1859 = vrot.slane %v1852, %v1858
        %v1860 = vcombine.low %v1848, %v1849
        %v1862 = vunpack.c.l.s4 1983009808
        %v1863 = vunpack.c.0.s8 %v1862
        %v1864 = vlaneseq
        %v1865 = vshrl.u32 %v1864, 7
        %v1866 = vsub.s32 %v1863, %v1865
        %v1867 = vrot.slane %v1860, %v1866
        %v1868 = vcombine.low %v1840, %v1847
        %v1870 = vunpack.c.l.s4 1983009808
        %v1871 = vunpack.c.0.s8 %v1870
        %v1872 = vlaneseq
        %v1873 = vshrl.u32 %v1872, 7
        %v1874 = vsub.s32 %v1871, %v1873
        %v1875 = vrot.slane %v1868, %v1874
        %v1876 = vcombine.low %v1850, %v1851
        %v1878 = vunpack.c.l.s4 1983009808
        %v1879 = vunpack.c.0.s8 %v1878
        %v1880 = vlaneseq
        %v1881 = vshrl.u32 %v1880, 7
        %v1882 = vsub.s32 %v1879, %v1881
        %v1883 = vrot.slane %v1876, %v1882
        %v1884 = vcombine.low %v1859, %v1867
        %v1885 = vcombine.high %v1859, %v1867
        %v1887 = vunpack.c.l.s4 1934713408
        %v1888 = vunpack.c.0.s8 %v1887
        %v1889 = vlaneseq
        %v1890 = vshrl.u32 %v1889, 7
        %v1891 = vsub.s32 %v1888, %v1890
        %v1892 = vrot.slane %v1884, %v1891
        %v1894 = vunpack.c.l.s4 1934713408
        %v1895 = vunpack.c.0.s8 %v1894
        %v1896 = vlaneseq
        %v1897 = vshrl.u32 %v1896, 7
        %v1898 = vsub.s32 %v1895, %v1897
        %v1899 = vrot.slane %v1885, %v1898
        %v1900 = vcombine.low %v1875, %v1883
        %v1901 = vcombine.high %v1875, %v1883
        %v1903 = vunpack.c.l.s4 1934713408
        %v1904 = vunpack.c.0.s8 %v1903
        %v1905 = vlaneseq
        %v1906 = vshrl.u32 %v1905, 7
        %v1907 = vsub.s32 %v1904, %v1906
        %v1908 = vrot.slane %v1900, %v1907
        %v1910 = vunpack.c.l.s4 1934713408
        %v1911 = vunpack.c.0.s8 %v1910
        %v1912 = vlaneseq
        %v1913 = vshrl.u32 %v1912, 7
        %v1914 = vsub.s32 %v1911, %v1913
        %v1915 = vrot.slane %v1901, %v1914
        %v1916 = vcombine.low %v1892, %v1908
        %v1917 = vcombine.high %v1892, %v1908
        %v1918 = vcombine.low %v1899, %v1915
        %v1919 = vcombine.high %v1899, %v1915
        %vm1920 = vcmask 64512
        %v1922 = vsel %vm1920, %v1624, 0
        %v1925 = vsel %vm1920, %v1770, 0
        %1927 = vmatprep.subr.mxu0 0.0
        %1928 = vmatpush1.xpose.msra.mxu0 %v1925
        %1929 = vmatprep.subr.mxu0 0.0
        %1930 = vmatpush1.xpose.msra.mxu0 0.0
        %1931 = vmatprep.subr.mxu0 0.0
        %1932 = vmatpush1.xpose.msra.mxu0 0.0
        %1933 = vmatprep.subr.mxu0 0.0
        %1934 = vmatpush1.xpose.msra.mxu0 0.0
        %1935 = vmatprep.subr.mxu0 0.0
        %1936 = vmatpush1.xpose.msra.mxu0 0.0
        %1937 = vmatprep.subr.mxu0 0.0
        %1938 = vmatpush1.xpose.msra.mxu0 0.0
        %1939 = vmatprep.subr.mxu0 0.0
        %1940 = vmatpush1.xpose.msra.mxu0 0.0
        %1941 = vmatprep.subr.mxu0 0.0
        %1942 = vmatpush1.xpose.msra.mxu0 0.0
        %1943 = vmatprep.subr.mxu0 0.0
        %1944 = vmatpush1.xpose.msra.mxu0 0.0
        %1945 = vmatprep.subr.mxu0 0.0
        %1946 = vmatpush1.xpose.msra.mxu0 0.0
        %1947 = vmatprep.subr.mxu0 0.0
        %1948 = vmatpush1.xpose.msra.mxu0 0.0
        %1949 = vmatprep.subr.mxu0 0.0
        %1950 = vmatpush1.xpose.msra.mxu0 0.0
        %1951 = vmatprep.subr.mxu0 0.0
        %1952 = vmatpush1.xpose.msra.mxu0 0.0
        %1953 = vmatprep.subr.mxu0 0.0
        %1954 = vmatpush1.xpose.msra.mxu0 0.0
        %1955 = vmatprep.subr.mxu0 0.0
        %1956 = vmatpush1.xpose.msra.mxu0 0.0
        %1957 = vmatprep.subr.mxu0 0.0
        %1958 = vmatpush1.xpose.msra.mxu0 0.0
        %1959 = vmatprep.subr.mxu0 0.0
        %1960 = vmatpush1.xpose.msra.mxu0 0.0
        %1961 = vmatprep.subr.mxu0 0.0
        %1962 = vmatpush1.xpose.msra.mxu0 0.0
        %1963 = vmatprep.subr.mxu0 0.0
        %1964 = vmatpush1.xpose.msra.mxu0 0.0
        %1965 = vmatprep.subr.mxu0 0.0
        %1966 = vmatpush1.xpose.msra.mxu0 0.0
        %1967 = vmatprep.subr.mxu0 0.0
        %1968 = vmatpush1.xpose.msra.mxu0 0.0
        %1969 = vmatprep.subr.mxu0 0.0
        %1970 = vmatpush1.xpose.msra.mxu0 0.0
        %1971 = vmatprep.subr.mxu0 0.0
        %1972 = vmatpush1.xpose.msra.mxu0 0.0
        %1973 = vmatprep.subr.mxu0 0.0
        %1974 = vmatpush1.xpose.msra.mxu0 0.0
        %1975 = vmatprep.subr.mxu0 0.0
        %1976 = vmatpush1.xpose.msra.mxu0 0.0
        %1977 = vmatprep.subr.mxu0 0.0
        %1978 = vmatpush1.xpose.msra.mxu0 0.0
        %1979 = vmatprep.subr.mxu0 0.0
        %1980 = vmatpush1.xpose.msra.mxu0 0.0
        %1981 = vmatprep.subr.mxu0 0.0
        %1982 = vmatpush1.xpose.msra.mxu0 0.0
        %1983 = vmatprep.subr.mxu0 0.0
        %1984 = vmatpush1.xpose.msra.mxu0 0.0
        %1985 = vmatprep.subr.mxu0 0.0
        %1986 = vmatpush1.xpose.msra.mxu0 0.0
        %1987 = vmatprep.subr.mxu0 0.0
        %1988 = vmatpush1.xpose.msra.mxu0 0.0
        %1989 = vmatprep.subr.mxu0 0.0
        %1990 = vmatpush1.xpose.msra.mxu0 0.0
        %1991 = vmatprep.mubr.f32.mxu0 0.0
        %1992 = vmatmul.mubr.f32.gmra.mrb[0].mxu0 %v1922
        %v1993 = vpop.f32.mrb[0].mxu0
        %v1994 = vadd.f32 0.0, %v1993
        %v1995 = vpop.f32.mrb[0].mxu0
        %1996 = vdwg.mxu0
        %v1998 = vsel %vm1920, %v1625, 0
        %v2001 = vsel %vm1920, %v1771, 0
        %2003 = vmatprep.subr.mxu0 0.0
        %2004 = vmatpush1.xpose.msra.mxu0 %v2001
        %2005 = vmatprep.subr.mxu0 0.0
        %2006 = vmatpush1.xpose.msra.mxu0 0.0
        %2007 = vmatprep.subr.mxu0 0.0
        %2008 = vmatpush1.xpose.msra.mxu0 0.0
        %2009 = vmatprep.subr.mxu0 0.0
        %2010 = vmatpush1.xpose.msra.mxu0 0.0
        %2011 = vmatprep.subr.mxu0 0.0
        %2012 = vmatpush1.xpose.msra.mxu0 0.0
        %2013 = vmatprep.subr.mxu0 0.0
        %2014 = vmatpush1.xpose.msra.mxu0 0.0
        %2015 = vmatprep.subr.mxu0 0.0
        %2016 = vmatpush1.xpose.msra.mxu0 0.0
        %2017 = vmatprep.subr.mxu0 0.0
        %2018 = vmatpush1.xpose.msra.mxu0 0.0
        %2019 = vmatprep.subr.mxu0 0.0
        %2020 = vmatpush1.xpose.msra.mxu0 0.0
        %2021 = vmatprep.subr.mxu0 0.0
        %2022 = vmatpush1.xpose.msra.mxu0 0.0
        %2023 = vmatprep.subr.mxu0 0.0
        %2024 = vmatpush1.xpose.msra.mxu0 0.0
        %2025 = vmatprep.subr.mxu0 0.0
        %2026 = vmatpush1.xpose.msra.mxu0 0.0
        %2027 = vmatprep.subr.mxu0 0.0
        %2028 = vmatpush1.xpose.msra.mxu0 0.0
        %2029 = vmatprep.subr.mxu0 0.0
        %2030 = vmatpush1.xpose.msra.mxu0 0.0
        %2031 = vmatprep.subr.mxu0 0.0
        %2032 = vmatpush1.xpose.msra.mxu0 0.0
        %2033 = vmatprep.subr.mxu0 0.0
        %2034 = vmatpush1.xpose.msra.mxu0 0.0
        %2035 = vmatprep.subr.mxu0 0.0
        %2036 = vmatpush1.xpose.msra.mxu0 0.0
        %2037 = vmatprep.subr.mxu0 0.0
        %2038 = vmatpush1.xpose.msra.mxu0 0.0
        %2039 = vmatprep.subr.mxu0 0.0
        %2040 = vmatpush1.xpose.msra.mxu0 0.0
        %2041 = vmatprep.subr.mxu0 0.0
        %2042 = vmatpush1.xpose.msra.mxu0 0.0
        %2043 = vmatprep.subr.mxu0 0.0
        %2044 = vmatpush1.xpose.msra.mxu0 0.0
        %2045 = vmatprep.subr.mxu0 0.0
        %2046 = vmatpush1.xpose.msra.mxu0 0.0
        %2047 = vmatprep.subr.mxu0 0.0
        %2048 = vmatpush1.xpose.msra.mxu0 0.0
        %2049 = vmatprep.subr.mxu0 0.0
        %2050 = vmatpush1.xpose.msra.mxu0 0.0
        %2051 = vmatprep.subr.mxu0 0.0
        %2052 = vmatpush1.xpose.msra.mxu0 0.0
        %2053 = vmatprep.subr.mxu0 0.0
        %2054 = vmatpush1.xpose.msra.mxu0 0.0
        %2055 = vmatprep.subr.mxu0 0.0
        %2056 = vmatpush1.xpose.msra.mxu0 0.0
        %2057 = vmatprep.subr.mxu0 0.0
        %2058 = vmatpush1.xpose.msra.mxu0 0.0
        %2059 = vmatprep.subr.mxu0 0.0
        %2060 = vmatpush1.xpose.msra.mxu0 0.0
        %2061 = vmatprep.subr.mxu0 0.0
        %2062 = vmatpush1.xpose.msra.mxu0 0.0
        %2063 = vmatprep.subr.mxu0 0.0
        %2064 = vmatpush1.xpose.msra.mxu0 0.0
        %2065 = vmatprep.subr.mxu0 0.0
        %2066 = vmatpush1.xpose.msra.mxu0 0.0
        %2067 = vmatprep.mubr.f32.mxu0 0.0
        %2068 = vmatmul.mubr.f32.gmra.mrb[0].mxu0 %v1998
        %v2069 = vpop.f32.mrb[0].mxu0
        %v2070 = vadd.f32 0.0, %v2069
        %v2071 = vpop.f32.mrb[0].mxu0
        %2072 = vdwg.mxu0
        %v2074 = vsel %vm1920, %v1626, 0
        %v2077 = vsel %vm1920, %v1772, 0
        %2079 = vmatprep.subr.mxu0 0.0
        %2080 = vmatpush1.xpose.msra.mxu0 %v2077
        %2081 = vmatprep.subr.mxu0 0.0
        %2082 = vmatpush1.xpose.msra.mxu0 0.0
        %2083 = vmatprep.subr.mxu0 0.0
        %2084 = vmatpush1.xpose.msra.mxu0 0.0
        %2085 = vmatprep.subr.mxu0 0.0
        %2086 = vmatpush1.xpose.msra.mxu0 0.0
        %2087 = vmatprep.subr.mxu0 0.0
        %2088 = vmatpush1.xpose.msra.mxu0 0.0
        %2089 = vmatprep.subr.mxu0 0.0
        %2090 = vmatpush1.xpose.msra.mxu0 0.0
        %2091 = vmatprep.subr.mxu0 0.0
        %2092 = vmatpush1.xpose.msra.mxu0 0.0
        %2093 = vmatprep.subr.mxu0 0.0
        %2094 = vmatpush1.xpose.msra.mxu0 0.0
        %2095 = vmatprep.subr.mxu0 0.0
        %2096 = vmatpush1.xpose.msra.mxu0 0.0
        %2097 = vmatprep.subr.mxu0 0.0
        %2098 = vmatpush1.xpose.msra.mxu0 0.0
        %2099 = vmatprep.subr.mxu0 0.0
        %2100 = vmatpush1.xpose.msra.mxu0 0.0
        %2101 = vmatprep.subr.mxu0 0.0
        %2102 = vmatpush1.xpose.msra.mxu0 0.0
        %2103 = vmatprep.subr.mxu0 0.0
        %2104 = vmatpush1.xpose.msra.mxu0 0.0
        %2105 = vmatprep.subr.mxu0 0.0
        %2106 = vmatpush1.xpose.msra.mxu0 0.0
        %2107 = vmatprep.subr.mxu0 0.0
        %2108 = vmatpush1.xpose.msra.mxu0 0.0
        %2109 = vmatprep.subr.mxu0 0.0
        %2110 = vmatpush1.xpose.msra.mxu0 0.0
        %2111 = vmatprep.subr.mxu0 0.0
        %2112 = vmatpush1.xpose.msra.mxu0 0.0
        %2113 = vmatprep.subr.mxu0 0.0
        %2114 = vmatpush1.xpose.msra.mxu0 0.0
        %2115 = vmatprep.subr.mxu0 0.0
        %2116 = vmatpush1.xpose.msra.mxu0 0.0
        %2117 = vmatprep.subr.mxu0 0.0
        %2118 = vmatpush1.xpose.msra.mxu0 0.0
        %2119 = vmatprep.subr.mxu0 0.0
        %2120 = vmatpush1.xpose.msra.mxu0 0.0
        %2121 = vmatprep.subr.mxu0 0.0
        %2122 = vmatpush1.xpose.msra.mxu0 0.0
        %2123 = vmatprep.subr.mxu0 0.0
        %2124 = vmatpush1.xpose.msra.mxu0 0.0
        %2125 = vmatprep.subr.mxu0 0.0
        %2126 = vmatpush1.xpose.msra.mxu0 0.0
        %2127 = vmatprep.subr.mxu0 0.0
        %2128 = vmatpush1.xpose.msra.mxu0 0.0
        %2129 = vmatprep.subr.mxu0 0.0
        %2130 = vmatpush1.xpose.msra.mxu0 0.0
        %2131 = vmatprep.subr.mxu0 0.0
        %2132 = vmatpush1.xpose.msra.mxu0 0.0
        %2133 = vmatprep.subr.mxu0 0.0
        %2134 = vmatpush1.xpose.msra.mxu0 0.0
        %2135 = vmatprep.subr.mxu0 0.0
        %2136 = vmatpush1.xpose.msra.mxu0 0.0
        %2137 = vmatprep.subr.mxu0 0.0
        %2138 = vmatpush1.xpose.msra.mxu0 0.0
        %2139 = vmatprep.subr.mxu0 0.0
        %2140 = vmatpush1.xpose.msra.mxu0 0.0
        %2141 = vmatprep.subr.mxu0 0.0
        %2142 = vmatpush1.xpose.msra.mxu0 0.0
        %2143 = vmatprep.mubr.f32.mxu0 0.0
        %2144 = vmatmul.mubr.f32.gmra.mrb[0].mxu0 %v2074
        %v2145 = vpop.f32.mrb[0].mxu0
        %v2146 = vadd.f32 0.0, %v2145
        %v2147 = vpop.f32.mrb[0].mxu0
        %2148 = vdwg.mxu0
        %v2150 = vsel %vm1920, %v1627, 0
        %v2153 = vsel %vm1920, %v1773, 0
        %2155 = vmatprep.subr.mxu0 0.0
        %2156 = vmatpush1.xpose.msra.mxu0 %v2153
        %2157 = vmatprep.subr.mxu0 0.0
        %2158 = vmatpush1.xpose.msra.mxu0 0.0
        %2159 = vmatprep.subr.mxu0 0.0
        %2160 = vmatpush1.xpose.msra.mxu0 0.0
        %2161 = vmatprep.subr.mxu0 0.0
        %2162 = vmatpush1.xpose.msra.mxu0 0.0
        %2163 = vmatprep.subr.mxu0 0.0
        %2164 = vmatpush1.xpose.msra.mxu0 0.0
        %2165 = vmatprep.subr.mxu0 0.0
        %2166 = vmatpush1.xpose.msra.mxu0 0.0
        %2167 = vmatprep.subr.mxu0 0.0
        %2168 = vmatpush1.xpose.msra.mxu0 0.0
        %2169 = vmatprep.subr.mxu0 0.0
        %2170 = vmatpush1.xpose.msra.mxu0 0.0
        %2171 = vmatprep.subr.mxu0 0.0
        %2172 = vmatpush1.xpose.msra.mxu0 0.0
        %2173 = vmatprep.subr.mxu0 0.0
        %2174 = vmatpush1.xpose.msra.mxu0 0.0
        %2175 = vmatprep.subr.mxu0 0.0
        %2176 = vmatpush1.xpose.msra.mxu0 0.0
        %2177 = vmatprep.subr.mxu0 0.0
        %2178 = vmatpush1.xpose.msra.mxu0 0.0
        %2179 = vmatprep.subr.mxu0 0.0
        %2180 = vmatpush1.xpose.msra.mxu0 0.0
        %2181 = vmatprep.subr.mxu0 0.0
        %2182 = vmatpush1.xpose.msra.mxu0 0.0
        %2183 = vmatprep.subr.mxu0 0.0
        %2184 = vmatpush1.xpose.msra.mxu0 0.0
        %2185 = vmatprep.subr.mxu0 0.0
        %2186 = vmatpush1.xpose.msra.mxu0 0.0
        %2187 = vmatprep.subr.mxu0 0.0
        %2188 = vmatpush1.xpose.msra.mxu0 0.0
        %2189 = vmatprep.subr.mxu0 0.0
        %2190 = vmatpush1.xpose.msra.mxu0 0.0
        %2191 = vmatprep.subr.mxu0 0.0
        %2192 = vmatpush1.xpose.msra.mxu0 0.0
        %2193 = vmatprep.subr.mxu0 0.0
        %2194 = vmatpush1.xpose.msra.mxu0 0.0
        %2195 = vmatprep.subr.mxu0 0.0
        %2196 = vmatpush1.xpose.msra.mxu0 0.0
        %2197 = vmatprep.subr.mxu0 0.0
        %2198 = vmatpush1.xpose.msra.mxu0 0.0
        %2199 = vmatprep.subr.mxu0 0.0
        %2200 = vmatpush1.xpose.msra.mxu0 0.0
        %2201 = vmatprep.subr.mxu0 0.0
        %2202 = vmatpush1.xpose.msra.mxu0 0.0
        %2203 = vmatprep.subr.mxu0 0.0
        %2204 = vmatpush1.xpose.msra.mxu0 0.0
        %2205 = vmatprep.subr.mxu0 0.0
        %2206 = vmatpush1.xpose.msra.mxu0 0.0
        %2207 = vmatprep.subr.mxu0 0.0
        %2208 = vmatpush1.xpose.msra.mxu0 0.0
        %2209 = vmatprep.subr.mxu0 0.0
        %2210 = vmatpush1.xpose.msra.mxu0 0.0
        %2211 = vmatprep.subr.mxu0 0.0
        %2212 = vmatpush1.xpose.msra.mxu0 0.0
        %2213 = vmatprep.subr.mxu0 0.0
        %2214 = vmatpush1.xpose.msra.mxu0 0.0
        %2215 = vmatprep.subr.mxu0 0.0
        %2216 = vmatpush1.xpose.msra.mxu0 0.0
        %2217 = vmatprep.subr.mxu0 0.0
        %2218 = vmatpush1.xpose.msra.mxu0 0.0
        %2219 = vmatprep.mubr.f32.mxu0 0.0
        %2220 = vmatmul.mubr.f32.gmra.mrb[0].mxu0 %v2150
        %v2221 = vpop.f32.mrb[0].mxu0
        %v2222 = vadd.f32 0.0, %v2221
        %v2223 = vpop.f32.mrb[0].mxu0
        %2224 = vdwg.mxu0
        %v2225 = vmul.f32 %v1994, 0.35355338
        %v2226 = vmul.f32 %v2070, 0.35355338
        %v2227 = vmul.f32 %v2146, 0.35355338
        %v2228 = vmul.f32 %v2222, 0.35355338
        %v2229 = vld [vmem:[%s790] sm:$0x1]
        %v2231 = vlaneseq
        %v2232 = vshrl.u32 %v2231, 7
        %v2233 = vsub.s32 0, %v2232
        %v2234 = vrot.slane %v2229, %v2233
        %v2236 = vadd.f32 %v2225, %v2234
        %v2237 = vadd.f32 %v2226, %v2234
        %v2238 = vadd.f32 %v2227, %v2234
        %v2239 = vadd.f32 %v2228, %v2234
        %v2240 = vsel %vm1920, %v2236, -inf
        %2241 = vmax.xlane.f32.xlu0 %v2240
        %v2242 = vpop.xlane.xlu0 %2241
        %v2243 = vsel %vm1920, %v2237, -inf
        %2244 = vmax.xlane.f32.xlu0 %v2243
        %v2245 = vpop.xlane.xlu0 %2244
        %v2246 = vsel %vm1920, %v2238, -inf
        %2247 = vmax.xlane.f32.xlu0 %v2246
        %v2248 = vpop.xlane.xlu0 %2247
        %v2249 = vsel %vm1920, %v2239, -inf
        %2250 = vmax.xlane.f32.xlu0 %v2249
        %v2251 = vpop.xlane.xlu0 %2250
        %v2252 = vsub.f32 %v2236, %v2242
        %v2253 = vsub.f32 %v2237, %v2245
        %v2254 = vsub.f32 %v2238, %v2248
        %v2255 = vsub.f32 %v2239, %v2251
        %v2256 = vmul.f32 %v2252, 1.442695
        %v2257 = vpow.pop %v2256
        %v2258 = vmul.f32 %v2253, 1.442695
        %v2259 = vpow.pop %v2258
        %v2260 = vmul.f32 %v2254, 1.442695
        %v2261 = vpow.pop %v2260
        %v2262 = vmul.f32 %v2255, 1.442695
        %v2263 = vpow.pop %v2262
        %v2264 = vsel %vm1920, %v2257, 0.0
        %2265 = vadd.xlane.f32.xlu0 %v2264
        %v2266 = vpop.xlane.xlu0 %2265
        %v2267 = vsel %vm1920, %v2259, 0.0
        %2268 = vadd.xlane.f32.xlu0 %v2267
        %v2269 = vpop.xlane.xlu0 %2268
        %v2270 = vsel %vm1920, %v2261, 0.0
        %2271 = vadd.xlane.f32.xlu0 %v2270
        %v2272 = vpop.xlane.xlu0 %2271
        %v2273 = vsel %vm1920, %v2263, 0.0
        %2274 = vadd.xlane.f32.xlu0 %v2273
        %v2275 = vpop.xlane.xlu0 %2274
        %v2276 = vrcp.pop %v2266
        %v2277 = vrcp.pop %v2269
        %v2278 = vrcp.pop %v2272
        %v2279 = vrcp.pop %v2275
        %v2280 = vmul.f32 %v2257, %v2276
        %v2281 = vmul.f32 %v2259, %v2277
        %v2282 = vmul.f32 %v2261, %v2278
        %v2283 = vmul.f32 %v2263, %v2279
        %v2285 = vsel %vm1920, %v2280, 0
        %2287 = vmatprep.subr.mxu0 0.0
        %2288 = vmatpush1.msra.mxu0 %v1916
        %2289 = vmatprep.subr.mxu0 0.0
        %2290 = vmatpush1.msra.mxu0 0.0
        %2291 = vmatprep.subr.mxu0 0.0
        %2292 = vmatpush1.msra.mxu0 0.0
        %2293 = vmatprep.subr.mxu0 0.0
        %2294 = vmatpush1.msra.mxu0 0.0
        %2295 = vmatprep.subr.mxu0 0.0
        %2296 = vmatpush1.msra.mxu0 0.0
        %2297 = vmatprep.subr.mxu0 0.0
        %2298 = vmatpush1.msra.mxu0 0.0
        %2299 = vmatprep.subr.mxu0 0.0
        %2300 = vmatpush1.msra.mxu0 0.0
        %2301 = vmatprep.subr.mxu0 0.0
        %2302 = vmatpush1.msra.mxu0 0.0
        %2303 = vmatprep.subr.mxu0 0.0
        %2304 = vmatpush1.msra.mxu0 0.0
        %2305 = vmatprep.subr.mxu0 0.0
        %2306 = vmatpush1.msra.mxu0 0.0
        %2307 = vmatprep.subr.mxu0 0.0
        %2308 = vmatpush1.msra.mxu0 0.0
        %2309 = vmatprep.subr.mxu0 0.0
        %2310 = vmatpush1.msra.mxu0 0.0
        %2311 = vmatprep.subr.mxu0 0.0
        %2312 = vmatpush1.msra.mxu0 0.0
        %2313 = vmatprep.subr.mxu0 0.0
        %2314 = vmatpush1.msra.mxu0 0.0
        %2315 = vmatprep.subr.mxu0 0.0
        %2316 = vmatpush1.msra.mxu0 0.0
        %2317 = vmatprep.subr.mxu0 0.0
        %2318 = vmatpush1.msra.mxu0 0.0
        %2319 = vmatprep.subr.mxu0 0.0
        %2320 = vmatpush1.msra.mxu0 0.0
        %2321 = vmatprep.subr.mxu0 0.0
        %2322 = vmatpush1.msra.mxu0 0.0
        %2323 = vmatprep.subr.mxu0 0.0
        %2324 = vmatpush1.msra.mxu0 0.0
        %2325 = vmatprep.subr.mxu0 0.0
        %2326 = vmatpush1.msra.mxu0 0.0
        %2327 = vmatprep.subr.mxu0 0.0
        %2328 = vmatpush1.msra.mxu0 0.0
        %2329 = vmatprep.subr.mxu0 0.0
        %2330 = vmatpush1.msra.mxu0 0.0
        %2331 = vmatprep.subr.mxu0 0.0
        %2332 = vmatpush1.msra.mxu0 0.0
        %2333 = vmatprep.subr.mxu0 0.0
        %2334 = vmatpush1.msra.mxu0 0.0
        %2335 = vmatprep.subr.mxu0 0.0
        %2336 = vmatpush1.msra.mxu0 0.0
        %2337 = vmatprep.subr.mxu0 0.0
        %2338 = vmatpush1.msra.mxu0 0.0
        %2339 = vmatprep.subr.mxu0 0.0
        %2340 = vmatpush1.msra.mxu0 0.0
        %2341 = vmatprep.subr.mxu0 0.0
        %2342 = vmatpush1.msra.mxu0 0.0
        %2343 = vmatprep.subr.mxu0 0.0
        %2344 = vmatpush1.msra.mxu0 0.0
        %2345 = vmatprep.subr.mxu0 0.0
        %2346 = vmatpush1.msra.mxu0 0.0
        %2347 = vmatprep.subr.mxu0 0.0
        %2348 = vmatpush1.msra.mxu0 0.0
        %2349 = vmatprep.subr.mxu0 0.0
        %2350 = vmatpush1.msra.mxu0 0.0
        %2351 = vmatprep.mubr.f32.mxu0 0.0
        %2352 = vmatmul.mubr.f32.gmra.mrb[0].mxu0 %v2285
        %v2353 = vpop.f32.mrb[0].mxu0
        %v2354 = vadd.f32 0.0, %v2353
        %v2355 = vpop.f32.mrb[0].mxu0
        %2356 = vdwg.mxu0
        %v2358 = vsel %vm1920, %v2281, 0
        %2360 = vmatprep.subr.mxu0 0.0
        %2361 = vmatpush1.msra.mxu0 %v1917
        %2362 = vmatprep.subr.mxu0 0.0
        %2363 = vmatpush1.msra.mxu0 0.0
        %2364 = vmatprep.subr.mxu0 0.0
        %2365 = vmatpush1.msra.mxu0 0.0
        %2366 = vmatprep.subr.mxu0 0.0
        %2367 = vmatpush1.msra.mxu0 0.0
        %2368 = vmatprep.subr.mxu0 0.0
        %2369 = vmatpush1.msra.mxu0 0.0
        %2370 = vmatprep.subr.mxu0 0.0
        %2371 = vmatpush1.msra.mxu0 0.0
        %2372 = vmatprep.subr.mxu0 0.0
        %2373 = vmatpush1.msra.mxu0 0.0
        %2374 = vmatprep.subr.mxu0 0.0
        %2375 = vmatpush1.msra.mxu0 0.0
        %2376 = vmatprep.subr.mxu0 0.0
        %2377 = vmatpush1.msra.mxu0 0.0
        %2378 = vmatprep.subr.mxu0 0.0
        %2379 = vmatpush1.msra.mxu0 0.0
        %2380 = vmatprep.subr.mxu0 0.0
        %2381 = vmatpush1.msra.mxu0 0.0
        %2382 = vmatprep.subr.mxu0 0.0
        %2383 = vmatpush1.msra.mxu0 0.0
        %2384 = vmatprep.subr.mxu0 0.0
        %2385 = vmatpush1.msra.mxu0 0.0
        %2386 = vmatprep.subr.mxu0 0.0
        %2387 = vmatpush1.msra.mxu0 0.0
        %2388 = vmatprep.subr.mxu0 0.0
        %2389 = vmatpush1.msra.mxu0 0.0
        %2390 = vmatprep.subr.mxu0 0.0
        %2391 = vmatpush1.msra.mxu0 0.0
        %2392 = vmatprep.subr.mxu0 0.0
        %2393 = vmatpush1.msra.mxu0 0.0
        %2394 = vmatprep.subr.mxu0 0.0
        %2395 = vmatpush1.msra.mxu0 0.0
        %2396 = vmatprep.subr.mxu0 0.0
        %2397 = vmatpush1.msra.mxu0 0.0
        %2398 = vmatprep.subr.mxu0 0.0
        %2399 = vmatpush1.msra.mxu0 0.0
        %2400 = vmatprep.subr.mxu0 0.0
        %2401 = vmatpush1.msra.mxu0 0.0
        %2402 = vmatprep.subr.mxu0 0.0
        %2403 = vmatpush1.msra.mxu0 0.0
        %2404 = vmatprep.subr.mxu0 0.0
        %2405 = vmatpush1.msra.mxu0 0.0
        %2406 = vmatprep.subr.mxu0 0.0
        %2407 = vmatpush1.msra.mxu0 0.0
        %2408 = vmatprep.subr.mxu0 0.0
        %2409 = vmatpush1.msra.mxu0 0.0
        %2410 = vmatprep.subr.mxu0 0.0
        %2411 = vmatpush1.msra.mxu0 0.0
        %2412 = vmatprep.subr.mxu0 0.0
        %2413 = vmatpush1.msra.mxu0 0.0
        %2414 = vmatprep.subr.mxu0 0.0
        %2415 = vmatpush1.msra.mxu0 0.0
        %2416 = vmatprep.subr.mxu0 0.0
        %2417 = vmatpush1.msra.mxu0 0.0
        %2418 = vmatprep.subr.mxu0 0.0
        %2419 = vmatpush1.msra.mxu0 0.0
        %2420 = vmatprep.subr.mxu0 0.0
        %2421 = vmatpush1.msra.mxu0 0.0
        %2422 = vmatprep.subr.mxu0 0.0
        %2423 = vmatpush1.msra.mxu0 0.0
        %2424 = vmatprep.mubr.f32.mxu0 0.0
        %2425 = vmatmul.mubr.f32.gmra.mrb[0].mxu0 %v2358
        %v2426 = vpop.f32.mrb[0].mxu0
        %v2427 = vadd.f32 0.0, %v2426
        %v2428 = vpop.f32.mrb[0].mxu0
        %2429 = vdwg.mxu0
        %v2431 = vsel %vm1920, %v2282, 0
        %2433 = vmatprep.subr.mxu0 0.0
        %2434 = vmatpush1.msra.mxu0 %v1918
        %2435 = vmatprep.subr.mxu0 0.0
        %2436 = vmatpush1.msra.mxu0 0.0
        %2437 = vmatprep.subr.mxu0 0.0
        %2438 = vmatpush1.msra.mxu0 0.0
        %2439 = vmatprep.subr.mxu0 0.0
        %2440 = vmatpush1.msra.mxu0 0.0
        %2441 = vmatprep.subr.mxu0 0.0
        %2442 = vmatpush1.msra.mxu0 0.0
        %2443 = vmatprep.subr.mxu0 0.0
        %2444 = vmatpush1.msra.mxu0 0.0
        %2445 = vmatprep.subr.mxu0 0.0
        %2446 = vmatpush1.msra.mxu0 0.0
        %2447 = vmatprep.subr.mxu0 0.0
        %2448 = vmatpush1.msra.mxu0 0.0
        %2449 = vmatprep.subr.mxu0 0.0
        %2450 = vmatpush1.msra.mxu0 0.0
        %2451 = vmatprep.subr.mxu0 0.0
        %2452 = vmatpush1.msra.mxu0 0.0
        %2453 = vmatprep.subr.mxu0 0.0
        %2454 = vmatpush1.msra.mxu0 0.0
        %2455 = vmatprep.subr.mxu0 0.0
        %2456 = vmatpush1.msra.mxu0 0.0
        %2457 = vmatprep.subr.mxu0 0.0
        %2458 = vmatpush1.msra.mxu0 0.0
        %2459 = vmatprep.subr.mxu0 0.0
        %2460 = vmatpush1.msra.mxu0 0.0
        %2461 = vmatprep.subr.mxu0 0.0
        %2462 = vmatpush1.msra.mxu0 0.0
        %2463 = vmatprep.subr.mxu0 0.0
        %2464 = vmatpush1.msra.mxu0 0.0
        %2465 = vmatprep.subr.mxu0 0.0
        %2466 = vmatpush1.msra.mxu0 0.0
        %2467 = vmatprep.subr.mxu0 0.0
        %2468 = vmatpush1.msra.mxu0 0.0
        %2469 = vmatprep.subr.mxu0 0.0
        %2470 = vmatpush1.msra.mxu0 0.0
        %2471 = vmatprep.subr.mxu0 0.0
        %2472 = vmatpush1.msra.mxu0 0.0
        %2473 = vmatprep.subr.mxu0 0.0
        %2474 = vmatpush1.msra.mxu0 0.0
        %2475 = vmatprep.subr.mxu0 0.0
        %2476 = vmatpush1.msra.mxu0 0.0
        %2477 = vmatprep.subr.mxu0 0.0
        %2478 = vmatpush1.msra.mxu0 0.0
        %2479 = vmatprep.subr.mxu0 0.0
        %2480 = vmatpush1.msra.mxu0 0.0
        %2481 = vmatprep.subr.mxu0 0.0
        %2482 = vmatpush1.msra.mxu0 0.0
        %2483 = vmatprep.subr.mxu0 0.0
        %2484 = vmatpush1.msra.mxu0 0.0
        %2485 = vmatprep.subr.mxu0 0.0
        %2486 = vmatpush1.msra.mxu0 0.0
        %2487 = vmatprep.subr.mxu0 0.0
        %2488 = vmatpush1.msra.mxu0 0.0
        %2489 = vmatprep.subr.mxu0 0.0
        %2490 = vmatpush1.msra.mxu0 0.0
        %2491 = vmatprep.subr.mxu0 0.0
        %2492 = vmatpush1.msra.mxu0 0.0
        %2493 = vmatprep.subr.mxu0 0.0
        %2494 = vmatpush1.msra.mxu0 0.0
        %2495 = vmatprep.subr.mxu0 0.0
        %2496 = vmatpush1.msra.mxu0 0.0
        %2497 = vmatprep.mubr.f32.mxu0 0.0
        %2498 = vmatmul.mubr.f32.gmra.mrb[0].mxu0 %v2431
        %v2499 = vpop.f32.mrb[0].mxu0
        %v2500 = vadd.f32 0.0, %v2499
        %v2501 = vpop.f32.mrb[0].mxu0
        %2502 = vdwg.mxu0
        %v2504 = vsel %vm1920, %v2283, 0
        %2506 = vmatprep.subr.mxu0 0.0
        %2507 = vmatpush1.msra.mxu0 %v1919
        %2508 = vmatprep.subr.mxu0 0.0
        %2509 = vmatpush1.msra.mxu0 0.0
        %2510 = vmatprep.subr.mxu0 0.0
        %2511 = vmatpush1.msra.mxu0 0.0
        %2512 = vmatprep.subr.mxu0 0.0
        %2513 = vmatpush1.msra.mxu0 0.0
        %2514 = vmatprep.subr.mxu0 0.0
        %2515 = vmatpush1.msra.mxu0 0.0
        %2516 = vmatprep.subr.mxu0 0.0
        %2517 = vmatpush1.msra.mxu0 0.0
        %2518 = vmatprep.subr.mxu0 0.0
        %2519 = vmatpush1.msra.mxu0 0.0
        %2520 = vmatprep.subr.mxu0 0.0
        %2521 = vmatpush1.msra.mxu0 0.0
        %2522 = vmatprep.subr.mxu0 0.0
        %2523 = vmatpush1.msra.mxu0 0.0
        %2524 = vmatprep.subr.mxu0 0.0
        %2525 = vmatpush1.msra.mxu0 0.0
        %2526 = vmatprep.subr.mxu0 0.0
        %2527 = vmatpush1.msra.mxu0 0.0
        %2528 = vmatprep.subr.mxu0 0.0
        %2529 = vmatpush1.msra.mxu0 0.0
        %2530 = vmatprep.subr.mxu0 0.0
        %2531 = vmatpush1.msra.mxu0 0.0
        %2532 = vmatprep.subr.mxu0 0.0
        %2533 = vmatpush1.msra.mxu0 0.0
        %2534 = vmatprep.subr.mxu0 0.0
        %2535 = vmatpush1.msra.mxu0 0.0
        %2536 = vmatprep.subr.mxu0 0.0
        %2537 = vmatpush1.msra.mxu0 0.0
        %2538 = vmatprep.subr.mxu0 0.0
        %2539 = vmatpush1.msra.mxu0 0.0
        %2540 = vmatprep.subr.mxu0 0.0
        %2541 = vmatpush1.msra.mxu0 0.0
        %2542 = vmatprep.subr.mxu0 0.0
        %2543 = vmatpush1.msra.mxu0 0.0
        %2544 = vmatprep.subr.mxu0 0.0
        %2545 = vmatpush1.msra.mxu0 0.0
        %2546 = vmatprep.subr.mxu0 0.0
        %2547 = vmatpush1.msra.mxu0 0.0
        %2548 = vmatprep.subr.mxu0 0.0
        %2549 = vmatpush1.msra.mxu0 0.0
        %2550 = vmatprep.subr.mxu0 0.0
        %2551 = vmatpush1.msra.mxu0 0.0
        %2552 = vmatprep.subr.mxu0 0.0
        %2553 = vmatpush1.msra.mxu0 0.0
        %2554 = vmatprep.subr.mxu0 0.0
        %2555 = vmatpush1.msra.mxu0 0.0
        %2556 = vmatprep.subr.mxu0 0.0
        %2557 = vmatpush1.msra.mxu0 0.0
        %2558 = vmatprep.subr.mxu0 0.0
        %2559 = vmatpush1.msra.mxu0 0.0
        %2560 = vmatprep.subr.mxu0 0.0
        %2561 = vmatpush1.msra.mxu0 0.0
        %2562 = vmatprep.subr.mxu0 0.0
        %2563 = vmatpush1.msra.mxu0 0.0
        %2564 = vmatprep.subr.mxu0 0.0
        %2565 = vmatpush1.msra.mxu0 0.0
        %2566 = vmatprep.subr.mxu0 0.0
        %2567 = vmatpush1.msra.mxu0 0.0
        %2568 = vmatprep.subr.mxu0 0.0
        %2569 = vmatpush1.msra.mxu0 0.0
        %2570 = vmatprep.mubr.f32.mxu0 0.0
        %2571 = vmatmul.mubr.f32.gmra.mrb[0].mxu0 %v2504
        %v2572 = vpop.f32.mrb[0].mxu0
        %v2573 = vadd.f32 0.0, %v2572
        %v2574 = vpop.f32.mrb[0].mxu0
        %2575 = vdwg.mxu0
        %v2576 = vpack.c.bf16 %v2354, %v2354
        %v2577 = vpack.c.bf16 %v2427, %v2427
        %v2578 = vpack.c.bf16 %v2500, %v2500
        %v2579 = vpack.c.bf16 %v2573, %v2573
        %v2580 = vld [vmem:[%s804] sm:$0xf]
        %v2581 = vld [vmem:[%s804 + $0x4] sm:$0xf]
        %v2582 = vld [vmem:[%s804 + $0x8] sm:$0xf]
        %v2583 = vld [vmem:[%s804 + $0xc] sm:$0xf]
        %v2585 = vsel %vm1920, %v2576, 0
        %vm2587 = vcmask 1043456
        %v2589 = vsel %vm2587, %v2580, 0
        %2591 = vmatprep.subr.bf16.mxu0 0
        %2592 = vmatpush1.bf16.msra.mxu0 %v2589
        %2593 = vmatprep.subr.bf16.mxu0 0
        %2594 = vmatpush1.bf16.msra.mxu0 0
        %2595 = vmatprep.subr.bf16.mxu0 0
        %2596 = vmatpush1.bf16.msra.mxu0 0
        %2597 = vmatprep.subr.bf16.mxu0 0
        %2598 = vmatpush1.bf16.msra.mxu0 0
        %2599 = vmatprep.subr.bf16.mxu0 0
        %2600 = vmatpush1.bf16.msra.mxu0 0
        %2601 = vmatprep.subr.bf16.mxu0 0
        %2602 = vmatpush1.bf16.msra.mxu0 0
        %2603 = vmatprep.subr.bf16.mxu0 0
        %2604 = vmatpush1.bf16.msra.mxu0 0
        %2605 = vmatprep.subr.bf16.mxu0 0
        %2606 = vmatpush1.bf16.msra.mxu0 0
        %2607 = vmatprep.subr.bf16.mxu0 0
        %2608 = vmatpush1.bf16.msra.mxu0 0
        %2609 = vmatprep.subr.bf16.mxu0 0
        %2610 = vmatpush1.bf16.msra.mxu0 0
        %2611 = vmatprep.subr.bf16.mxu0 0
        %2612 = vmatpush1.bf16.msra.mxu0 0
        %2613 = vmatprep.subr.bf16.mxu0 0
        %2614 = vmatpush1.bf16.msra.mxu0 0
        %2615 = vmatprep.subr.bf16.mxu0 0
        %2616 = vmatpush1.bf16.msra.mxu0 0
        %2617 = vmatprep.subr.bf16.mxu0 0
        %2618 = vmatpush1.bf16.msra.mxu0 0
        %2619 = vmatprep.subr.bf16.mxu0 0
        %2620 = vmatpush1.bf16.msra.mxu0 0
        %2621 = vmatprep.subr.bf16.mxu0 0
        %2622 = vmatpush1.bf16.msra.mxu0 0
        %2623 = vmatprep.mubr.bf16.mxu0 0
        %2624 = vmatmul.mubr.bf16.gmra.mrb[0].mxu0 %v2585
        %v2625 = vpop.f32.mrb[0].mxu0
        %v2626 = vadd.f32 0.0, %v2625
        %v2627 = vpop.f32.mrb[0].mxu0
        %v2628 = vpop.f32.mrb[0].mxu0
        %v2629 = vpop.f32.mrb[0].mxu0
        %2630 = vdwg.mxu0
        %v2632 = vsel %vm1920, %v2577, 0
        %v2635 = vsel %vm2587, %v2581, 0
        %2637 = vmatprep.subr.bf16.mxu0 0
        %2638 = vmatpush1.bf16.msra.mxu0 %v2635
        %2639 = vmatprep.subr.bf16.mxu0 0
        %2640 = vmatpush1.bf16.msra.mxu0 0
        %2641 = vmatprep.subr.bf16.mxu0 0
        %2642 = vmatpush1.bf16.msra.mxu0 0
        %2643 = vmatprep.subr.bf16.mxu0 0
        %2644 = vmatpush1.bf16.msra.mxu0 0
        %2645 = vmatprep.subr.bf16.mxu0 0
        %2646 = vmatpush1.bf16.msra.mxu0 0
        %2647 = vmatprep.subr.bf16.mxu0 0
        %2648 = vmatpush1.bf16.msra.mxu0 0
        %2649 = vmatprep.subr.bf16.mxu0 0
        %2650 = vmatpush1.bf16.msra.mxu0 0
        %2651 = vmatprep.subr.bf16.mxu0 0
        %2652 = vmatpush1.bf16.msra.mxu0 0
        %2653 = vmatprep.subr.bf16.mxu0 0
        %2654 = vmatpush1.bf16.msra.mxu0 0
        %2655 = vmatprep.subr.bf16.mxu0 0
        %2656 = vmatpush1.bf16.msra.mxu0 0
        %2657 = vmatprep.subr.bf16.mxu0 0
        %2658 = vmatpush1.bf16.msra.mxu0 0
        %2659 = vmatprep.subr.bf16.mxu0 0
        %2660 = vmatpush1.bf16.msra.mxu0 0
        %2661 = vmatprep.subr.bf16.mxu0 0
        %2662 = vmatpush1.bf16.msra.mxu0 0
        %2663 = vmatprep.subr.bf16.mxu0 0
        %2664 = vmatpush1.bf16.msra.mxu0 0
        %2665 = vmatprep.subr.bf16.mxu0 0
        %2666 = vmatpush1.bf16.msra.mxu0 0
        %2667 = vmatprep.subr.bf16.mxu0 0
        %2668 = vmatpush1.bf16.msra.mxu0 0
        %2669 = vmatprep.mubr.bf16.mxu0 0
        %2670 = vmatmul.mubr.bf16.gmra.mrb[0].mxu0 %v2632
        %v2671 = vpop.f32.mrb[0].mxu0
        %v2672 = vadd.f32 0.0, %v2671
        %v2673 = vpop.f32.mrb[0].mxu0
        %v2674 = vpop.f32.mrb[0].mxu0
        %v2675 = vpop.f32.mrb[0].mxu0
        %2676 = vdwg.mxu0
        %v2678 = vsel %vm1920, %v2578, 0
        %v2681 = vsel %vm2587, %v2582, 0
        %2683 = vmatprep.subr.bf16.mxu0 0
        %2684 = vmatpush1.bf16.msra.mxu0 %v2681
        %2685 = vmatprep.subr.bf16.mxu0 0
        %2686 = vmatpush1.bf16.msra.mxu0 0
        %2687 = vmatprep.subr.bf16.mxu0 0
        %2688 = vmatpush1.bf16.msra.mxu0 0
        %2689 = vmatprep.subr.bf16.mxu0 0
        %2690 = vmatpush1.bf16.msra.mxu0 0
        %2691 = vmatprep.subr.bf16.mxu0 0
        %2692 = vmatpush1.bf16.msra.mxu0 0
        %2693 = vmatprep.subr.bf16.mxu0 0
        %2694 = vmatpush1.bf16.msra.mxu0 0
        %2695 = vmatprep.subr.bf16.mxu0 0
        %2696 = vmatpush1.bf16.msra.mxu0 0
        %2697 = vmatprep.subr.bf16.mxu0 0
        %2698 = vmatpush1.bf16.msra.mxu0 0
        %2699 = vmatprep.subr.bf16.mxu0 0
        %2700 = vmatpush1.bf16.msra.mxu0 0
        %2701 = vmatprep.subr.bf16.mxu0 0
        %2702 = vmatpush1.bf16.msra.mxu0 0
        %2703 = vmatprep.subr.bf16.mxu0 0
        %2704 = vmatpush1.bf16.msra.mxu0 0
        %2705 = vmatprep.subr.bf16.mxu0 0
        %2706 = vmatpush1.bf16.msra.mxu0 0
        %2707 = vmatprep.subr.bf16.mxu0 0
        %2708 = vmatpush1.bf16.msra.mxu0 0
        %2709 = vmatprep.subr.bf16.mxu0 0
        %2710 = vmatpush1.bf16.msra.mxu0 0
        %2711 = vmatprep.subr.bf16.mxu0 0
        %2712 = vmatpush1.bf16.msra.mxu0 0
        %2713 = vmatprep.subr.bf16.mxu0 0
        %2714 = vmatpush1.bf16.msra.mxu0 0
        %2715 = vmatprep.mubr.bf16.mxu0 0
        %2716 = vmatmul.mubr.bf16.gmra.mrb[0].mxu0 %v2678
        %v2717 = vpop.f32.mrb[0].mxu0
        %v2718 = vadd.f32 0.0, %v2717
        %v2719 = vpop.f32.mrb[0].mxu0
        %v2720 = vpop.f32.mrb[0].mxu0
        %v2721 = vpop.f32.mrb[0].mxu0
        %2722 = vdwg.mxu0
        %v2724 = vsel %vm1920, %v2579, 0
        %v2727 = vsel %vm2587, %v2583, 0
        %2729 = vmatprep.subr.bf16.mxu0 0
        %2730 = vmatpush1.bf16.msra.mxu0 %v2727
        %2731 = vmatprep.subr.bf16.mxu0 0
        %2732 = vmatpush1.bf16.msra.mxu0 0
        %2733 = vmatprep.subr.bf16.mxu0 0
        %2734 = vmatpush1.bf16.msra.mxu0 0
        %2735 = vmatprep.subr.bf16.mxu0 0
        %2736 = vmatpush1.bf16.msra.mxu0 0
        %2737 = vmatprep.subr.bf16.mxu0 0
        %2738 = vmatpush1.bf16.msra.mxu0 0
        %2739 = vmatprep.subr.bf16.mxu0 0
        %2740 = vmatpush1.bf16.msra.mxu0 0
        %2741 = vmatprep.subr.bf16.mxu0 0
        %2742 = vmatpush1.bf16.msra.mxu0 0
        %2743 = vmatprep.subr.bf16.mxu0 0
        %2744 = vmatpush1.bf16.msra.mxu0 0
        %2745 = vmatprep.subr.bf16.mxu0 0
        %2746 = vmatpush1.bf16.msra.mxu0 0
        %2747 = vmatprep.subr.bf16.mxu0 0
        %2748 = vmatpush1.bf16.msra.mxu0 0
        %2749 = vmatprep.subr.bf16.mxu0 0
        %2750 = vmatpush1.bf16.msra.mxu0 0
        %2751 = vmatprep.subr.bf16.mxu0 0
        %2752 = vmatpush1.bf16.msra.mxu0 0
        %2753 = vmatprep.subr.bf16.mxu0 0
        %2754 = vmatpush1.bf16.msra.mxu0 0
        %2755 = vmatprep.subr.bf16.mxu0 0
        %2756 = vmatpush1.bf16.msra.mxu0 0
        %2757 = vmatprep.subr.bf16.mxu0 0
        %2758 = vmatpush1.bf16.msra.mxu0 0
        %2759 = vmatprep.subr.bf16.mxu0 0
        %2760 = vmatpush1.bf16.msra.mxu0 0
        %2761 = vmatprep.mubr.bf16.mxu0 0
        %2762 = vmatmul.mubr.bf16.gmra.mrb[0].mxu0 %v2724
        %v2763 = vpop.f32.mrb[0].mxu0
        %v2764 = vadd.f32 0.0, %v2763
        %v2765 = vpop.f32.mrb[0].mxu0
        %v2766 = vpop.f32.mrb[0].mxu0
        %v2767 = vpop.f32.mrb[0].mxu0
        %2768 = vdwg.mxu0
        %v2769 = vsel %vm1308, %v2626, 0.0
        %v2770 = vsel %vm1308, %v2672, 0.0
        %v2771 = vadd.f32 %v2769, %v2770
        %v2772 = vsel %vm1308, %v2718, 0.0
        %v2773 = vadd.f32 %v2771, %v2772
        %v2774 = vsel %vm1308, %v2764, 0.0
        %v2775 = vadd.f32 %v2773, %v2774
        %v2776 = vld [vmem:[%s807] sm:$0x1]
        %v2778 = vlaneseq
        %v2779 = vshrl.u32 %v2778, 7
        %v2780 = vsub.s32 0, %v2779
        %v2781 = vrot.slane %v2776, %v2780
        %v2783 = vadd.f32 %v2775, %v2781
        %v2784 = vadd.f32 %v2783, %v1283
        %v2785 = vld [vmem:[%s810] sm:$0x1]
        %v2786 = vld [vmem:[%s813] sm:$0x1]
        %v2787 = vsel %vm1308, %v2784, 0.0
        %2788 = vadd.xlane.f32.xlu0 %v2787
        %v2789 = vpop.xlane.xlu0 %2788
        %v2790 = vrcp.pop 32.0
        %v2791 = vmul.f32 %v2789, %v2790
        %v2792 = vsub.f32 %v2784, %v2791
        %v2793 = vmul.f32 %v2792, %v2792
        %v2794 = vsel %vm1308, %v2793, 0.0
        %2795 = vadd.xlane.f32.xlu0 %v2794
        %v2796 = vpop.xlane.xlu0 %2795
        %v2797 = vmul.f32 %v2796, %v2790
        %v2798 = vadd.f32 %v2797, 1e-12
        %v2799 = vrsqrt.pop %v2798
        %v2800 = vmul.f32 %v2792, %v2799
        %v2802 = vlaneseq
        %v2803 = vshrl.u32 %v2802, 7
        %v2804 = vsub.s32 0, %v2803
        %v2805 = vrot.slane %v2785, %v2804
        %v2807 = vmul.f32 %v2800, %v2805
        %v2809 = vlaneseq
        %v2810 = vshrl.u32 %v2809, 7
        %v2811 = vsub.s32 0, %v2810
        %v2812 = vrot.slane %v2786, %v2811
        %v2814 = vadd.f32 %v2807, %v2812
        %v2815 = vld [vmem:[%s818] sm:$0xf]
        %v2816 = vld [vmem:[%s818 + $0x4] sm:$0xf]
        %v2817 = vld [vmem:[%s818 + $0x8] sm:$0xf]
        %v2818 = vld [vmem:[%s818 + $0xc] sm:$0xf]
        %v2819 = vpack.c.bf16 %v2814, %v2814
        %v2820 = vld [vmem:[%s821] sm:$0x1]
        %v2822 = vlaneseq
        %v2823 = vshrl.u32 %v2822, 7
        %v2824 = vsub.s32 0, %v2823
        %v2825 = vrot.slane %v2820, %v2824
        %v2831 = vunpack.c.l.b16 %v2815
        %v2832 = vunpack.c.l.b16 %v2816
        %v2833 = vunpack.c.l.b16 %v2817
        %v2834 = vunpack.c.l.b16 %v2818
        %v2835 = vpack.c.b16 %v2832, %v2831
        %v2836 = vpack.c.b16 %v2834, %v2833
        %v2840 = vsel %vm1308, %v2819, 0
        %2842 = vmatprep.subr.bf16.mxu0 0
        %2843 = vmatpush1.bf16.msra.mxu0 %v2835
        %2844 = vmatprep.subr.bf16.mxu0 0
        %2845 = vmatpush1.bf16.msra.mxu0 %v2836
        %2846 = vmatprep.subr.bf16.mxu0 0
        %2847 = vmatpush1.bf16.msra.mxu0 0
        %2848 = vmatprep.subr.bf16.mxu0 0
        %2849 = vmatpush1.bf16.msra.mxu0 0
        %2850 = vmatprep.subr.bf16.mxu0 0
        %2851 = vmatpush1.bf16.msra.mxu0 0
        %2852 = vmatprep.subr.bf16.mxu0 0
        %2853 = vmatpush1.bf16.msra.mxu0 0
        %2854 = vmatprep.subr.bf16.mxu0 0
        %2855 = vmatpush1.bf16.msra.mxu0 0
        %2856 = vmatprep.subr.bf16.mxu0 0
        %2857 = vmatpush1.bf16.msra.mxu0 0
        %2858 = vmatprep.subr.bf16.mxu0 0
        %2859 = vmatpush1.bf16.msra.mxu0 0
        %2860 = vmatprep.subr.bf16.mxu0 0
        %2861 = vmatpush1.bf16.msra.mxu0 0
        %2862 = vmatprep.subr.bf16.mxu0 0
        %2863 = vmatpush1.bf16.msra.mxu0 0
        %2864 = vmatprep.subr.bf16.mxu0 0
        %2865 = vmatpush1.bf16.msra.mxu0 0
        %2866 = vmatprep.subr.bf16.mxu0 0
        %2867 = vmatpush1.bf16.msra.mxu0 0
        %2868 = vmatprep.subr.bf16.mxu0 0
        %2869 = vmatpush1.bf16.msra.mxu0 0
        %2870 = vmatprep.subr.bf16.mxu0 0
        %2871 = vmatpush1.bf16.msra.mxu0 0
        %2872 = vmatprep.subr.bf16.mxu0 0
        %2873 = vmatpush1.bf16.msra.mxu0 0
        %2874 = vmatprep.mubr.bf16.mxu0 0
        %2875 = vmatmul.mubr.bf16.gmra.mrb[0].mxu0 %v2840
        %v2876 = vpop.f32.mrb[0].mxu0
        %v2877 = vadd.f32 %v2825, %v2876
        %v2878 = vpop.f32.mrb[0].mxu0
        %v2879 = vpop.f32.mrb[0].mxu0
        %v2880 = vpop.f32.mrb[0].mxu0
        %2881 = vdwg.mxu0
        %v2882 = vmul.f32 %v2877, %v2877
        %v2883 = vmul.f32 %v2877, %v2882
        %v2884 = vmul.f32 %v2883, 0.044715
        %v2885 = vadd.f32 %v2877, %v2884
        %v2886 = vmul.f32 %v2885, 0.7978846
        %v2887 = vtanh.pop %v2886
        %v2888 = vadd.f32 %v2887, 1.0
        %v2889 = vmul.f32 %v2888, 0.5
        %v2890 = vmul.f32 %v2877, %v2889
        %v2891 = vld [vmem:[%s826] sm:$0xf]
        %v2892 = vld [vmem:[%s826 + $0x4] sm:$0xf]
        %v2893 = vld [vmem:[%s826 + $0x8] sm:$0xf]
        %v2894 = vld [vmem:[%s826 + $0xc] sm:$0xf]
        %v2895 = vld [vmem:[%s826 + $0x10] sm:$0xf]
        %v2896 = vld [vmem:[%s826 + $0x14] sm:$0xf]
        %v2897 = vld [vmem:[%s826 + $0x18] sm:$0xf]
        %v2898 = vld [vmem:[%s826 + $0x1c] sm:$0xf]
        %v2899 = vld [vmem:[%s826 + $0x20] sm:$0xf]
        %v2900 = vld [vmem:[%s826 + $0x24] sm:$0xf]
        %v2901 = vld [vmem:[%s826 + $0x28] sm:$0xf]
        %v2902 = vld [vmem:[%s826 + $0x2c] sm:$0xf]
        %v2903 = vld [vmem:[%s826 + $0x30] sm:$0xf]
        %v2904 = vld [vmem:[%s826 + $0x34] sm:$0xf]
        %v2905 = vld [vmem:[%s826 + $0x38] sm:$0xf]
        %v2906 = vld [vmem:[%s826 + $0x3c] sm:$0xf]
        %v2907 = vpack.c.bf16 %v2890, %v2890
        %v2908 = vld [vmem:[%s829] sm:$0x1]
        %v2910 = vlaneseq
        %v2911 = vshrl.u32 %v2910, 7
        %v2912 = vsub.s32 0, %v2911
        %v2913 = vrot.slane %v2908, %v2912
        %v2931 = vunpack.c.l.b16 %v2891
        %v2932 = vunpack.c.l.b16 %v2892
        %v2933 = vunpack.c.l.b16 %v2893
        %v2934 = vunpack.c.l.b16 %v2894
        %v2935 = vunpack.c.l.b16 %v2895
        %v2936 = vunpack.c.l.b16 %v2896
        %v2937 = vunpack.c.l.b16 %v2897
        %v2938 = vunpack.c.l.b16 %v2898
        %v2939 = vunpack.c.l.b16 %v2899
        %v2940 = vunpack.c.l.b16 %v2900
        %v2941 = vunpack.c.l.b16 %v2901
        %v2942 = vunpack.c.l.b16 %v2902
        %v2943 = vunpack.c.l.b16 %v2903
        %v2944 = vunpack.c.l.b16 %v2904
        %v2945 = vunpack.c.l.b16 %v2905
        %v2946 = vunpack.c.l.b16 %v2906
        %v2947 = vpack.c.b16 %v2932, %v2931
        %v2948 = vpack.c.b16 %v2934, %v2933
        %v2949 = vpack.c.b16 %v2936, %v2935
        %v2950 = vpack.c.b16 %v2938, %v2937
        %v2951 = vpack.c.b16 %v2940, %v2939
        %v2952 = vpack.c.b16 %v2942, %v2941
        %v2953 = vpack.c.b16 %v2944, %v2943
        %v2954 = vpack.c.b16 %v2946, %v2945
        %2963 = vmatprep.subr.bf16.mxu0 0
        %2964 = vmatpush1.bf16.msra.mxu0 %v2947
        %2965 = vmatprep.subr.bf16.mxu0 0
        %2966 = vmatpush1.bf16.msra.mxu0 %v2948
        %2967 = vmatprep.subr.bf16.mxu0 0
        %2968 = vmatpush1.bf16.msra.mxu0 %v2949
        %2969 = vmatprep.subr.bf16.mxu0 0
        %2970 = vmatpush1.bf16.msra.mxu0 %v2950
        %2971 = vmatprep.subr.bf16.mxu0 0
        %2972 = vmatpush1.bf16.msra.mxu0 %v2951
        %2973 = vmatprep.subr.bf16.mxu0 0
        %2974 = vmatpush1.bf16.msra.mxu0 %v2952
        %2975 = vmatprep.subr.bf16.mxu0 0
        %2976 = vmatpush1.bf16.msra.mxu0 %v2953
        %2977 = vmatprep.subr.bf16.mxu0 0
        %2978 = vmatpush1.bf16.msra.mxu0 %v2954
        %2979 = vmatprep.subr.bf16.mxu0 0
        %2980 = vmatpush1.bf16.msra.mxu0 0
        %2981 = vmatprep.subr.bf16.mxu0 0
        %2982 = vmatpush1.bf16.msra.mxu0 0
        %2983 = vmatprep.subr.bf16.mxu0 0
        %2984 = vmatpush1.bf16.msra.mxu0 0
        %2985 = vmatprep.subr.bf16.mxu0 0
        %2986 = vmatpush1.bf16.msra.mxu0 0
        %2987 = vmatprep.subr.bf16.mxu0 0
        %2988 = vmatpush1.bf16.msra.mxu0 0
        %2989 = vmatprep.subr.bf16.mxu0 0
        %2990 = vmatpush1.bf16.msra.mxu0 0
        %2991 = vmatprep.subr.bf16.mxu0 0
        %2992 = vmatpush1.bf16.msra.mxu0 0
        %2993 = vmatprep.subr.bf16.mxu0 0
        %2994 = vmatpush1.bf16.msra.mxu0 0
        %2995 = vmatprep.mubr.bf16.mxu0 0
        %2996 = vmatmul.mubr.bf16.gmra.mrb[0].mxu0 %v2907
        %v2997 = vpop.f32.mrb[0].mxu0
        %v2998 = vadd.f32 %v2913, %v2997
        %v2999 = vpop.f32.mrb[0].mxu0
        %v3000 = vpop.f32.mrb[0].mxu0
        %v3001 = vpop.f32.mrb[0].mxu0
        %3002 = vdwg.mxu0
        %v3003 = vadd.f32 %v2998, %v2814
        %v3004 = vld [vmem:[%s832] sm:$0x1]
        %v3005 = vld [vmem:[%s835] sm:$0x1]
        %v3006 = vsel %vm1308, %v3003, 0.0
        %3007 = vadd.xlane.f32.xlu0 %v3006
        %v3008 = vpop.xlane.xlu0 %3007
        %v3009 = vmul.f32 %v3008, %v2790
        %v3010 = vsub.f32 %v3003, %v3009
        %v3011 = vmul.f32 %v3010, %v3010
        %v3012 = vsel %vm1308, %v3011, 0.0
        %3013 = vadd.xlane.f32.xlu0 %v3012
        %v3014 = vpop.xlane.xlu0 %3013
        %v3015 = vmul.f32 %v3014, %v2790
        %v3016 = vadd.f32 %v3015, 1e-12
        %v3017 = vrsqrt.pop %v3016
        %v3018 = vmul.f32 %v3010, %v3017
        %v3020 = vlaneseq
        %v3021 = vshrl.u32 %v3020, 7
        %v3022 = vsub.s32 0, %v3021
        %v3023 = vrot.slane %v3004, %v3022
        %v3025 = vmul.f32 %v3018, %v3023
        %v3027 = vlaneseq
        %v3028 = vshrl.u32 %v3027, 7
        %v3029 = vsub.s32 0, %v3028
        %v3030 = vrot.slane %v3005, %v3029
        %v3032 = vadd.f32 %v3025, %v3030
        %3033 = vst.msk [vmem:[#allocation2] sm:$0xff] %vm1308, %v3032
        %p3034 = scmp.eq.s32.totalorder %s47, 1
        // Predicated region
        $region345: #{text_encoder_forward.1} parent=99 // pred_check
          %p3035 = pneg %p3034
        $region346: #{text_encoder_forward.1} parent=99 // pred_check_branch
          %3037 = sbr.rel (%p3035) target = $region348
        $region347: #{text_encoder_forward.1} parent=99 // pred_region
          %v3038 = vld [vmem:[%s18] sm:$0xf]
          %v3039 = vld [vmem:[%s18 + $0x4] sm:$0xf]
          %v3040 = vld [vmem:[%s18 + $0x8] sm:$0xf]
          %v3041 = vld [vmem:[%s18 + $0xc] sm:$0xf]
          %v3042 = vpack.c.bf16 %v3032, %v3032
          %v3043 = vld [vmem:[%s19] sm:$0x1]
          %v3048 = vunpack.c.l.b16 %v3038
          %v3049 = vunpack.c.l.b16 %v3039
          %v3050 = vunpack.c.l.b16 %v3040
          %v3051 = vunpack.c.l.b16 %v3041
          %v3052 = vpack.c.b16 %v3049, %v3048
          %v3053 = vpack.c.b16 %v3051, %v3050
          %v3057 = vsel %vm1308, %v3042, 0
          %3059 = vmatprep.subr.bf16.mxu0 0
          %3060 = vmatpush1.bf16.msra.mxu0 %v3052
          %3061 = vmatprep.subr.bf16.mxu0 0
          %3062 = vmatpush1.bf16.msra.mxu0 %v3053
          %3063 = vmatprep.subr.bf16.mxu0 0
          %3064 = vmatpush1.bf16.msra.mxu0 0
          %3065 = vmatprep.subr.bf16.mxu0 0
          %3066 = vmatpush1.bf16.msra.mxu0 0
          %3067 = vmatprep.subr.bf16.mxu0 0
          %3068 = vmatpush1.bf16.msra.mxu0 0
          %3069 = vmatprep.subr.bf16.mxu0 0
          %3070 = vmatpush1.bf16.msra.mxu0 0
          %3071 = vmatprep.subr.bf16.mxu0 0
          %3072 = vmatpush1.bf16.msra.mxu0 0
          %3073 = vmatprep.subr.bf16.mxu0 0
          %3074 = vmatpush1.bf16.msra.mxu0 0
          %3075 = vmatprep.subr.bf16.mxu0 0
          %3076 = vmatpush1.bf16.msra.mxu0 0
          %3077 = vmatprep.subr.bf16.mxu0 0
          %3078 = vmatpush1.bf16.msra.mxu0 0
          %3079 = vmatprep.subr.bf16.mxu0 0
          %3080 = vmatpush1.bf16.msra.mxu0 0
          %3081 = vmatprep.subr.bf16.mxu0 0
          %3082 = vmatpush1.bf16.msra.mxu0 0
          %3083 = vmatprep.subr.bf16.mxu0 0
          %3084 = vmatpush1.bf16.msra.mxu0 0
          %3085 = vmatprep.subr.bf16.mxu0 0
          %3086 = vmatpush1.bf16.msra.mxu0 0
          %3087 = vmatprep.subr.bf16.mxu0 0
          %3088 = vmatpush1.bf16.msra.mxu0 0
          %3089 = vmatprep.subr.bf16.mxu0 0
          %3090 = vmatpush1.bf16.msra.mxu0 0
          %3091 = vmatprep.mubr.bf16.mxu0 0
          %3092 = vmatmul.mubr.bf16.gmra.mrb[0].mxu0 %v3057
          %v3093 = vpop.f32.mrb[0].mxu0
          %v3094 = vadd.f32 %v3043, %v3093
          %v3095 = vpop.f32.mrb[0].mxu0
          %v3096 = vpop.f32.mrb[0].mxu0
          %v3097 = vpop.f32.mrb[0].mxu0
          %3098 = vdwg.mxu0
          %v3099 = vtanh.pop %v3094
          %v3100 = vld [vmem:[%s20] sm:$0xf]
          %v3101 = vld [vmem:[%s20 + $0x4] sm:$0xf]
          %v3102 = vld [vmem:[%s20 + $0x8] sm:$0xf]
          %v3103 = vld [vmem:[%s20 + $0xc] sm:$0xf]
          %v3104 = vpack.c.bf16 %v3099, %v3099
          %v3105 = vld [vmem:[%s21] sm:$0x1]
          %v3110 = vunpack.c.l.b16 %v3100
          %v3111 = vunpack.c.l.b16 %v3101
          %v3112 = vunpack.c.l.b16 %v3102
          %v3113 = vunpack.c.l.b16 %v3103
          %v3114 = vpack.c.b16 %v3111, %v3110
          %v3115 = vpack.c.b16 %v3113, %v3112
          %v3119 = vsel %vm1308, %v3104, 0
          %3121 = vmatprep.subr.bf16.mxu0 0
          %3122 = vmatpush1.bf16.msra.mxu0 %v3114
          %3123 = vmatprep.subr.bf16.mxu0 0
          %3124 = vmatpush1.bf16.msra.mxu0 %v3115
          %3125 = vmatprep.subr.bf16.mxu0 0
          %3126 = vmatpush1.bf16.msra.mxu0 0
          %3127 = vmatprep.subr.bf16.mxu0 0
          %3128 = vmatpush1.bf16.msra.mxu0 0
          %3129 = vmatprep.subr.bf16.mxu0 0
          %3130 = vmatpush1.bf16.msra.mxu0 0
          %3131 = vmatprep.subr.bf16.mxu0 0
          %3132 = vmatpush1.bf16.msra.mxu0 0
          %3133 = vmatprep.subr.bf16.mxu0 0
          %3134 = vmatpush1.bf16.msra.mxu0 0
          %3135 = vmatprep.subr.bf16.mxu0 0
          %3136 = vmatpush1.bf16.msra.mxu0 0
          %3137 = vmatprep.subr.bf16.mxu0 0
          %3138 = vmatpush1.bf16.msra.mxu0 0
          %3139 = vmatprep.subr.bf16.mxu0 0
          %3140 = vmatpush1.bf16.msra.mxu0 0
          %3141 = vmatprep.subr.bf16.mxu0 0
          %3142 = vmatpush1.bf16.msra.mxu0 0
          %3143 = vmatprep.subr.bf16.mxu0 0
          %3144 = vmatpush1.bf16.msra.mxu0 0
          %3145 = vmatprep.subr.bf16.mxu0 0
          %3146 = vmatpush1.bf16.msra.mxu0 0
          %3147 = vmatprep.subr.bf16.mxu0 0
          %3148 = vmatpush1.bf16.msra.mxu0 0
          %3149 = vmatprep.subr.bf16.mxu0 0
          %3150 = vmatpush1.bf16.msra.mxu0 0
          %3151 = vmatprep.subr.bf16.mxu0 0
          %3152 = vmatpush1.bf16.msra.mxu0 0
          %3153 = vmatprep.mubr.bf16.mxu0 0
          %3154 = vmatmul.mubr.bf16.gmra.mrb[0].mxu0 %v3119
          %v3155 = vpop.f32.mrb[0].mxu0
          %v3156 = vadd.f32 %v3105, %v3155
          %v3157 = vpop.f32.mrb[0].mxu0
          %v3158 = vpop.f32.mrb[0].mxu0
          %v3159 = vpop.f32.mrb[0].mxu0
          %3160 = vdwg.mxu0
          %3161 = vst [vmem:[%s787] sm:$0x1] %v3156
        $region348: #{text_encoder_forward.1} parent=99 // pred_fallthru
          _
        %s3162 = sand.u32 %s547, 1
        %s3163 = scalar_lea.sflag [#allocation7], %s3162
        %s3164 = sand.u32 %s547, 1
        %s3165 = scalar_lea.vmem [#allocation6], %s3164
        // Predicated region
        $region349: #{text_encoder_forward.1} parent=99 // pred_check
          %p3166 = pneg %p557
        $region350: #{text_encoder_forward.1} parent=99 // pred_check_branch
          %3168 = sbr.rel (%p3166) target = $region352
        $region351: #{text_encoder_forward.1} parent=99 // pred_region
          %s3170 = ssub.s32 16, 16
          %3171 = vsyncadd %s3163, %s3170
          %s3172 = smul.addr %s46, 16
          %s3173 = scalar_lea.hbm %s22, %s3172
          %s3175 = sshll.u32 %s3165, 4
          %s3176 = int_to_ptr.vmem [resolvable:$true] %s3175
          %3178 = dma.vmem_to_hbm [thread:$0]  %s3176, 16, %s3173, %s3163
        $region352: #{text_encoder_forward.1} parent=99 // pred_fallthru
          _
      $region100: #{text_encoder_forward.1} parent=5 // pred_fallthru
        _
      %p3179 = scmp.le.s32.totalorder 2, %s37
      // Predicated region
      $region353: #{text_encoder_forward.1} parent=5 // pred_check
        %p3180 = pneg %p3179
      $region354: #{text_encoder_forward.1} parent=5 // pred_check_branch
        %3182 = sbr.rel (%p3180) target = $region356
      $region355: #{text_encoder_forward.1} parent=5 // pred_region
        %s3183 = ssub.s32 %s37, 2
        // Predicated region
        $region357: #{text_encoder_forward.1} parent=355 // pred_check
          %p3184 = pneg %p563
        $region358: #{text_encoder_forward.1} parent=355 // pred_check_branch
          %3186 = sbr.rel (%p3184) target = $region360
        $region359: #{text_encoder_forward.1} parent=355 // pred_region
          %s3187 = sand.u32 %s548, 1
          %s3188 = scalar_lea.sflag [#allocation7], %s3187
          %s3189 = sand.u32 %s548, 1
          %s3190 = scalar_lea.vmem [#allocation6], %s3189
          %3191 = dma.done %s3188, 16
        $region360: #{text_encoder_forward.1} parent=355 // pred_fallthru
          _
      $region356: #{text_encoder_forward.1} parent=5 // pred_fallthru
        _
    $region6: #{text_encoder_forward.1} parent=1 // loop_footer
      %s41 = sadd.s32 1, %s37
    $region7: #{text_encoder_forward.1} parent=1 // loop_footer_branch
      %36 = sbr.rel target = $region3
    $region8: #{text_encoder_forward.1} parent=1 // loop_exit
      _
    %3192 = vsyncpa [#allocation7], 1
    %s3193 = scalar_lea.sflag [#allocation7], 1
    %3194 = vsyncpa %s3193, 1
  %3195 = vsyncmov [#allocation3]
  %s3196 = vpop.sfrf %3195
  %p3197 = scmp.eq.s32.totalorder %s3196, 0
  %p3198 = pneg %p3197
  %3200 = shalt.err (%p3198)
  %s3201 = scalar_lea.sflag [#allocation3], 1
  %3202 = vsyncmov %s3201
  %s3203 = vpop.sfrf %3202
  %p3204 = scmp.eq.s32.totalorder %s3203, 0
  %p3205 = pneg %p3204
  %3207 = shalt.err (%p3205)
  %s3208 = scalar_lea.sflag [#allocation3], 2
  %3209 = vsyncmov %s3208
  %s3210 = vpop.sfrf %3209
  %p3211 = scmp.eq.s32.totalorder %s3210, 0
  %p3212 = pneg %p3211
  %3214 = shalt.err (%p3212)
  %s3215 = scalar_lea.sflag [#allocation3], 3
  %3216 = vsyncmov %s3215
  %s3217 = vpop.sfrf %3216
  %p3218 = scmp.eq.s32.totalorder %s3217, 0
  %p3219 = pneg %p3218
  %3221 = shalt.err (%p3219)
  %s3222 = scalar_lea.sflag [#allocation3], 4
  %3223 = vsyncmov %s3222
  %s3224 = vpop.sfrf %3223
  %p3225 = scmp.eq.s32.totalorder %s3224, 0
  %p3226 = pneg %p3225
  %3228 = shalt.err (%p3226)
  %s3229 = scalar_lea.sflag [#allocation3], 5
  %3230 = vsyncmov %s3229
  %s3231 = vpop.sfrf %3230
  %p3232 = scmp.eq.s32.totalorder %s3231, 0
  %p3233 = pneg %p3232
  %3235 = shalt.err (%p3233)
  %s3236 = scalar_lea.sflag [#allocation3], 6
  %3237 = vsyncmov %s3236
  %s3238 = vpop.sfrf %3237
  %p3239 = scmp.eq.s32.totalorder %s3238, 0
  %p3240 = pneg %p3239
  %3242 = shalt.err (%p3240)
  %s3243 = scalar_lea.sflag [#allocation3], 7
  %3244 = vsyncmov %s3243
  %s3245 = vpop.sfrf %3244
  %p3246 = scmp.eq.s32.totalorder %s3245, 0
  %p3247 = pneg %p3246
  %3249 = shalt.err (%p3247)

</llo_original>
